<compile_context>
chip_gen: v6e
topology: v6e:2x2x1
jax: 0.10.0
libtpu: 0.0.40
codegen_flags: <defaults>
</compile_context>

<pallas_src>
import functools

import jax
import jax.numpy as jnp
import numpy as np
from jax.experimental import pallas as pl
from jax.experimental.pallas import tpu as pltpu

LANE = 128     # padded gate-slab width (requires 3*H <= 128)
SUBLANE = 8    # padded batch (sublane) count


def _gru_stack_kernel(x_ref, *refs, num_layers, seq, batch_p, hp, hidden):
    """All layers and all timesteps of the GRU stack, wavefronted over (l, t).

    refs = [wih_0, bias_0, whh_0, bhhn_0, ..., wih_{L-1}, ...,   (inputs)
            hout_ref,                                            (output)
            gx0_ref]                                             (VMEM scratch)

    Per-layer packed lane layout: [0:H)=r, [H:2H)=z, [2H:3H)=n, [3H:hp)=zero.
    The hidden state lives in lanes [0:H); padded lanes are kept exactly zero.
    """
    n_w = 4 * num_layers
    hout_ref = refs[n_w]          # (L, Bp, hp)
    gx0_ref = refs[n_w + 1]       # (T*Bp, hp) hoisted layer-0 input projection

    # Static lane mask keeping only the real hidden lanes of h.
    lane = jax.lax.broadcasted_iota(jnp.int32, (batch_p, hp), 1)
    mask = lane < hidden

    # Gate-alignment shifts (cyclic lane rotations on the XLU).
    r_to_n = 2 * hidden                 # move r into the n-gate lanes
    n_to_h = (hp - 2 * hidden) % hp     # move n into the hidden-state lanes
    z_to_h = (hp - hidden) % hp         # move z into the hidden-state lanes

    # Hoisted, time-independent layer-0 input projection: one big MXU matmul.
    gx0_ref[...] = (
        jnp.dot(x_ref[...], refs[0][...], preferred_element_type=jnp.float32)
        + refs[1][...])

    # Hoist loop invariants out of the unrolled wavefront loop.
    whh = [refs[4 * l + 2][...] for l in range(num_layers)]
    bhhn = [jnp.broadcast_to(refs[4 * l + 3][...], (batch_p, hp))
            for l in range(num_layers)]
    bias = [None] + [jnp.broadcast_to(refs[4 * l + 1][...], (batch_p, hp))
                     for l in range(1, num_layers)]

    def cell(gx, h_prev, whh_l, bhhn_l):
        gh = jnp.dot(h_prev, whh_l, preferred_element_type=jnp.float32)
        pre = gx + gh
        # sigmoid(x) == 0.5 * (1 + tanh(x / 2)): one EUP op for r and z.
        rz = 0.5 * (jnp.tanh(0.5 * pre) + 1.0)
        r_at_n = pltpu.roll(rz, r_to_n, 1)                # r aligned with n lanes
        n_full = jnp.tanh(gx + r_at_n * (gh + bhhn_l))    # valid in n lanes
        n_h = pltpu.roll(n_full, n_to_h, 1)               # n -> state lanes
        z_h = pltpu.roll(rz, z_to_h, 1)                   # z -> state lanes
        h_new = n_h + z_h * (h_prev - n_h)                # == (1-z)*n + z*h
        return jnp.where(mask, h_new, 0.0)                # keep padding exactly 0

    h = [jnp.zeros((batch_p, hp), jnp.float32) for _ in range(num_layers)]
    y = [None] * num_layers       # layer outputs from the previous wavefront

    for w in range(seq + num_layers - 1):        # static wavefront loop
        # Descending layer order: layer l reads y[l-1] produced at wavefront
        # step w-1, so the active layers' matmuls this step are independent
        # and pipeline back-to-back through the MXU.
        for l in reversed(range(num_layers)):
            t = w - l
            if 0 <= t < seq:
                if l == 0:
                    lo = t * batch_p             # static, sublane-aligned
                    gx = gx0_ref[lo:lo + batch_p, :]
                else:
                    # Per-step input projection (off the recurrent critical
                    # path); W_ih is read from VMEM here to bound vreg pressure.
                    gx = jnp.dot(y[l - 1], refs[4 * l][...],
                                 preferred_element_type=jnp.float32) + bias[l]
                h[l] = cell(gx, h[l], whh[l], bhhn[l])
                y[l] = h[l]

    for l in range(num_layers):
        hout_ref[l] = h[l]


def _pack_layer(w_ih, w_hh, b_ih, b_hh, hidden):
    """PyTorch GRU weights -> transposed, single-slab gate-packed arrays."""
    H = hidden
    w_ih = np.asarray(w_ih, np.float32)
    w_hh = np.asarray(w_hh, np.float32)
    b_ih = np.asarray(b_ih, np.float32)
    b_hh = np.asarray(b_hh, np.float32)
    d_in = w_ih.shape[1]
    wih_p = np.zeros((LANE, LANE), np.float32)
    whh_p = np.zeros((LANE, LANE), np.float32)
    bias_p = np.zeros((1, LANE), np.float32)
    bhhn_p = np.zeros((1, LANE), np.float32)
    for g in range(3):                    # PyTorch gate order: r, z, n
        c = g * H
        wih_p[:d_in, c:c + H] = w_ih[g * H:(g + 1) * H, :].T
        whh_p[:H, c:c + H] = w_hh[g * H:(g + 1) * H, :].T
        bias_p[0, c:c + H] = b_ih[g * H:(g + 1) * H]
        if g < 2:                         # fold r/z b_hh into the hoisted bias
            bias_p[0, c:c + H] += b_hh[g * H:(g + 1) * H]
    bhhn_p[0, 2 * H:3 * H] = b_hh[2 * H:3 * H]   # n-gate b_hh stays inside r*(.)
    return (jnp.asarray(wih_p), jnp.asarray(bias_p),
            jnp.asarray(whh_p), jnp.asarray(bhhn_p))


@functools.partial(jax.jit, static_argnums=(2, 3))
def _gru_forward(x, packed, hidden, num_layers):
    B, T, in_dim = x.shape
    BP = SUBLANE
    # Time-major, batch->8 sublanes, features->128 lanes; fused under this jit
    # so it does not add separate dispatches.
    x_tm = jnp.transpose(x, (1, 0, 2)).astype(jnp.float32)          # (T, B, I)
    x_flat = jnp.pad(
        x_tm, ((0, 0), (0, BP - B), (0, LANE - in_dim))).reshape(T * BP, LANE)

    kernel = functools.partial(_gru_stack_kernel, num_layers=num_layers, seq=T,
                               batch_p=BP, hp=LANE, hidden=hidden)
    vmem = pl.BlockSpec(memory_space=pltpu.MemorySpace.VMEM)
    hout = pl.pallas_call(
        kernel,
        out_shape=jax.ShapeDtypeStruct((num_layers, BP, LANE), jnp.float32),
        in_specs=[vmem] * (1 + 4 * num_layers),
        out_specs=vmem,
        scratch_shapes=[pltpu.VMEM((T * BP, LANE), jnp.float32)],   # hoisted gx0
    )(x_flat, *packed)
    return hout[:, :B, :hidden]


def rrnn_encoder_pallas(x, params, hidden):
    """x: (B, T, 2) batch_first (PyTorch layout). Returns (L, B, H)."""
    B, T, in_dim = x.shape
    L = len(params)
    assert B <= SUBLANE and in_dim <= LANE and 3 * hidden <= LANE
    packed = []
    for p in params:
        packed.extend(_pack_layer(*p, hidden=hidden))
    return _gru_forward(x, tuple(packed), hidden, L)


def rrnn_encoder_ref(x, params, hidden):
    """Pure-JAX reference matching torch.nn.GRU forward semantics."""
    B, T, _ = x.shape
    H = hidden
    inp = x.astype(jnp.float32)
    h_finals = []
    for (w_ih, w_hh, b_ih, b_hh) in params:
        h = jnp.zeros((B, H), jnp.float32)
        ys = []
        for t in range(T):
            xt = inp[:, t, :]
            gx = xt @ w_ih.T + b_ih
            gh = h @ w_hh.T + b_hh
            r = jax.nn.sigmoid(gx[:, :H] + gh[:, :H])
            z = jax.nn.sigmoid(gx[:, H:2 * H] + gh[:, H:2 * H])
            n = jnp.tanh(gx[:, 2 * H:] + r * gh[:, 2 * H:])
            h = (1.0 - z) * n + z * h
            ys.append(h)
        inp = jnp.stack(ys, axis=1)
        h_finals.append(h)
    return jnp.stack(h_finals, axis=0)


def init_gru_params(key, input_size, hidden, num_layers):
    """Deterministic init mimicking PyTorch: U(-1/sqrt(H), 1/sqrt(H))."""
    params = []
    bound = 1.0 / np.sqrt(hidden)
    for layer in range(num_layers):
        in_dim = input_size if layer == 0 else hidden
        key, k1, k2, k3, k4 = jax.random.split(key, 5)
        w_ih = jax.random.uniform(k1, (3 * hidden, in_dim), jnp.float32, -bound, bound)
        w_hh = jax.random.uniform(k2, (3 * hidden, hidden), jnp.float32, -bound, bound)
        b_ih = jax.random.uniform(k3, (3 * hidden,), jnp.float32, -bound, bound)
        b_hh = jax.random.uniform(k4, (3 * hidden,), jnp.float32, -bound, bound)
        params.append((w_ih, w_hh, b_ih, b_hh))
    return params


if __name__ == "__main__":
    hiddenNum = 32
    layerNum = 2
    batch = 2
    seq = 8
    input_size = 2  # fixed by the module (GRU input dim = 2)

    key = jax.random.PRNGKey(0)
    kx, kp = jax.random.split(key)
    x = jax.random.normal(kx, (batch, seq, input_size), jnp.float32)
    params = init_gru_params(kp, input_size, hiddenNum, layerNum)

    hidden_summary = rrnn_encoder_pallas(x, params, hiddenNum)
    hidden_summary = jax.block_until_ready(hidden_summary)
    assert hidden_summary.shape == (layerNum, batch, hiddenNum)

    ref = rrnn_encoder_ref(x, params, hiddenNum)
    np.testing.assert_allclose(np.asarray(hidden_summary), np.asarray(ref),
                               rtol=1e-5, atol=1e-5)

    print("KERNEL_OK")
</pallas_src>

<mosaic_0001>
module attributes {stable_mosaic.version = 11 : i64} {
  func.func @_gru_stack_kernel(%arg0: memref<64x128xf32, #tpu.memory_space<vmem>>, %arg1: memref<128x128xf32, #tpu.memory_space<vmem>>, %arg2: memref<1x128xf32, #tpu.memory_space<vmem>>, %arg3: memref<128x128xf32, #tpu.memory_space<vmem>>, %arg4: memref<1x128xf32, #tpu.memory_space<vmem>>, %arg5: memref<128x128xf32, #tpu.memory_space<vmem>>, %arg6: memref<1x128xf32, #tpu.memory_space<vmem>>, %arg7: memref<128x128xf32, #tpu.memory_space<vmem>>, %arg8: memref<1x128xf32, #tpu.memory_space<vmem>>, %arg9: memref<2x8x128xf32, #tpu.memory_space<vmem>>, %arg10: memref<64x128xf32, #tpu.memory_space<vmem>>) attributes {dimension_semantics = [], scalar_prefetch = 0 : i64, scratch_operands = 1 : i64, tpu.core_type = #tpu.core_type<tc>} {
    %0 = tpu.iota {dimensions = array<i32: 1>} : vector<8x128xi32>
    %c32_i32 = arith.constant 32 : i32
    %1 = vector.broadcast %c32_i32 : i32 to vector<8x128xi32>
    %2 = arith.cmpi slt, %0, %1 : vector<8x128xi32>
    %c0 = arith.constant 0 : index
    %c0_0 = arith.constant 0 : index
    %3 = vector.load %arg0[%c0, %c0_0] : memref<64x128xf32, #tpu.memory_space<vmem>>, vector<64x128xf32>
    %c0_1 = arith.constant 0 : index
    %c0_2 = arith.constant 0 : index
    %4 = vector.load %arg1[%c0_1, %c0_2] : memref<128x128xf32, #tpu.memory_space<vmem>>, vector<128x128xf32>
    %cst = arith.constant dense<0.000000e+00> : vector<64x128xf32>
    %5 = tpu.matmul %3, %4, %cst {dimension_numbers = #tpu.dot_dimension_numbers<[1], [0], [0], [1], [0, 0, 1, 1], [], []>} : vector<64x128xf32>, vector<128x128xf32>, vector<64x128xf32> -> vector<64x128xf32>
    %c0_3 = arith.constant 0 : index
    %c0_4 = arith.constant 0 : index
    %6 = vector.load %arg2[%c0_3, %c0_4] : memref<1x128xf32, #tpu.memory_space<vmem>>, vector<1x128xf32>
    %7 = vector.broadcast %6 : vector<1x128xf32> to vector<64x128xf32>
    %8 = arith.addf %5, %7 : vector<64x128xf32>
    %c0_5 = arith.constant 0 : index
    %c0_6 = arith.constant 0 : index
    %9 = vector.load %arg10[%c0_5, %c0_6] : memref<64x128xf32, #tpu.memory_space<vmem>>, vector<64x128xf32>
    tpu.vector_store %arg10[%c0_5, %c0_6], %8 {strides = array<i32>} : memref<64x128xf32, #tpu.memory_space<vmem>>, vector<64x128xf32>,
    %c0_7 = arith.constant 0 : index
    %c0_8 = arith.constant 0 : index
    %10 = vector.load %arg3[%c0_7, %c0_8] : memref<128x128xf32, #tpu.memory_space<vmem>>, vector<128x128xf32>
    %c0_9 = arith.constant 0 : index
    %c0_10 = arith.constant 0 : index
    %11 = vector.load %arg7[%c0_9, %c0_10] : memref<128x128xf32, #tpu.memory_space<vmem>>, vector<128x128xf32>
    %c0_11 = arith.constant 0 : index
    %c0_12 = arith.constant 0 : index
    %12 = vector.load %arg4[%c0_11, %c0_12] : memref<1x128xf32, #tpu.memory_space<vmem>>, vector<1x128xf32>
    %13 = vector.shape_cast %12 : vector<1x128xf32> to vector<1x128xf32>
    %14 = vector.broadcast %13 : vector<1x128xf32> to vector<8x128xf32>
    %c0_13 = arith.constant 0 : index
    %c0_14 = arith.constant 0 : index
    %15 = vector.load %arg8[%c0_13, %c0_14] : memref<1x128xf32, #tpu.memory_space<vmem>>, vector<1x128xf32>
    %16 = vector.shape_cast %15 : vector<1x128xf32> to vector<1x128xf32>
    %17 = vector.broadcast %16 : vector<1x128xf32> to vector<8x128xf32>
    %c0_15 = arith.constant 0 : index
    %c0_16 = arith.constant 0 : index
    %18 = vector.load %arg6[%c0_15, %c0_16] : memref<1x128xf32, #tpu.memory_space<vmem>>, vector<1x128xf32>
    %19 = vector.shape_cast %18 : vector<1x128xf32> to vector<1x128xf32>
    %20 = vector.broadcast %19 : vector<1x128xf32> to vector<8x128xf32>
    %cst_17 = arith.constant 0.000000e+00 : f32
    %21 = vector.broadcast %cst_17 : f32 to vector<8x128xf32>
    %cst_18 = arith.constant 0.000000e+00 : f32
    %22 = vector.broadcast %cst_18 : f32 to vector<8x128xf32>
    %c0_19 = arith.constant 0 : index
    %c0_20 = arith.constant 0 : index
    %23 = vector.load %arg10[%c0_19, %c0_20] : memref<64x128xf32, #tpu.memory_space<vmem>>, vector<8x128xf32>
    %cst_21 = arith.constant dense<0.000000e+00> : vector<8x128xf32>
    %24 = tpu.matmul %21, %10, %cst_21 {dimension_numbers = #tpu.dot_dimension_numbers<[1], [0], [0], [1], [0, 0, 1, 1], [], []>} : vector<8x128xf32>, vector<128x128xf32>, vector<8x128xf32> -> vector<8x128xf32>
    %25 = arith.addf %23, %24 : vector<8x128xf32>
    %cst_22 = arith.constant 5.000000e-01 : f32
    %26 = vector.broadcast %cst_22 : f32 to vector<8x128xf32>
    %27 = arith.mulf %26, %25 : vector<8x128xf32>
    %28 = math.tanh %27 : vector<8x128xf32>
    %cst_23 = arith.constant 1.000000e+00 : f32
    %29 = vector.broadcast %cst_23 : f32 to vector<8x128xf32>
    %30 = arith.addf %28, %29 : vector<8x128xf32>
    %cst_24 = arith.constant 5.000000e-01 : f32
    %31 = vector.broadcast %cst_24 : f32 to vector<8x128xf32>
    %32 = arith.mulf %31, %30 : vector<8x128xf32>
    %c64_i32 = arith.constant 64 : i32
    %33 = tpu.dynamic_rotate %32 by %c64_i32 dim 1 : vector<8x128xf32>, i32 -> vector<8x128xf32>
    %34 = arith.addf %24, %14 : vector<8x128xf32>
    %35 = arith.mulf %33, %34 : vector<8x128xf32>
    %36 = arith.addf %23, %35 : vector<8x128xf32>
    %37 = math.tanh %36 : vector<8x128xf32>
    %c64_i32_25 = arith.constant 64 : i32
    %38 = tpu.dynamic_rotate %37 by %c64_i32_25 dim 1 : vector<8x128xf32>, i32 -> vector<8x128xf32>
    %c96_i32 = arith.constant 96 : i32
    %39 = tpu.dynamic_rotate %32 by %c96_i32 dim 1 : vector<8x128xf32>, i32 -> vector<8x128xf32>
    %40 = arith.subf %21, %38 : vector<8x128xf32>
    %41 = arith.mulf %39, %40 : vector<8x128xf32>
    %42 = arith.addf %38, %41 : vector<8x128xf32>
    %cst_26 = arith.constant 0.000000e+00 : f32
    %43 = vector.broadcast %cst_26 : f32 to vector<8x128xf32>
    %44 = arith.select %2, %42, %43 : vector<8x128xi1>, vector<8x128xf32>
    %c0_27 = arith.constant 0 : index
    %c0_28 = arith.constant 0 : index
    %45 = vector.load %arg5[%c0_27, %c0_28] : memref<128x128xf32, #tpu.memory_space<vmem>>, vector<128x128xf32>
    %cst_29 = arith.constant dense<0.000000e+00> : vector<8x128xf32>
    %46 = tpu.matmul %44, %45, %cst_29 {dimension_numbers = #tpu.dot_dimension_numbers<[1], [0], [0], [1], [0, 0, 1, 1], [], []>} : vector<8x128xf32>, vector<128x128xf32>, vector<8x128xf32> -> vector<8x128xf32>
    %47 = arith.addf %46, %20 : vector<8x128xf32>
    %cst_30 = arith.constant dense<0.000000e+00> : vector<8x128xf32>
    %48 = tpu.matmul %22, %11, %cst_30 {dimension_numbers = #tpu.dot_dimension_numbers<[1], [0], [0], [1], [0, 0, 1, 1], [], []>} : vector<8x128xf32>, vector<128x128xf32>, vector<8x128xf32> -> vector<8x128xf32>
    %49 = arith.addf %47, %48 : vector<8x128xf32>
    %cst_31 = arith.constant 5.000000e-01 : f32
    %50 = vector.broadcast %cst_31 : f32 to vector<8x128xf32>
    %51 = arith.mulf %50, %49 : vector<8x128xf32>
    %52 = math.tanh %51 : vector<8x128xf32>
    %cst_32 = arith.constant 1.000000e+00 : f32
    %53 = vector.broadcast %cst_32 : f32 to vector<8x128xf32>
    %54 = arith.addf %52, %53 : vector<8x128xf32>
    %cst_33 = arith.constant 5.000000e-01 : f32
    %55 = vector.broadcast %cst_33 : f32 to vector<8x128xf32>
    %56 = arith.mulf %55, %54 : vector<8x128xf32>
    %c64_i32_34 = arith.constant 64 : i32
    %57 = tpu.dynamic_rotate %56 by %c64_i32_34 dim 1 : vector<8x128xf32>, i32 -> vector<8x128xf32>
    %58 = arith.addf %48, %17 : vector<8x128xf32>
    %59 = arith.mulf %57, %58 : vector<8x128xf32>
    %60 = arith.addf %47, %59 : vector<8x128xf32>
    %61 = math.tanh %60 : vector<8x128xf32>
    %c64_i32_35 = arith.constant 64 : i32
    %62 = tpu.dynamic_rotate %61 by %c64_i32_35 dim 1 : vector<8x128xf32>, i32 -> vector<8x128xf32>
    %c96_i32_36 = arith.constant 96 : i32
    %63 = tpu.dynamic_rotate %56 by %c96_i32_36 dim 1 : vector<8x128xf32>, i32 -> vector<8x128xf32>
    %64 = arith.subf %22, %62 : vector<8x128xf32>
    %65 = arith.mulf %63, %64 : vector<8x128xf32>
    %66 = arith.addf %62, %65 : vector<8x128xf32>
    %cst_37 = arith.constant 0.000000e+00 : f32
    %67 = vector.broadcast %cst_37 : f32 to vector<8x128xf32>
    %68 = arith.select %2, %66, %67 : vector<8x128xi1>, vector<8x128xf32>
    %c8 = arith.constant 8 : index
    %c0_38 = arith.constant 0 : index
    %69 = vector.load %arg10[%c8, %c0_38] : memref<64x128xf32, #tpu.memory_space<vmem>>, vector<8x128xf32>
    %cst_39 = arith.constant dense<0.000000e+00> : vector<8x128xf32>
    %70 = tpu.matmul %44, %10, %cst_39 {dimension_numbers = #tpu.dot_dimension_numbers<[1], [0], [0], [1], [0, 0, 1, 1], [], []>} : vector<8x128xf32>, vector<128x128xf32>, vector<8x128xf32> -> vector<8x128xf32>
    %71 = arith.addf %69, %70 : vector<8x128xf32>
    %cst_40 = arith.constant 5.000000e-01 : f32
    %72 = vector.broadcast %cst_40 : f32 to vector<8x128xf32>
    %73 = arith.mulf %72, %71 : vector<8x128xf32>
    %74 = math.tanh %73 : vector<8x128xf32>
    %cst_41 = arith.constant 1.000000e+00 : f32
    %75 = vector.broadcast %cst_41 : f32 to vector<8x128xf32>
    %76 = arith.addf %74, %75 : vector<8x128xf32>
    %cst_42 = arith.constant 5.000000e-01 : f32
    %77 = vector.broadcast %cst_42 : f32 to vector<8x128xf32>
    %78 = arith.mulf %77, %76 : vector<8x128xf32>
    %c64_i32_43 = arith.constant 64 : i32
    %79 = tpu.dynamic_rotate %78 by %c64_i32_43 dim 1 : vector<8x128xf32>, i32 -> vector<8x128xf32>
    %80 = arith.addf %70, %14 : vector<8x128xf32>
    %81 = arith.mulf %79, %80 : vector<8x128xf32>
    %82 = arith.addf %69, %81 : vector<8x128xf32>
    %83 = math.tanh %82 : vector<8x128xf32>
    %c64_i32_44 = arith.constant 64 : i32
    %84 = tpu.dynamic_rotate %83 by %c64_i32_44 dim 1 : vector<8x128xf32>, i32 -> vector<8x128xf32>
    %c96_i32_45 = arith.constant 96 : i32
    %85 = tpu.dynamic_rotate %78 by %c96_i32_45 dim 1 : vector<8x128xf32>, i32 -> vector<8x128xf32>
    %86 = arith.subf %44, %84 : vector<8x128xf32>
    %87 = arith.mulf %85, %86 : vector<8x128xf32>
    %88 = arith.addf %84, %87 : vector<8x128xf32>
    %cst_46 = arith.constant 0.000000e+00 : f32
    %89 = vector.broadcast %cst_46 : f32 to vector<8x128xf32>
    %90 = arith.select %2, %88, %89 : vector<8x128xi1>, vector<8x128xf32>
    %c0_47 = arith.constant 0 : index
    %c0_48 = arith.constant 0 : index
    %91 = vector.load %arg5[%c0_47, %c0_48] : memref<128x128xf32, #tpu.memory_space<vmem>>, vector<128x128xf32>
    %cst_49 = arith.constant dense<0.000000e+00> : vector<8x128xf32>
    %92 = tpu.matmul %90, %91, %cst_49 {dimension_numbers = #tpu.dot_dimension_numbers<[1], [0], [0], [1], [0, 0, 1, 1], [], []>} : vector<8x128xf32>, vector<128x128xf32>, vector<8x128xf32> -> vector<8x128xf32>
    %93 = arith.addf %92, %20 : vector<8x128xf32>
    %cst_50 = arith.constant dense<0.000000e+00> : vector<8x128xf32>
    %94 = tpu.matmul %68, %11, %cst_50 {dimension_numbers = #tpu.dot_dimension_numbers<[1], [0], [0], [1], [0, 0, 1, 1], [], []>} : vector<8x128xf32>, vector<128x128xf32>, vector<8x128xf32> -> vector<8x128xf32>
    %95 = arith.addf %93, %94 : vector<8x128xf32>
    %cst_51 = arith.constant 5.000000e-01 : f32
    %96 = vector.broadcast %cst_51 : f32 to vector<8x128xf32>
    %97 = arith.mulf %96, %95 : vector<8x128xf32>
    %98 = math.tanh %97 : vector<8x128xf32>
    %cst_52 = arith.constant 1.000000e+00 : f32
    %99 = vector.broadcast %cst_52 : f32 to vector<8x128xf32>
    %100 = arith.addf %98, %99 : vector<8x128xf32>
    %cst_53 = arith.constant 5.000000e-01 : f32
    %101 = vector.broadcast %cst_53 : f32 to vector<8x128xf32>
    %102 = arith.mulf %101, %100 : vector<8x128xf32>
    %c64_i32_54 = arith.constant 64 : i32
    %103 = tpu.dynamic_rotate %102 by %c64_i32_54 dim 1 : vector<8x128xf32>, i32 -> vector<8x128xf32>
    %104 = arith.addf %94, %17 : vector<8x128xf32>
    %105 = arith.mulf %103, %104 : vector<8x128xf32>
    %106 = arith.addf %93, %105 : vector<8x128xf32>
    %107 = math.tanh %106 : vector<8x128xf32>
    %c64_i32_55 = arith.constant 64 : i32
    %108 = tpu.dynamic_rotate %107 by %c64_i32_55 dim 1 : vector<8x128xf32>, i32 -> vector<8x128xf32>
    %c96_i32_56 = arith.constant 96 : i32
    %109 = tpu.dynamic_rotate %102 by %c96_i32_56 dim 1 : vector<8x128xf32>, i32 -> vector<8x128xf32>
    %110 = arith.subf %68, %108 : vector<8x128xf32>
    %111 = arith.mulf %109, %110 : vector<8x128xf32>
    %112 = arith.addf %108, %111 : vector<8x128xf32>
    %cst_57 = arith.constant 0.000000e+00 : f32
    %113 = vector.broadcast %cst_57 : f32 to vector<8x128xf32>
    %114 = arith.select %2, %112, %113 : vector<8x128xi1>, vector<8x128xf32>
    %c16 = arith.constant 16 : index
    %c0_58 = arith.constant 0 : index
    %115 = vector.load %arg10[%c16, %c0_58] : memref<64x128xf32, #tpu.memory_space<vmem>>, vector<8x128xf32>
    %cst_59 = arith.constant dense<0.000000e+00> : vector<8x128xf32>
    %116 = tpu.matmul %90, %10, %cst_59 {dimension_numbers = #tpu.dot_dimension_numbers<[1], [0], [0], [1], [0, 0, 1, 1], [], []>} : vector<8x128xf32>, vector<128x128xf32>, vector<8x128xf32> -> vector<8x128xf32>
    %117 = arith.addf %115, %116 : vector<8x128xf32>
    %cst_60 = arith.constant 5.000000e-01 : f32
    %118 = vector.broadcast %cst_60 : f32 to vector<8x128xf32>
    %119 = arith.mulf %118, %117 : vector<8x128xf32>
    %120 = math.tanh %119 : vector<8x128xf32>
    %cst_61 = arith.constant 1.000000e+00 : f32
    %121 = vector.broadcast %cst_61 : f32 to vector<8x128xf32>
    %122 = arith.addf %120, %121 : vector<8x128xf32>
    %cst_62 = arith.constant 5.000000e-01 : f32
    %123 = vector.broadcast %cst_62 : f32 to vector<8x128xf32>
    %124 = arith.mulf %123, %122 : vector<8x128xf32>
    %c64_i32_63 = arith.constant 64 : i32
    %125 = tpu.dynamic_rotate %124 by %c64_i32_63 dim 1 : vector<8x128xf32>, i32 -> vector<8x128xf32>
    %126 = arith.addf %116, %14 : vector<8x128xf32>
    %127 = arith.mulf %125, %126 : vector<8x128xf32>
    %128 = arith.addf %115, %127 : vector<8x128xf32>
    %129 = math.tanh %128 : vector<8x128xf32>
    %c64_i32_64 = arith.constant 64 : i32
    %130 = tpu.dynamic_rotate %129 by %c64_i32_64 dim 1 : vector<8x128xf32>, i32 -> vector<8x128xf32>
    %c96_i32_65 = arith.constant 96 : i32
    %131 = tpu.dynamic_rotate %124 by %c96_i32_65 dim 1 : vector<8x128xf32>, i32 -> vector<8x128xf32>
    %132 = arith.subf %90, %130 : vector<8x128xf32>
    %133 = arith.mulf %131, %132 : vector<8x128xf32>
    %134 = arith.addf %130, %133 : vector<8x128xf32>
    %cst_66 = arith.constant 0.000000e+00 : f32
    %135 = vector.broadcast %cst_66 : f32 to vector<8x128xf32>
    %136 = arith.select %2, %134, %135 : vector<8x128xi1>, vector<8x128xf32>
    %c0_67 = arith.constant 0 : index
    %c0_68 = arith.constant 0 : index
    %137 = vector.load %arg5[%c0_67, %c0_68] : memref<128x128xf32, #tpu.memory_space<vmem>>, vector<128x128xf32>
    %cst_69 = arith.constant dense<0.000000e+00> : vector<8x128xf32>
    %138 = tpu.matmul %136, %137, %cst_69 {dimension_numbers = #tpu.dot_dimension_numbers<[1], [0], [0], [1], [0, 0, 1, 1], [], []>} : vector<8x128xf32>, vector<128x128xf32>, vector<8x128xf32> -> vector<8x128xf32>
    %139 = arith.addf %138, %20 : vector<8x128xf32>
    %cst_70 = arith.constant dense<0.000000e+00> : vector<8x128xf32>
    %140 = tpu.matmul %114, %11, %cst_70 {dimension_numbers = #tpu.dot_dimension_numbers<[1], [0], [0], [1], [0, 0, 1, 1], [], []>} : vector<8x128xf32>, vector<128x128xf32>, vector<8x128xf32> -> vector<8x128xf32>
    %141 = arith.addf %139, %140 : vector<8x128xf32>
    %cst_71 = arith.constant 5.000000e-01 : f32
    %142 = vector.broadcast %cst_71 : f32 to vector<8x128xf32>
    %143 = arith.mulf %142, %141 : vector<8x128xf32>
    %144 = math.tanh %143 : vector<8x128xf32>
    %cst_72 = arith.constant 1.000000e+00 : f32
    %145 = vector.broadcast %cst_72 : f32 to vector<8x128xf32>
    %146 = arith.addf %144, %145 : vector<8x128xf32>
    %cst_73 = arith.constant 5.000000e-01 : f32
    %147 = vector.broadcast %cst_73 : f32 to vector<8x128xf32>
    %148 = arith.mulf %147, %146 : vector<8x128xf32>
    %c64_i32_74 = arith.constant 64 : i32
    %149 = tpu.dynamic_rotate %148 by %c64_i32_74 dim 1 : vector<8x128xf32>, i32 -> vector<8x128xf32>
    %150 = arith.addf %140, %17 : vector<8x128xf32>
    %151 = arith.mulf %149, %150 : vector<8x128xf32>
    %152 = arith.addf %139, %151 : vector<8x128xf32>
    %153 = math.tanh %152 : vector<8x128xf32>
    %c64_i32_75 = arith.constant 64 : i32
    %154 = tpu.dynamic_rotate %153 by %c64_i32_75 dim 1 : vector<8x128xf32>, i32 -> vector<8x128xf32>
    %c96_i32_76 = arith.constant 96 : i32
    %155 = tpu.dynamic_rotate %148 by %c96_i32_76 dim 1 : vector<8x128xf32>, i32 -> vector<8x128xf32>
    %156 = arith.subf %114, %154 : vector<8x128xf32>
    %157 = arith.mulf %155, %156 : vector<8x128xf32>
    %158 = arith.addf %154, %157 : vector<8x128xf32>
    %cst_77 = arith.constant 0.000000e+00 : f32
    %159 = vector.broadcast %cst_77 : f32 to vector<8x128xf32>
    %160 = arith.select %2, %158, %159 : vector<8x128xi1>, vector<8x128xf32>
    %c24 = arith.constant 24 : index
    %c0_78 = arith.constant 0 : index
    %161 = vector.load %arg10[%c24, %c0_78] : memref<64x128xf32, #tpu.memory_space<vmem>>, vector<8x128xf32>
    %cst_79 = arith.constant dense<0.000000e+00> : vector<8x128xf32>
    %162 = tpu.matmul %136, %10, %cst_79 {dimension_numbers = #tpu.dot_dimension_numbers<[1], [0], [0], [1], [0, 0, 1, 1], [], []>} : vector<8x128xf32>, vector<128x128xf32>, vector<8x128xf32> -> vector<8x128xf32>
    %163 = arith.addf %161, %162 : vector<8x128xf32>
    %cst_80 = arith.constant 5.000000e-01 : f32
    %164 = vector.broadcast %cst_80 : f32 to vector<8x128xf32>
    %165 = arith.mulf %164, %163 : vector<8x128xf32>
    %166 = math.tanh %165 : vector<8x128xf32>
    %cst_81 = arith.constant 1.000000e+00 : f32
    %167 = vector.broadcast %cst_81 : f32 to vector<8x128xf32>
    %168 = arith.addf %166, %167 : vector<8x128xf32>
    %cst_82 = arith.constant 5.000000e-01 : f32
    %169 = vector.broadcast %cst_82 : f32 to vector<8x128xf32>
    %170 = arith.mulf %169, %168 : vector<8x128xf32>
    %c64_i32_83 = arith.constant 64 : i32
    %171 = tpu.dynamic_rotate %170 by %c64_i32_83 dim 1 : vector<8x128xf32>, i32 -> vector<8x128xf32>
    %172 = arith.addf %162, %14 : vector<8x128xf32>
    %173 = arith.mulf %171, %172 : vector<8x128xf32>
    %174 = arith.addf %161, %173 : vector<8x128xf32>
    %175 = math.tanh %174 : vector<8x128xf32>
    %c64_i32_84 = arith.constant 64 : i32
    %176 = tpu.dynamic_rotate %175 by %c64_i32_84 dim 1 : vector<8x128xf32>, i32 -> vector<8x128xf32>
    %c96_i32_85 = arith.constant 96 : i32
    %177 = tpu.dynamic_rotate %170 by %c96_i32_85 dim 1 : vector<8x128xf32>, i32 -> vector<8x128xf32>
    %178 = arith.subf %136, %176 : vector<8x128xf32>
    %179 = arith.mulf %177, %178 : vector<8x128xf32>
    %180 = arith.addf %176, %179 : vector<8x128xf32>
    %cst_86 = arith.constant 0.000000e+00 : f32
    %181 = vector.broadcast %cst_86 : f32 to vector<8x128xf32>
    %182 = arith.select %2, %180, %181 : vector<8x128xi1>, vector<8x128xf32>
    %c0_87 = arith.constant 0 : index
    %c0_88 = arith.constant 0 : index
    %183 = vector.load %arg5[%c0_87, %c0_88] : memref<128x128xf32, #tpu.memory_space<vmem>>, vector<128x128xf32>
    %cst_89 = arith.constant dense<0.000000e+00> : vector<8x128xf32>
    %184 = tpu.matmul %182, %183, %cst_89 {dimension_numbers = #tpu.dot_dimension_numbers<[1], [0], [0], [1], [0, 0, 1, 1], [], []>} : vector<8x128xf32>, vector<128x128xf32>, vector<8x128xf32> -> vector<8x128xf32>
    %185 = arith.addf %184, %20 : vector<8x128xf32>
    %cst_90 = arith.constant dense<0.000000e+00> : vector<8x128xf32>
    %186 = tpu.matmul %160, %11, %cst_90 {dimension_numbers = #tpu.dot_dimension_numbers<[1], [0], [0], [1], [0, 0, 1, 1], [], []>} : vector<8x128xf32>, vector<128x128xf32>, vector<8x128xf32> -> vector<8x128xf32>
    %187 = arith.addf %185, %186 : vector<8x128xf32>
    %cst_91 = arith.constant 5.000000e-01 : f32
    %188 = vector.broadcast %cst_91 : f32 to vector<8x128xf32>
    %189 = arith.mulf %188, %187 : vector<8x128xf32>
    %190 = math.tanh %189 : vector<8x128xf32>
    %cst_92 = arith.constant 1.000000e+00 : f32
    %191 = vector.broadcast %cst_92 : f32 to vector<8x128xf32>
    %192 = arith.addf %190, %191 : vector<8x128xf32>
    %cst_93 = arith.constant 5.000000e-01 : f32
    %193 = vector.broadcast %cst_93 : f32 to vector<8x128xf32>
    %194 = arith.mulf %193, %192 : vector<8x128xf32>
    %c64_i32_94 = arith.constant 64 : i32
    %195 = tpu.dynamic_rotate %194 by %c64_i32_94 dim 1 : vector<8x128xf32>, i32 -> vector<8x128xf32>
    %196 = arith.addf %186, %17 : vector<8x128xf32>
    %197 = arith.mulf %195, %196 : vector<8x128xf32>
    %198 = arith.addf %185, %197 : vector<8x128xf32>
    %199 = math.tanh %198 : vector<8x128xf32>
    %c64_i32_95 = arith.constant 64 : i32
    %200 = tpu.dynamic_rotate %199 by %c64_i32_95 dim 1 : vector<8x128xf32>, i32 -> vector<8x128xf32>
    %c96_i32_96 = arith.constant 96 : i32
    %201 = tpu.dynamic_rotate %194 by %c96_i32_96 dim 1 : vector<8x128xf32>, i32 -> vector<8x128xf32>
    %202 = arith.subf %160, %200 : vector<8x128xf32>
    %203 = arith.mulf %201, %202 : vector<8x128xf32>
    %204 = arith.addf %200, %203 : vector<8x128xf32>
    %cst_97 = arith.constant 0.000000e+00 : f32
    %205 = vector.broadcast %cst_97 : f32 to vector<8x128xf32>
    %206 = arith.select %2, %204, %205 : vector<8x128xi1>, vector<8x128xf32>
    %c32 = arith.constant 32 : index
    %c0_98 = arith.constant 0 : index
    %207 = vector.load %arg10[%c32, %c0_98] : memref<64x128xf32, #tpu.memory_space<vmem>>, vector<8x128xf32>
    %cst_99 = arith.constant dense<0.000000e+00> : vector<8x128xf32>
    %208 = tpu.matmul %182, %10, %cst_99 {dimension_numbers = #tpu.dot_dimension_numbers<[1], [0], [0], [1], [0, 0, 1, 1], [], []>} : vector<8x128xf32>, vector<128x128xf32>, vector<8x128xf32> -> vector<8x128xf32>
    %209 = arith.addf %207, %208 : vector<8x128xf32>
    %cst_100 = arith.constant 5.000000e-01 : f32
    %210 = vector.broadcast %cst_100 : f32 to vector<8x128xf32>
    %211 = arith.mulf %210, %209 : vector<8x128xf32>
    %212 = math.tanh %211 : vector<8x128xf32>
    %cst_101 = arith.constant 1.000000e+00 : f32
    %213 = vector.broadcast %cst_101 : f32 to vector<8x128xf32>
    %214 = arith.addf %212, %213 : vector<8x128xf32>
    %cst_102 = arith.constant 5.000000e-01 : f32
    %215 = vector.broadcast %cst_102 : f32 to vector<8x128xf32>
    %216 = arith.mulf %215, %214 : vector<8x128xf32>
    %c64_i32_103 = arith.constant 64 : i32
    %217 = tpu.dynamic_rotate %216 by %c64_i32_103 dim 1 : vector<8x128xf32>, i32 -> vector<8x128xf32>
    %218 = arith.addf %208, %14 : vector<8x128xf32>
    %219 = arith.mulf %217, %218 : vector<8x128xf32>
    %220 = arith.addf %207, %219 : vector<8x128xf32>
    %221 = math.tanh %220 : vector<8x128xf32>
    %c64_i32_104 = arith.constant 64 : i32
    %222 = tpu.dynamic_rotate %221 by %c64_i32_104 dim 1 : vector<8x128xf32>, i32 -> vector<8x128xf32>
    %c96_i32_105 = arith.constant 96 : i32
    %223 = tpu.dynamic_rotate %216 by %c96_i32_105 dim 1 : vector<8x128xf32>, i32 -> vector<8x128xf32>
    %224 = arith.subf %182, %222 : vector<8x128xf32>
    %225 = arith.mulf %223, %224 : vector<8x128xf32>
    %226 = arith.addf %222, %225 : vector<8x128xf32>
    %cst_106 = arith.constant 0.000000e+00 : f32
    %227 = vector.broadcast %cst_106 : f32 to vector<8x128xf32>
    %228 = arith.select %2, %226, %227 : vector<8x128xi1>, vector<8x128xf32>
    %c0_107 = arith.constant 0 : index
    %c0_108 = arith.constant 0 : index
    %229 = vector.load %arg5[%c0_107, %c0_108] : memref<128x128xf32, #tpu.memory_space<vmem>>, vector<128x128xf32>
    %cst_109 = arith.constant dense<0.000000e+00> : vector<8x128xf32>
    %230 = tpu.matmul %228, %229, %cst_109 {dimension_numbers = #tpu.dot_dimension_numbers<[1], [0], [0], [1], [0, 0, 1, 1], [], []>} : vector<8x128xf32>, vector<128x128xf32>, vector<8x128xf32> -> vector<8x128xf32>
    %231 = arith.addf %230, %20 : vector<8x128xf32>
    %cst_110 = arith.constant dense<0.000000e+00> : vector<8x128xf32>
    %232 = tpu.matmul %206, %11, %cst_110 {dimension_numbers = #tpu.dot_dimension_numbers<[1], [0], [0], [1], [0, 0, 1, 1], [], []>} : vector<8x128xf32>, vector<128x128xf32>, vector<8x128xf32> -> vector<8x128xf32>
    %233 = arith.addf %231, %232 : vector<8x128xf32>
    %cst_111 = arith.constant 5.000000e-01 : f32
    %234 = vector.broadcast %cst_111 : f32 to vector<8x128xf32>
    %235 = arith.mulf %234, %233 : vector<8x128xf32>
    %236 = math.tanh %235 : vector<8x128xf32>
    %cst_112 = arith.constant 1.000000e+00 : f32
    %237 = vector.broadcast %cst_112 : f32 to vector<8x128xf32>
    %238 = arith.addf %236, %237 : vector<8x128xf32>
    %cst_113 = arith.constant 5.000000e-01 : f32
    %239 = vector.broadcast %cst_113 : f32 to vector<8x128xf32>
    %240 = arith.mulf %239, %238 : vector<8x128xf32>
    %c64_i32_114 = arith.constant 64 : i32
    %241 = tpu.dynamic_rotate %240 by %c64_i32_114 dim 1 : vector<8x128xf32>, i32 -> vector<8x128xf32>
    %242 = arith.addf %232, %17 : vector<8x128xf32>
    %243 = arith.mulf %241, %242 : vector<8x128xf32>
    %244 = arith.addf %231, %243 : vector<8x128xf32>
    %245 = math.tanh %244 : vector<8x128xf32>
    %c64_i32_115 = arith.constant 64 : i32
    %246 = tpu.dynamic_rotate %245 by %c64_i32_115 dim 1 : vector<8x128xf32>, i32 -> vector<8x128xf32>
    %c96_i32_116 = arith.constant 96 : i32
    %247 = tpu.dynamic_rotate %240 by %c96_i32_116 dim 1 : vector<8x128xf32>, i32 -> vector<8x128xf32>
    %248 = arith.subf %206, %246 : vector<8x128xf32>
    %249 = arith.mulf %247, %248 : vector<8x128xf32>
    %250 = arith.addf %246, %249 : vector<8x128xf32>
    %cst_117 = arith.constant 0.000000e+00 : f32
    %251 = vector.broadcast %cst_117 : f32 to vector<8x128xf32>
    %252 = arith.select %2, %250, %251 : vector<8x128xi1>, vector<8x128xf32>
    %c40 = arith.constant 40 : index
    %c0_118 = arith.constant 0 : index
    %253 = vector.load %arg10[%c40, %c0_118] : memref<64x128xf32, #tpu.memory_space<vmem>>, vector<8x128xf32>
    %cst_119 = arith.constant dense<0.000000e+00> : vector<8x128xf32>
    %254 = tpu.matmul %228, %10, %cst_119 {dimension_numbers = #tpu.dot_dimension_numbers<[1], [0], [0], [1], [0, 0, 1, 1], [], []>} : vector<8x128xf32>, vector<128x128xf32>, vector<8x128xf32> -> vector<8x128xf32>
    %255 = arith.addf %253, %254 : vector<8x128xf32>
    %cst_120 = arith.constant 5.000000e-01 : f32
    %256 = vector.broadcast %cst_120 : f32 to vector<8x128xf32>
    %257 = arith.mulf %256, %255 : vector<8x128xf32>
    %258 = math.tanh %257 : vector<8x128xf32>
    %cst_121 = arith.constant 1.000000e+00 : f32
    %259 = vector.broadcast %cst_121 : f32 to vector<8x128xf32>
    %260 = arith.addf %258, %259 : vector<8x128xf32>
    %cst_122 = arith.constant 5.000000e-01 : f32
    %261 = vector.broadcast %cst_122 : f32 to vector<8x128xf32>
    %262 = arith.mulf %261, %260 : vector<8x128xf32>
    %c64_i32_123 = arith.constant 64 : i32
    %263 = tpu.dynamic_rotate %262 by %c64_i32_123 dim 1 : vector<8x128xf32>, i32 -> vector<8x128xf32>
    %264 = arith.addf %254, %14 : vector<8x128xf32>
    %265 = arith.mulf %263, %264 : vector<8x128xf32>
    %266 = arith.addf %253, %265 : vector<8x128xf32>
    %267 = math.tanh %266 : vector<8x128xf32>
    %c64_i32_124 = arith.constant 64 : i32
    %268 = tpu.dynamic_rotate %267 by %c64_i32_124 dim 1 : vector<8x128xf32>, i32 -> vector<8x128xf32>
    %c96_i32_125 = arith.constant 96 : i32
    %269 = tpu.dynamic_rotate %262 by %c96_i32_125 dim 1 : vector<8x128xf32>, i32 -> vector<8x128xf32>
    %270 = arith.subf %228, %268 : vector<8x128xf32>
    %271 = arith.mulf %269, %270 : vector<8x128xf32>
    %272 = arith.addf %268, %271 : vector<8x128xf32>
    %cst_126 = arith.constant 0.000000e+00 : f32
    %273 = vector.broadcast %cst_126 : f32 to vector<8x128xf32>
    %274 = arith.select %2, %272, %273 : vector<8x128xi1>, vector<8x128xf32>
    %c0_127 = arith.constant 0 : index
    %c0_128 = arith.constant 0 : index
    %275 = vector.load %arg5[%c0_127, %c0_128] : memref<128x128xf32, #tpu.memory_space<vmem>>, vector<128x128xf32>
    %cst_129 = arith.constant dense<0.000000e+00> : vector<8x128xf32>
    %276 = tpu.matmul %274, %275, %cst_129 {dimension_numbers = #tpu.dot_dimension_numbers<[1], [0], [0], [1], [0, 0, 1, 1], [], []>} : vector<8x128xf32>, vector<128x128xf32>, vector<8x128xf32> -> vector<8x128xf32>
    %277 = arith.addf %276, %20 : vector<8x128xf32>
    %cst_130 = arith.constant dense<0.000000e+00> : vector<8x128xf32>
    %278 = tpu.matmul %252, %11, %cst_130 {dimension_numbers = #tpu.dot_dimension_numbers<[1], [0], [0], [1], [0, 0, 1, 1], [], []>} : vector<8x128xf32>, vector<128x128xf32>, vector<8x128xf32> -> vector<8x128xf32>
    %279 = arith.addf %277, %278 : vector<8x128xf32>
    %cst_131 = arith.constant 5.000000e-01 : f32
    %280 = vector.broadcast %cst_131 : f32 to vector<8x128xf32>
    %281 = arith.mulf %280, %279 : vector<8x128xf32>
    %282 = math.tanh %281 : vector<8x128xf32>
    %cst_132 = arith.constant 1.000000e+00 : f32
    %283 = vector.broadcast %cst_132 : f32 to vector<8x128xf32>
    %284 = arith.addf %282, %283 : vector<8x128xf32>
    %cst_133 = arith.constant 5.000000e-01 : f32
    %285 = vector.broadcast %cst_133 : f32 to vector<8x128xf32>
    %286 = arith.mulf %285, %284 : vector<8x128xf32>
    %c64_i32_134 = arith.constant 64 : i32
    %287 = tpu.dynamic_rotate %286 by %c64_i32_134 dim 1 : vector<8x128xf32>, i32 -> vector<8x128xf32>
    %288 = arith.addf %278, %17 : vector<8x128xf32>
    %289 = arith.mulf %287, %288 : vector<8x128xf32>
    %290 = arith.addf %277, %289 : vector<8x128xf32>
    %291 = math.tanh %290 : vector<8x128xf32>
    %c64_i32_135 = arith.constant 64 : i32
    %292 = tpu.dynamic_rotate %291 by %c64_i32_135 dim 1 : vector<8x128xf32>, i32 -> vector<8x128xf32>
    %c96_i32_136 = arith.constant 96 : i32
    %293 = tpu.dynamic_rotate %286 by %c96_i32_136 dim 1 : vector<8x128xf32>, i32 -> vector<8x128xf32>
    %294 = arith.subf %252, %292 : vector<8x128xf32>
    %295 = arith.mulf %293, %294 : vector<8x128xf32>
    %296 = arith.addf %292, %295 : vector<8x128xf32>
    %cst_137 = arith.constant 0.000000e+00 : f32
    %297 = vector.broadcast %cst_137 : f32 to vector<8x128xf32>
    %298 = arith.select %2, %296, %297 : vector<8x128xi1>, vector<8x128xf32>
    %c48 = arith.constant 48 : index
    %c0_138 = arith.constant 0 : index
    %299 = vector.load %arg10[%c48, %c0_138] : memref<64x128xf32, #tpu.memory_space<vmem>>, vector<8x128xf32>
    %cst_139 = arith.constant dense<0.000000e+00> : vector<8x128xf32>
    %300 = tpu.matmul %274, %10, %cst_139 {dimension_numbers = #tpu.dot_dimension_numbers<[1], [0], [0], [1], [0, 0, 1, 1], [], []>} : vector<8x128xf32>, vector<128x128xf32>, vector<8x128xf32> -> vector<8x128xf32>
    %301 = arith.addf %299, %300 : vector<8x128xf32>
    %cst_140 = arith.constant 5.000000e-01 : f32
    %302 = vector.broadcast %cst_140 : f32 to vector<8x128xf32>
    %303 = arith.mulf %302, %301 : vector<8x128xf32>
    %304 = math.tanh %303 : vector<8x128xf32>
    %cst_141 = arith.constant 1.000000e+00 : f32
    %305 = vector.broadcast %cst_141 : f32 to vector<8x128xf32>
    %306 = arith.addf %304, %305 : vector<8x128xf32>
    %cst_142 = arith.constant 5.000000e-01 : f32
    %307 = vector.broadcast %cst_142 : f32 to vector<8x128xf32>
    %308 = arith.mulf %307, %306 : vector<8x128xf32>
    %c64_i32_143 = arith.constant 64 : i32
    %309 = tpu.dynamic_rotate %308 by %c64_i32_143 dim 1 : vector<8x128xf32>, i32 -> vector<8x128xf32>
    %310 = arith.addf %300, %14 : vector<8x128xf32>
    %311 = arith.mulf %309, %310 : vector<8x128xf32>
    %312 = arith.addf %299, %311 : vector<8x128xf32>
    %313 = math.tanh %312 : vector<8x128xf32>
    %c64_i32_144 = arith.constant 64 : i32
    %314 = tpu.dynamic_rotate %313 by %c64_i32_144 dim 1 : vector<8x128xf32>, i32 -> vector<8x128xf32>
    %c96_i32_145 = arith.constant 96 : i32
    %315 = tpu.dynamic_rotate %308 by %c96_i32_145 dim 1 : vector<8x128xf32>, i32 -> vector<8x128xf32>
    %316 = arith.subf %274, %314 : vector<8x128xf32>
    %317 = arith.mulf %315, %316 : vector<8x128xf32>
    %318 = arith.addf %314, %317 : vector<8x128xf32>
    %cst_146 = arith.constant 0.000000e+00 : f32
    %319 = vector.broadcast %cst_146 : f32 to vector<8x128xf32>
    %320 = arith.select %2, %318, %319 : vector<8x128xi1>, vector<8x128xf32>
    %c0_147 = arith.constant 0 : index
    %c0_148 = arith.constant 0 : index
    %321 = vector.load %arg5[%c0_147, %c0_148] : memref<128x128xf32, #tpu.memory_space<vmem>>, vector<128x128xf32>
    %cst_149 = arith.constant dense<0.000000e+00> : vector<8x128xf32>
    %322 = tpu.matmul %320, %321, %cst_149 {dimension_numbers = #tpu.dot_dimension_numbers<[1], [0], [0], [1], [0, 0, 1, 1], [], []>} : vector<8x128xf32>, vector<128x128xf32>, vector<8x128xf32> -> vector<8x128xf32>
    %323 = arith.addf %322, %20 : vector<8x128xf32>
    %cst_150 = arith.constant dense<0.000000e+00> : vector<8x128xf32>
    %324 = tpu.matmul %298, %11, %cst_150 {dimension_numbers = #tpu.dot_dimension_numbers<[1], [0], [0], [1], [0, 0, 1, 1], [], []>} : vector<8x128xf32>, vector<128x128xf32>, vector<8x128xf32> -> vector<8x128xf32>
    %325 = arith.addf %323, %324 : vector<8x128xf32>
    %cst_151 = arith.constant 5.000000e-01 : f32
    %326 = vector.broadcast %cst_151 : f32 to vector<8x128xf32>
    %327 = arith.mulf %326, %325 : vector<8x128xf32>
    %328 = math.tanh %327 : vector<8x128xf32>
    %cst_152 = arith.constant 1.000000e+00 : f32
    %329 = vector.broadcast %cst_152 : f32 to vector<8x128xf32>
    %330 = arith.addf %328, %329 : vector<8x128xf32>
    %cst_153 = arith.constant 5.000000e-01 : f32
    %331 = vector.broadcast %cst_153 : f32 to vector<8x128xf32>
    %332 = arith.mulf %331, %330 : vector<8x128xf32>
    %c64_i32_154 = arith.constant 64 : i32
    %333 = tpu.dynamic_rotate %332 by %c64_i32_154 dim 1 : vector<8x128xf32>, i32 -> vector<8x128xf32>
    %334 = arith.addf %324, %17 : vector<8x128xf32>
    %335 = arith.mulf %333, %334 : vector<8x128xf32>
    %336 = arith.addf %323, %335 : vector<8x128xf32>
    %337 = math.tanh %336 : vector<8x128xf32>
    %c64_i32_155 = arith.constant 64 : i32
    %338 = tpu.dynamic_rotate %337 by %c64_i32_155 dim 1 : vector<8x128xf32>, i32 -> vector<8x128xf32>
    %c96_i32_156 = arith.constant 96 : i32
    %339 = tpu.dynamic_rotate %332 by %c96_i32_156 dim 1 : vector<8x128xf32>, i32 -> vector<8x128xf32>
    %340 = arith.subf %298, %338 : vector<8x128xf32>
    %341 = arith.mulf %339, %340 : vector<8x128xf32>
    %342 = arith.addf %338, %341 : vector<8x128xf32>
    %cst_157 = arith.constant 0.000000e+00 : f32
    %343 = vector.broadcast %cst_157 : f32 to vector<8x128xf32>
    %344 = arith.select %2, %342, %343 : vector<8x128xi1>, vector<8x128xf32>
    %c56 = arith.constant 56 : index
    %c0_158 = arith.constant 0 : index
    %345 = vector.load %arg10[%c56, %c0_158] : memref<64x128xf32, #tpu.memory_space<vmem>>, vector<8x128xf32>
    %cst_159 = arith.constant dense<0.000000e+00> : vector<8x128xf32>
    %346 = tpu.matmul %320, %10, %cst_159 {dimension_numbers = #tpu.dot_dimension_numbers<[1], [0], [0], [1], [0, 0, 1, 1], [], []>} : vector<8x128xf32>, vector<128x128xf32>, vector<8x128xf32> -> vector<8x128xf32>
    %347 = arith.addf %345, %346 : vector<8x128xf32>
    %cst_160 = arith.constant 5.000000e-01 : f32
    %348 = vector.broadcast %cst_160 : f32 to vector<8x128xf32>
    %349 = arith.mulf %348, %347 : vector<8x128xf32>
    %350 = math.tanh %349 : vector<8x128xf32>
    %cst_161 = arith.constant 1.000000e+00 : f32
    %351 = vector.broadcast %cst_161 : f32 to vector<8x128xf32>
    %352 = arith.addf %350, %351 : vector<8x128xf32>
    %cst_162 = arith.constant 5.000000e-01 : f32
    %353 = vector.broadcast %cst_162 : f32 to vector<8x128xf32>
    %354 = arith.mulf %353, %352 : vector<8x128xf32>
    %c64_i32_163 = arith.constant 64 : i32
    %355 = tpu.dynamic_rotate %354 by %c64_i32_163 dim 1 : vector<8x128xf32>, i32 -> vector<8x128xf32>
    %356 = arith.addf %346, %14 : vector<8x128xf32>
    %357 = arith.mulf %355, %356 : vector<8x128xf32>
    %358 = arith.addf %345, %357 : vector<8x128xf32>
    %359 = math.tanh %358 : vector<8x128xf32>
    %c64_i32_164 = arith.constant 64 : i32
    %360 = tpu.dynamic_rotate %359 by %c64_i32_164 dim 1 : vector<8x128xf32>, i32 -> vector<8x128xf32>
    %c96_i32_165 = arith.constant 96 : i32
    %361 = tpu.dynamic_rotate %354 by %c96_i32_165 dim 1 : vector<8x128xf32>, i32 -> vector<8x128xf32>
    %362 = arith.subf %320, %360 : vector<8x128xf32>
    %363 = arith.mulf %361, %362 : vector<8x128xf32>
    %364 = arith.addf %360, %363 : vector<8x128xf32>
    %cst_166 = arith.constant 0.000000e+00 : f32
    %365 = vector.broadcast %cst_166 : f32 to vector<8x128xf32>
    %366 = arith.select %2, %364, %365 : vector<8x128xi1>, vector<8x128xf32>
    %c0_167 = arith.constant 0 : index
    %c0_168 = arith.constant 0 : index
    %367 = vector.load %arg5[%c0_167, %c0_168] : memref<128x128xf32, #tpu.memory_space<vmem>>, vector<128x128xf32>
    %cst_169 = arith.constant dense<0.000000e+00> : vector<8x128xf32>
    %368 = tpu.matmul %366, %367, %cst_169 {dimension_numbers = #tpu.dot_dimension_numbers<[1], [0], [0], [1], [0, 0, 1, 1], [], []>} : vector<8x128xf32>, vector<128x128xf32>, vector<8x128xf32> -> vector<8x128xf32>
    %369 = arith.addf %368, %20 : vector<8x128xf32>
    %cst_170 = arith.constant dense<0.000000e+00> : vector<8x128xf32>
    %370 = tpu.matmul %344, %11, %cst_170 {dimension_numbers = #tpu.dot_dimension_numbers<[1], [0], [0], [1], [0, 0, 1, 1], [], []>} : vector<8x128xf32>, vector<128x128xf32>, vector<8x128xf32> -> vector<8x128xf32>
    %371 = arith.addf %369, %370 : vector<8x128xf32>
    %cst_171 = arith.constant 5.000000e-01 : f32
    %372 = vector.broadcast %cst_171 : f32 to vector<8x128xf32>
    %373 = arith.mulf %372, %371 : vector<8x128xf32>
    %374 = math.tanh %373 : vector<8x128xf32>
    %cst_172 = arith.constant 1.000000e+00 : f32
    %375 = vector.broadcast %cst_172 : f32 to vector<8x128xf32>
    %376 = arith.addf %374, %375 : vector<8x128xf32>
    %cst_173 = arith.constant 5.000000e-01 : f32
    %377 = vector.broadcast %cst_173 : f32 to vector<8x128xf32>
    %378 = arith.mulf %377, %376 : vector<8x128xf32>
    %c64_i32_174 = arith.constant 64 : i32
    %379 = tpu.dynamic_rotate %378 by %c64_i32_174 dim 1 : vector<8x128xf32>, i32 -> vector<8x128xf32>
    %380 = arith.addf %370, %17 : vector<8x128xf32>
    %381 = arith.mulf %379, %380 : vector<8x128xf32>
    %382 = arith.addf %369, %381 : vector<8x128xf32>
    %383 = math.tanh %382 : vector<8x128xf32>
    %c64_i32_175 = arith.constant 64 : i32
    %384 = tpu.dynamic_rotate %383 by %c64_i32_175 dim 1 : vector<8x128xf32>, i32 -> vector<8x128xf32>
    %c96_i32_176 = arith.constant 96 : i32
    %385 = tpu.dynamic_rotate %378 by %c96_i32_176 dim 1 : vector<8x128xf32>, i32 -> vector<8x128xf32>
    %386 = arith.subf %344, %384 : vector<8x128xf32>
    %387 = arith.mulf %385, %386 : vector<8x128xf32>
    %388 = arith.addf %384, %387 : vector<8x128xf32>
    %cst_177 = arith.constant 0.000000e+00 : f32
    %389 = vector.broadcast %cst_177 : f32 to vector<8x128xf32>
    %390 = arith.select %2, %388, %389 : vector<8x128xi1>, vector<8x128xf32>
    %c0_178 = arith.constant 0 : index
    %c0_179 = arith.constant 0 : index
    %c0_180 = arith.constant 0 : index
    %391 = vector.load %arg9[%c0_178, %c0_179, %c0_180] : memref<2x8x128xf32, #tpu.memory_space<vmem>>, vector<1x8x128xf32>
    %392 = vector.shape_cast %391 : vector<1x8x128xf32> to vector<8x128xf32>
    %393 = vector.shape_cast %366 : vector<8x128xf32> to vector<1x8x128xf32>
    tpu.vector_store %arg9[%c0_178, %c0_179, %c0_180], %393 {strides = array<i32>} : memref<2x8x128xf32, #tpu.memory_space<vmem>>, vector<1x8x128xf32>,
    %c1 = arith.constant 1 : index
    %c0_181 = arith.constant 0 : index
    %c0_182 = arith.constant 0 : index
    %394 = vector.load %arg9[%c1, %c0_181, %c0_182] : memref<2x8x128xf32, #tpu.memory_space<vmem>>, vector<1x8x128xf32>
    %395 = vector.shape_cast %394 : vector<1x8x128xf32> to vector<8x128xf32>
    %396 = vector.shape_cast %390 : vector<8x128xf32> to vector<1x8x128xf32>
    tpu.vector_store %arg9[%c1, %c0_181, %c0_182], %396 {strides = array<i32>} : memref<2x8x128xf32, #tpu.memory_space<vmem>>, vector<1x8x128xf32>,
    return
  }
}

</mosaic_0001>

<llo_original>
// kernel: _gru_forward.1
$region0: #{_gru_forward.1}
  #allocation0 [shape = 'u32[]', space=smem, size = 0x4, offset = 0x4, fixed_abs, tag = 'smem constant byte address 0x4 - core index']
  #allocation1 [shape = 'u32[144,128]{1,0:T(1,128)}', space=vmem, size = 0x12000, scoped, tag = 'internal scratch']
  #allocation2 [shape = 'f32[64,128]{1,0:T(8,128)}', space=vmem, size = 0x8000, scoped, tag = 'scratch operand']
  %s0 = inlined_call_operand.vmem [shape: f32[64,128], index: 0, kind: input, shape index: {}]
  %s1 = inlined_call_operand.hbm [shape: f32[128,128], index: 1, kind: input, shape index: {}]
  %s2 = inlined_call_operand.vmem [shape: f32[1,128], index: 2, kind: input, shape index: {}]
  %s3 = inlined_call_operand.hbm [shape: f32[128,128], index: 3, kind: input, shape index: {}]
  %s4 = inlined_call_operand.vmem [shape: f32[1,128], index: 4, kind: input, shape index: {}]
  %s5 = inlined_call_operand.hbm [shape: f32[128,128], index: 5, kind: input, shape index: {}]
  %s6 = inlined_call_operand.vmem [shape: f32[1,128], index: 6, kind: input, shape index: {}]
  %s7 = inlined_call_operand.hbm [shape: f32[128,128], index: 7, kind: input, shape index: {}]
  %s8 = inlined_call_operand.vmem [shape: f32[1,128], index: 8, kind: input, shape index: {}]
  %s9 = inlined_call_operand.vmem [shape: f32[2,8,128], index: 9, kind: output, shape index: {}]
  %s10 = sld [smem:[#allocation0]]
  $region62: #{_gru_forward.1} parent=0
    _
  %s12 = ssub.s32 1, %s10
  %s13 = scalar_select 0, %s12, %s10
  $region1: #{_gru_forward.1} parent=0
    #allocation3 [shape = 'u8[65536]{0}', space=vmem, size = 0x10000, scoped, tag = 'input window, operand 1, single buffered']
    #allocation4 [shape = 's32[1]{0}', space=sflag, size = 0x4, scoped, tag = 'scoped memory for _gru_forward.1']
    #allocation5 [shape = 'u8[65536]{0}', space=vmem, size = 0x10000, scoped, tag = 'input window, operand 3, single buffered']
    #allocation6 [shape = 's32[1]{0}', space=sflag, size = 0x4, scoped, tag = 'scoped memory for _gru_forward.1']
    #allocation7 [shape = 'u8[65536]{0}', space=vmem, size = 0x10000, scoped, tag = 'input window, operand 5, single buffered']
    #allocation8 [shape = 'u8[65536]{0}', space=vmem, size = 0x10000, scoped, tag = 'input window, operand 7, single buffered']
    #allocation9 [shape = 's32[1]{0}', space=sflag, size = 0x4, scoped, tag = 'scoped memory for _gru_forward.1']
    %14 = vsyncpa [#allocation4], 0
    %15 = vsyncpa [#allocation6], 0
    %16 = vsyncpa [#allocation9], 0
    // Predicated region
    $region2: #{_gru_forward.1} parent=1 // pred_check
      _
    $region3: #{_gru_forward.1} parent=1 // pred_check_branch
      %18 = sbr.rel (0) target = $region5
    $region4: #{_gru_forward.1} parent=1 // pred_region
      _
    $region5: #{_gru_forward.1} parent=1 // pred_fallthru
      _
    // Predicated region
    $region6: #{_gru_forward.1} parent=1 // pred_check
      _
    $region7: #{_gru_forward.1} parent=1 // pred_check_branch
      %20 = sbr.rel (0) target = $region9
    $region8: #{_gru_forward.1} parent=1 // pred_region
      %s22 = ssub.s32 2048, 2048
      %23 = vsyncadd [#allocation4], %s22
      %s24 = sshll.u32 [#allocation3], 4
      %s25 = int_to_ptr.vmem [resolvable:$true] %s24
      %30 = dma.hbm_to_vmem [thread:$0]  %s1, 2048, %s25, [#allocation4], 128, 128, 8
    $region9: #{_gru_forward.1} parent=1 // pred_fallthru
      _
    // Predicated region
    $region10: #{_gru_forward.1} parent=1 // pred_check
      _
    $region11: #{_gru_forward.1} parent=1 // pred_check_branch
      %32 = sbr.rel (0) target = $region13
    $region12: #{_gru_forward.1} parent=1 // pred_region
      _
    $region13: #{_gru_forward.1} parent=1 // pred_fallthru
      _
    // Predicated region
    $region14: #{_gru_forward.1} parent=1 // pred_check
      _
    $region15: #{_gru_forward.1} parent=1 // pred_check_branch
      %34 = sbr.rel (0) target = $region17
    $region16: #{_gru_forward.1} parent=1 // pred_region
      %s36 = ssub.s32 2048, 2048
      %37 = vsyncadd [#allocation6], %s36
      %s38 = sshll.u32 [#allocation5], 4
      %s39 = int_to_ptr.vmem [resolvable:$true] %s38
      %44 = dma.hbm_to_vmem [thread:$0]  %s3, 2048, %s39, [#allocation6], 128, 128, 8
    $region17: #{_gru_forward.1} parent=1 // pred_fallthru
      _
    // Predicated region
    $region18: #{_gru_forward.1} parent=1 // pred_check
      _
    $region19: #{_gru_forward.1} parent=1 // pred_check_branch
      %46 = sbr.rel (0) target = $region21
    $region20: #{_gru_forward.1} parent=1 // pred_region
      _
    $region21: #{_gru_forward.1} parent=1 // pred_fallthru
      _
    // Predicated region
    $region22: #{_gru_forward.1} parent=1 // pred_check
      _
    $region23: #{_gru_forward.1} parent=1 // pred_check_branch
      %48 = sbr.rel (0) target = $region25
    $region24: #{_gru_forward.1} parent=1 // pred_region
      %s50 = ssub.s32 2048, 2048
      %51 = vsyncadd [#allocation6], %s50
      %s52 = sshll.u32 [#allocation7], 4
      %s53 = int_to_ptr.vmem [resolvable:$true] %s52
      %58 = dma.hbm_to_vmem [thread:$0]  %s5, 2048, %s53, [#allocation6], 128, 128, 8
    $region25: #{_gru_forward.1} parent=1 // pred_fallthru
      _
    // Predicated region
    $region26: #{_gru_forward.1} parent=1 // pred_check
      _
    $region27: #{_gru_forward.1} parent=1 // pred_check_branch
      %60 = sbr.rel (0) target = $region29
    $region28: #{_gru_forward.1} parent=1 // pred_region
      _
    $region29: #{_gru_forward.1} parent=1 // pred_fallthru
      _
    // Predicated region
    $region30: #{_gru_forward.1} parent=1 // pred_check
      _
    $region31: #{_gru_forward.1} parent=1 // pred_check_branch
      %62 = sbr.rel (0) target = $region33
    $region32: #{_gru_forward.1} parent=1 // pred_region
      %s64 = ssub.s32 2048, 2048
      %65 = vsyncadd [#allocation9], %s64
      %s66 = sshll.u32 [#allocation8], 4
      %s67 = int_to_ptr.vmem [resolvable:$true] %s66
      %72 = dma.hbm_to_vmem [thread:$0]  %s7, 2048, %s67, [#allocation9], 128, 128, 8
    $region33: #{_gru_forward.1} parent=1 // pred_fallthru
      _
    // Predicated region
    $region34: #{_gru_forward.1} parent=1 // pred_check
      _
    $region35: #{_gru_forward.1} parent=1 // pred_check_branch
      %74 = sbr.rel (0) target = $region37
    $region36: #{_gru_forward.1} parent=1 // pred_region
      _
    $region37: #{_gru_forward.1} parent=1 // pred_fallthru
      _
    // Predicated region
    $region38: #{_gru_forward.1} parent=1 // pred_check
      _
    $region39: #{_gru_forward.1} parent=1 // pred_check_branch
      %76 = sbr.rel (0) target = $region41
    $region40: #{_gru_forward.1} parent=1 // pred_region
      %77 = dma.done [#allocation4], 2048
    $region41: #{_gru_forward.1} parent=1 // pred_fallthru
      _
    // Predicated region
    $region42: #{_gru_forward.1} parent=1 // pred_check
      _
    $region43: #{_gru_forward.1} parent=1 // pred_check_branch
      %79 = sbr.rel (0) target = $region45
    $region44: #{_gru_forward.1} parent=1 // pred_region
      %80 = dma.done [#allocation6], 2048
    $region45: #{_gru_forward.1} parent=1 // pred_fallthru
      _
    // Predicated region
    $region46: #{_gru_forward.1} parent=1 // pred_check
      _
    $region47: #{_gru_forward.1} parent=1 // pred_check_branch
      %82 = sbr.rel (0) target = $region49
    $region48: #{_gru_forward.1} parent=1 // pred_region
      %83 = dma.done [#allocation6], 2048
    $region49: #{_gru_forward.1} parent=1 // pred_fallthru
      _
    // Predicated region
    $region50: #{_gru_forward.1} parent=1 // pred_check
      _
    $region51: #{_gru_forward.1} parent=1 // pred_check_branch
      %85 = sbr.rel (0) target = $region53
    $region52: #{_gru_forward.1} parent=1 // pred_region
      %86 = dma.done [#allocation9], 2048
    $region53: #{_gru_forward.1} parent=1 // pred_fallthru
      _
    %v87 = vlaneseq
    %v88 = vand.u32 %v87, 127
    %vm89 = vcmp.lt.s32.totalorder %v88, 32
    %v90 = vld [vmem:[%s0] sm:$0xff]
    %v91 = vld [vmem:[%s0 + $0x8] sm:$0xff]
    %v92 = vld [vmem:[%s0 + $0x10] sm:$0xff]
    %v93 = vld [vmem:[%s0 + $0x18] sm:$0xff]
    %v94 = vld [vmem:[%s0 + $0x20] sm:$0xff]
    %v95 = vld [vmem:[%s0 + $0x28] sm:$0xff]
    %v96 = vld [vmem:[%s0 + $0x30] sm:$0xff]
    %v97 = vld [vmem:[%s0 + $0x38] sm:$0xff]
    %v98 = vld [vmem:[#allocation3] sm:$0xff]
    %v99 = vld [vmem:[#allocation3 + $0x8] sm:$0xff]
    %v100 = vld [vmem:[#allocation3 + $0x10] sm:$0xff]
    %v101 = vld [vmem:[#allocation3 + $0x18] sm:$0xff]
    %v102 = vld [vmem:[#allocation3 + $0x20] sm:$0xff]
    %v103 = vld [vmem:[#allocation3 + $0x28] sm:$0xff]
    %v104 = vld [vmem:[#allocation3 + $0x30] sm:$0xff]
    %v105 = vld [vmem:[#allocation3 + $0x38] sm:$0xff]
    %v106 = vld [vmem:[#allocation3 + $0x40] sm:$0xff]
    %v107 = vld [vmem:[#allocation3 + $0x48] sm:$0xff]
    %v108 = vld [vmem:[#allocation3 + $0x50] sm:$0xff]
    %v109 = vld [vmem:[#allocation3 + $0x58] sm:$0xff]
    %v110 = vld [vmem:[#allocation3 + $0x60] sm:$0xff]
    %v111 = vld [vmem:[#allocation3 + $0x68] sm:$0xff]
    %v112 = vld [vmem:[#allocation3 + $0x70] sm:$0xff]
    %v113 = vld [vmem:[#allocation3 + $0x78] sm:$0xff]
    %v114 = vld [vmem:[%s2] sm:$0x1]
    %v116 = vlaneseq
    %v117 = vshrl.u32 %v116, 7
    %v118 = vsub.s32 0, %v117
    %v119 = vrot.slane %v114, %v118
    %121 = vmatprep.subr.mxu0 0.0
    %122 = vmatpush1.msra.mxu0 %v113
    %123 = vmatprep.subr.mxu0 0.0
    %124 = vmatpush1.msra.mxu0 %v112
    %125 = vmatprep.subr.mxu0 0.0
    %126 = vmatpush1.msra.mxu0 %v111
    %127 = vmatprep.subr.mxu0 0.0
    %128 = vmatpush1.msra.mxu0 %v110
    %129 = vmatprep.subr.mxu0 0.0
    %130 = vmatpush1.msra.mxu0 %v109
    %131 = vmatprep.subr.mxu0 0.0
    %132 = vmatpush1.msra.mxu0 %v108
    %133 = vmatprep.subr.mxu0 0.0
    %134 = vmatpush1.msra.mxu0 %v107
    %135 = vmatprep.subr.mxu0 0.0
    %136 = vmatpush1.msra.mxu0 %v106
    %137 = vmatprep.subr.mxu0 0.0
    %138 = vmatpush1.msra.mxu0 %v105
    %139 = vmatprep.subr.mxu0 0.0
    %140 = vmatpush1.msra.mxu0 %v104
    %141 = vmatprep.subr.mxu0 0.0
    %142 = vmatpush1.msra.mxu0 %v103
    %143 = vmatprep.subr.mxu0 0.0
    %144 = vmatpush1.msra.mxu0 %v102
    %145 = vmatprep.subr.mxu0 0.0
    %146 = vmatpush1.msra.mxu0 %v101
    %147 = vmatprep.subr.mxu0 0.0
    %148 = vmatpush1.msra.mxu0 %v100
    %149 = vmatprep.subr.mxu0 0.0
    %150 = vmatpush1.msra.mxu0 %v99
    %151 = vmatprep.subr.mxu0 0.0
    %152 = vmatpush1.msra.mxu0 %v98
    %153 = vmatprep.subr.mxu0 0.0
    %154 = vmatpush2.msra.mxu0 0.0
    %155 = vmatprep.subr.mxu0 0.0
    %156 = vmatpush2.msra.mxu0 0.0
    %157 = vmatprep.subr.mxu0 0.0
    %158 = vmatpush2.msra.mxu0 0.0
    %159 = vmatprep.subr.mxu0 0.0
    %160 = vmatpush2.msra.mxu0 0.0
    %161 = vmatprep.subr.mxu0 0.0
    %162 = vmatpush2.msra.mxu0 0.0
    %163 = vmatprep.subr.mxu0 0.0
    %164 = vmatpush2.msra.mxu0 0.0
    %165 = vmatprep.subr.mxu0 0.0
    %166 = vmatpush2.msra.mxu0 0.0
    %167 = vmatprep.subr.mxu0 0.0
    %168 = vmatpush2.msra.mxu0 0.0
    %169 = vmatprep.subr.mxu0 0.0
    %170 = vmatpush2.msra.mxu0 0.0
    %171 = vmatprep.subr.mxu0 0.0
    %172 = vmatpush2.msra.mxu0 0.0
    %173 = vmatprep.subr.mxu0 0.0
    %174 = vmatpush2.msra.mxu0 0.0
    %175 = vmatprep.subr.mxu0 0.0
    %176 = vmatpush2.msra.mxu0 0.0
    %177 = vmatprep.subr.mxu0 0.0
    %178 = vmatpush2.msra.mxu0 0.0
    %179 = vmatprep.subr.mxu0 0.0
    %180 = vmatpush2.msra.mxu0 0.0
    %181 = vmatprep.subr.mxu0 0.0
    %182 = vmatpush2.msra.mxu0 0.0
    %183 = vmatprep.subr.mxu0 0.0
    %184 = vmatpush2.msra.mxu0 0.0
    %185 = vmatprep.mubr.f32.mxu0 0.0
    %186 = vmatmul.mubr.f32.gmra.mxu0 %v90
    %v187 = vpop.f32.mrf.mxu0
    %v188 = vadd.f32 %v119, %v187
    %v189 = vpop.f32.mrf.mxu0
    %190 = vmatprep.mubr.f32.mxu0 0.0
    %191 = vmatmul.mubr.f32.gmra.mxu0 %v91
    %v192 = vpop.f32.mrf.mxu0
    %v193 = vadd.f32 %v119, %v192
    %v194 = vpop.f32.mrf.mxu0
    %195 = vmatprep.mubr.f32.mxu0 0.0
    %196 = vmatmul.mubr.f32.gmra.mxu0 %v92
    %v197 = vpop.f32.mrf.mxu0
    %v198 = vadd.f32 %v119, %v197
    %v199 = vpop.f32.mrf.mxu0
    %200 = vmatprep.mubr.f32.mxu0 0.0
    %201 = vmatmul.mubr.f32.gmra.mxu0 %v93
    %v202 = vpop.f32.mrf.mxu0
    %v203 = vadd.f32 %v119, %v202
    %v204 = vpop.f32.mrf.mxu0
    %205 = vmatprep.mubr.f32.mxu0 0.0
    %206 = vmatmul.mubr.f32.gmra.mxu0 %v94
    %v207 = vpop.f32.mrf.mxu0
    %v208 = vadd.f32 %v119, %v207
    %v209 = vpop.f32.mrf.mxu0
    %210 = vmatprep.mubr.f32.mxu0 0.0
    %211 = vmatmul.mubr.f32.gmra.mxu0 %v95
    %v212 = vpop.f32.mrf.mxu0
    %v213 = vadd.f32 %v119, %v212
    %v214 = vpop.f32.mrf.mxu0
    %215 = vmatprep.mubr.f32.mxu0 0.0
    %216 = vmatmul.mubr.f32.gmra.mxu0 %v96
    %v217 = vpop.f32.mrf.mxu0
    %v218 = vadd.f32 %v119, %v217
    %v219 = vpop.f32.mrf.mxu0
    %220 = vmatprep.mubr.f32.mxu0 0.0
    %221 = vmatmul.mubr.f32.gmra.mxu0 %v97
    %v222 = vpop.f32.mrf.mxu0
    %v223 = vadd.f32 %v119, %v222
    %v224 = vpop.f32.mrf.mxu0
    %225 = vdwg.mxu0
    %226 = vst [vmem:[#allocation2] sm:$0xff] %v188
    %227 = vst [vmem:[#allocation2 + $0x8] sm:$0xff] %v193
    %228 = vst [vmem:[#allocation2 + $0x10] sm:$0xff] %v198
    %229 = vst [vmem:[#allocation2 + $0x18] sm:$0xff] %v203
    %230 = vst [vmem:[#allocation2 + $0x20] sm:$0xff] %v208
    %231 = vst [vmem:[#allocation2 + $0x28] sm:$0xff] %v213
    %232 = vst [vmem:[#allocation2 + $0x30] sm:$0xff] %v218
    %233 = vst [vmem:[#allocation2 + $0x38] sm:$0xff] %v223
    %v234 = vld [vmem:[#allocation5] sm:$0xff]
    %v235 = vld [vmem:[#allocation5 + $0x8] sm:$0xff]
    %v236 = vld [vmem:[#allocation5 + $0x10] sm:$0xff]
    %v237 = vld [vmem:[#allocation5 + $0x18] sm:$0xff]
    %v238 = vld [vmem:[#allocation5 + $0x20] sm:$0xff]
    %v239 = vld [vmem:[#allocation5 + $0x28] sm:$0xff]
    %v240 = vld [vmem:[#allocation5 + $0x30] sm:$0xff]
    %v241 = vld [vmem:[#allocation5 + $0x38] sm:$0xff]
    %v242 = vld [vmem:[#allocation5 + $0x40] sm:$0xff]
    %v243 = vld [vmem:[#allocation5 + $0x48] sm:$0xff]
    %v244 = vld [vmem:[#allocation5 + $0x50] sm:$0xff]
    %v245 = vld [vmem:[#allocation5 + $0x58] sm:$0xff]
    %v246 = vld [vmem:[#allocation5 + $0x60] sm:$0xff]
    %v247 = vld [vmem:[#allocation5 + $0x68] sm:$0xff]
    %v248 = vld [vmem:[#allocation5 + $0x70] sm:$0xff]
    %v249 = vld [vmem:[#allocation5 + $0x78] sm:$0xff]
    %v250 = vld [vmem:[#allocation8] sm:$0xff]
    %v251 = vld [vmem:[#allocation8 + $0x8] sm:$0xff]
    %v252 = vld [vmem:[#allocation8 + $0x10] sm:$0xff]
    %v253 = vld [vmem:[#allocation8 + $0x18] sm:$0xff]
    %v254 = vld [vmem:[#allocation8 + $0x20] sm:$0xff]
    %v255 = vld [vmem:[#allocation8 + $0x28] sm:$0xff]
    %v256 = vld [vmem:[#allocation8 + $0x30] sm:$0xff]
    %v257 = vld [vmem:[#allocation8 + $0x38] sm:$0xff]
    %v258 = vld [vmem:[#allocation8 + $0x40] sm:$0xff]
    %v259 = vld [vmem:[#allocation8 + $0x48] sm:$0xff]
    %v260 = vld [vmem:[#allocation8 + $0x50] sm:$0xff]
    %v261 = vld [vmem:[#allocation8 + $0x58] sm:$0xff]
    %v262 = vld [vmem:[#allocation8 + $0x60] sm:$0xff]
    %v263 = vld [vmem:[#allocation8 + $0x68] sm:$0xff]
    %v264 = vld [vmem:[#allocation8 + $0x70] sm:$0xff]
    %v265 = vld [vmem:[#allocation8 + $0x78] sm:$0xff]
    %v266 = vld [vmem:[%s4] sm:$0x1]
    %v268 = vlaneseq
    %v269 = vshrl.u32 %v268, 7
    %v270 = vsub.s32 0, %v269
    %v271 = vrot.slane %v266, %v270
    %v273 = vld [vmem:[%s8] sm:$0x1]
    %v275 = vlaneseq
    %v276 = vshrl.u32 %v275, 7
    %v277 = vsub.s32 0, %v276
    %v278 = vrot.slane %v273, %v277
    %v280 = vld [vmem:[%s6] sm:$0x1]
    %v282 = vlaneseq
    %v283 = vshrl.u32 %v282, 7
    %v284 = vsub.s32 0, %v283
    %v285 = vrot.slane %v280, %v284
    %v287 = vld [vmem:[#allocation2] sm:$0xff]
    %288 = vmatprep.subr.mxu0 0.0
    %289 = vmatpush1.msra.mxu0 %v249
    %290 = vmatprep.subr.mxu0 0.0
    %291 = vmatpush1.msra.mxu0 %v248
    %292 = vmatprep.subr.mxu0 0.0
    %293 = vmatpush1.msra.mxu0 %v247
    %294 = vmatprep.subr.mxu0 0.0
    %295 = vmatpush1.msra.mxu0 %v246
    %296 = vmatprep.subr.mxu0 0.0
    %297 = vmatpush1.msra.mxu0 %v245
    %298 = vmatprep.subr.mxu0 0.0
    %299 = vmatpush1.msra.mxu0 %v244
    %300 = vmatprep.subr.mxu0 0.0
    %301 = vmatpush1.msra.mxu0 %v243
    %302 = vmatprep.subr.mxu0 0.0
    %303 = vmatpush1.msra.mxu0 %v242
    %304 = vmatprep.subr.mxu0 0.0
    %305 = vmatpush1.msra.mxu0 %v241
    %306 = vmatprep.subr.mxu0 0.0
    %307 = vmatpush1.msra.mxu0 %v240
    %308 = vmatprep.subr.mxu0 0.0
    %309 = vmatpush1.msra.mxu0 %v239
    %310 = vmatprep.subr.mxu0 0.0
    %311 = vmatpush1.msra.mxu0 %v238
    %312 = vmatprep.subr.mxu0 0.0
    %313 = vmatpush1.msra.mxu0 %v237
    %314 = vmatprep.subr.mxu0 0.0
    %315 = vmatpush1.msra.mxu0 %v236
    %316 = vmatprep.subr.mxu0 0.0
    %317 = vmatpush1.msra.mxu0 %v235
    %318 = vmatprep.subr.mxu0 0.0
    %319 = vmatpush1.msra.mxu0 %v234
    %320 = vmatprep.subr.mxu0 0.0
    %321 = vmatpush2.msra.mxu0 0.0
    %322 = vmatprep.subr.mxu0 0.0
    %323 = vmatpush2.msra.mxu0 0.0
    %324 = vmatprep.subr.mxu0 0.0
    %325 = vmatpush2.msra.mxu0 0.0
    %326 = vmatprep.subr.mxu0 0.0
    %327 = vmatpush2.msra.mxu0 0.0
    %328 = vmatprep.subr.mxu0 0.0
    %329 = vmatpush2.msra.mxu0 0.0
    %330 = vmatprep.subr.mxu0 0.0
    %331 = vmatpush2.msra.mxu0 0.0
    %332 = vmatprep.subr.mxu0 0.0
    %333 = vmatpush2.msra.mxu0 0.0
    %334 = vmatprep.subr.mxu0 0.0
    %335 = vmatpush2.msra.mxu0 0.0
    %336 = vmatprep.subr.mxu0 0.0
    %337 = vmatpush2.msra.mxu0 0.0
    %338 = vmatprep.subr.mxu0 0.0
    %339 = vmatpush2.msra.mxu0 0.0
    %340 = vmatprep.subr.mxu0 0.0
    %341 = vmatpush2.msra.mxu0 0.0
    %342 = vmatprep.subr.mxu0 0.0
    %343 = vmatpush2.msra.mxu0 0.0
    %344 = vmatprep.subr.mxu0 0.0
    %345 = vmatpush2.msra.mxu0 0.0
    %346 = vmatprep.subr.mxu0 0.0
    %347 = vmatpush2.msra.mxu0 0.0
    %348 = vmatprep.subr.mxu0 0.0
    %349 = vmatpush2.msra.mxu0 0.0
    %350 = vmatprep.subr.mxu0 0.0
    %351 = vmatpush2.msra.mxu0 0.0
    %352 = vmatprep.mubr.f32.mxu0 0.0
    %353 = vmatmul.mubr.f32.gmra.mxu0 0.0
    %v354 = vpop.f32.mrf.mxu0
    %v355 = vadd.f32 0.0, %v354
    %v356 = vpop.f32.mrf.mxu0
    %357 = vdwg.mxu0
    %v358 = vadd.f32 %v287, %v355
    %v359 = vmul.f32 %v358, 0.5
    %v360 = vtanh.pop %v359
    %v361 = vadd.f32 %v360, 1.0
    %v362 = vmul.f32 %v361, 0.5
    %363 = vrot.lane.b32.xlu0 %v362, 64
    %v364 = vpop.permute.xlu0 %363
    %v365 = vadd.f32 %v355, %v271
    %v366 = vmul.f32 %v364, %v365
    %v367 = vadd.f32 %v287, %v366
    %v368 = vtanh.pop %v367
    %369 = vrot.lane.b32.xlu0 %v368, 64
    %v370 = vpop.permute.xlu0 %369
    %371 = vrot.lane.b32.xlu0 %v362, 96
    %v372 = vpop.permute.xlu0 %371
    %v373 = vsub.f32 0.0, %v370
    %v374 = vmul.f32 %v372, %v373
    %v375 = vadd.f32 %v370, %v374
    %v376 = vsel %vm89, %v375, 0.0
    %v377 = vld [vmem:[#allocation7] sm:$0xff]
    %v378 = vld [vmem:[#allocation7 + $0x8] sm:$0xff]
    %v379 = vld [vmem:[#allocation7 + $0x10] sm:$0xff]
    %v380 = vld [vmem:[#allocation7 + $0x18] sm:$0xff]
    %v381 = vld [vmem:[#allocation7 + $0x20] sm:$0xff]
    %v382 = vld [vmem:[#allocation7 + $0x28] sm:$0xff]
    %v383 = vld [vmem:[#allocation7 + $0x30] sm:$0xff]
    %v384 = vld [vmem:[#allocation7 + $0x38] sm:$0xff]
    %v385 = vld [vmem:[#allocation7 + $0x40] sm:$0xff]
    %v386 = vld [vmem:[#allocation7 + $0x48] sm:$0xff]
    %v387 = vld [vmem:[#allocation7 + $0x50] sm:$0xff]
    %v388 = vld [vmem:[#allocation7 + $0x58] sm:$0xff]
    %v389 = vld [vmem:[#allocation7 + $0x60] sm:$0xff]
    %v390 = vld [vmem:[#allocation7 + $0x68] sm:$0xff]
    %v391 = vld [vmem:[#allocation7 + $0x70] sm:$0xff]
    %v392 = vld [vmem:[#allocation7 + $0x78] sm:$0xff]
    %393 = vmatprep.subr.mxu0 0.0
    %394 = vmatpush1.msra.mxu0 %v392
    %395 = vmatprep.subr.mxu0 0.0
    %396 = vmatpush1.msra.mxu0 %v391
    %397 = vmatprep.subr.mxu0 0.0
    %398 = vmatpush1.msra.mxu0 %v390
    %399 = vmatprep.subr.mxu0 0.0
    %400 = vmatpush1.msra.mxu0 %v389
    %401 = vmatprep.subr.mxu0 0.0
    %402 = vmatpush1.msra.mxu0 %v388
    %403 = vmatprep.subr.mxu0 0.0
    %404 = vmatpush1.msra.mxu0 %v387
    %405 = vmatprep.subr.mxu0 0.0
    %406 = vmatpush1.msra.mxu0 %v386
    %407 = vmatprep.subr.mxu0 0.0
    %408 = vmatpush1.msra.mxu0 %v385
    %409 = vmatprep.subr.mxu0 0.0
    %410 = vmatpush1.msra.mxu0 %v384
    %411 = vmatprep.subr.mxu0 0.0
    %412 = vmatpush1.msra.mxu0 %v383
    %413 = vmatprep.subr.mxu0 0.0
    %414 = vmatpush1.msra.mxu0 %v382
    %415 = vmatprep.subr.mxu0 0.0
    %416 = vmatpush1.msra.mxu0 %v381
    %417 = vmatprep.subr.mxu0 0.0
    %418 = vmatpush1.msra.mxu0 %v380
    %419 = vmatprep.subr.mxu0 0.0
    %420 = vmatpush1.msra.mxu0 %v379
    %421 = vmatprep.subr.mxu0 0.0
    %422 = vmatpush1.msra.mxu0 %v378
    %423 = vmatprep.subr.mxu0 0.0
    %424 = vmatpush1.msra.mxu0 %v377
    %425 = vmatprep.subr.mxu0 0.0
    %426 = vmatpush2.msra.mxu0 0.0
    %427 = vmatprep.subr.mxu0 0.0
    %428 = vmatpush2.msra.mxu0 0.0
    %429 = vmatprep.subr.mxu0 0.0
    %430 = vmatpush2.msra.mxu0 0.0
    %431 = vmatprep.subr.mxu0 0.0
    %432 = vmatpush2.msra.mxu0 0.0
    %433 = vmatprep.subr.mxu0 0.0
    %434 = vmatpush2.msra.mxu0 0.0
    %435 = vmatprep.subr.mxu0 0.0
    %436 = vmatpush2.msra.mxu0 0.0
    %437 = vmatprep.subr.mxu0 0.0
    %438 = vmatpush2.msra.mxu0 0.0
    %439 = vmatprep.subr.mxu0 0.0
    %440 = vmatpush2.msra.mxu0 0.0
    %441 = vmatprep.subr.mxu0 0.0
    %442 = vmatpush2.msra.mxu0 0.0
    %443 = vmatprep.subr.mxu0 0.0
    %444 = vmatpush2.msra.mxu0 0.0
    %445 = vmatprep.subr.mxu0 0.0
    %446 = vmatpush2.msra.mxu0 0.0
    %447 = vmatprep.subr.mxu0 0.0
    %448 = vmatpush2.msra.mxu0 0.0
    %449 = vmatprep.subr.mxu0 0.0
    %450 = vmatpush2.msra.mxu0 0.0
    %451 = vmatprep.subr.mxu0 0.0
    %452 = vmatpush2.msra.mxu0 0.0
    %453 = vmatprep.subr.mxu0 0.0
    %454 = vmatpush2.msra.mxu0 0.0
    %455 = vmatprep.subr.mxu0 0.0
    %456 = vmatpush2.msra.mxu0 0.0
    %457 = vmatprep.mubr.f32.mxu0 0.0
    %458 = vmatmul.mubr.f32.gmra.mxu0 %v376
    %v459 = vpop.f32.mrf.mxu0
    %v460 = vadd.f32 %v285, %v459
    %v461 = vpop.f32.mrf.mxu0
    %462 = vdwg.mxu0
    %463 = vmatprep.subr.mxu0 0.0
    %464 = vmatpush1.msra.mxu0 %v265
    %465 = vmatprep.subr.mxu0 0.0
    %466 = vmatpush1.msra.mxu0 %v264
    %467 = vmatprep.subr.mxu0 0.0
    %468 = vmatpush1.msra.mxu0 %v263
    %469 = vmatprep.subr.mxu0 0.0
    %470 = vmatpush1.msra.mxu0 %v262
    %471 = vmatprep.subr.mxu0 0.0
    %472 = vmatpush1.msra.mxu0 %v261
    %473 = vmatprep.subr.mxu0 0.0
    %474 = vmatpush1.msra.mxu0 %v260
    %475 = vmatprep.subr.mxu0 0.0
    %476 = vmatpush1.msra.mxu0 %v259
    %477 = vmatprep.subr.mxu0 0.0
    %478 = vmatpush1.msra.mxu0 %v258
    %479 = vmatprep.subr.mxu0 0.0
    %480 = vmatpush1.msra.mxu0 %v257
    %481 = vmatprep.subr.mxu0 0.0
    %482 = vmatpush1.msra.mxu0 %v256
    %483 = vmatprep.subr.mxu0 0.0
    %484 = vmatpush1.msra.mxu0 %v255
    %485 = vmatprep.subr.mxu0 0.0
    %486 = vmatpush1.msra.mxu0 %v254
    %487 = vmatprep.subr.mxu0 0.0
    %488 = vmatpush1.msra.mxu0 %v253
    %489 = vmatprep.subr.mxu0 0.0
    %490 = vmatpush1.msra.mxu0 %v252
    %491 = vmatprep.subr.mxu0 0.0
    %492 = vmatpush1.msra.mxu0 %v251
    %493 = vmatprep.subr.mxu0 0.0
    %494 = vmatpush1.msra.mxu0 %v250
    %495 = vmatprep.subr.mxu0 0.0
    %496 = vmatpush2.msra.mxu0 0.0
    %497 = vmatprep.subr.mxu0 0.0
    %498 = vmatpush2.msra.mxu0 0.0
    %499 = vmatprep.subr.mxu0 0.0
    %500 = vmatpush2.msra.mxu0 0.0
    %501 = vmatprep.subr.mxu0 0.0
    %502 = vmatpush2.msra.mxu0 0.0
    %503 = vmatprep.subr.mxu0 0.0
    %504 = vmatpush2.msra.mxu0 0.0
    %505 = vmatprep.subr.mxu0 0.0
    %506 = vmatpush2.msra.mxu0 0.0
    %507 = vmatprep.subr.mxu0 0.0
    %508 = vmatpush2.msra.mxu0 0.0
    %509 = vmatprep.subr.mxu0 0.0
    %510 = vmatpush2.msra.mxu0 0.0
    %511 = vmatprep.subr.mxu0 0.0
    %512 = vmatpush2.msra.mxu0 0.0
    %513 = vmatprep.subr.mxu0 0.0
    %514 = vmatpush2.msra.mxu0 0.0
    %515 = vmatprep.subr.mxu0 0.0
    %516 = vmatpush2.msra.mxu0 0.0
    %517 = vmatprep.subr.mxu0 0.0
    %518 = vmatpush2.msra.mxu0 0.0
    %519 = vmatprep.subr.mxu0 0.0
    %520 = vmatpush2.msra.mxu0 0.0
    %521 = vmatprep.subr.mxu0 0.0
    %522 = vmatpush2.msra.mxu0 0.0
    %523 = vmatprep.subr.mxu0 0.0
    %524 = vmatpush2.msra.mxu0 0.0
    %525 = vmatprep.subr.mxu0 0.0
    %526 = vmatpush2.msra.mxu0 0.0
    %527 = vmatprep.mubr.f32.mxu0 0.0
    %528 = vmatmul.mubr.f32.gmra.mxu0 0.0
    %v529 = vpop.f32.mrf.mxu0
    %v530 = vadd.f32 0.0, %v529
    %v531 = vpop.f32.mrf.mxu0
    %532 = vdwg.mxu0
    %v533 = vadd.f32 %v460, %v530
    %v534 = vmul.f32 %v533, 0.5
    %v535 = vtanh.pop %v534
    %v536 = vadd.f32 %v535, 1.0
    %v537 = vmul.f32 %v536, 0.5
    %538 = vrot.lane.b32.xlu0 %v537, 64
    %v539 = vpop.permute.xlu0 %538
    %v540 = vadd.f32 %v530, %v278
    %v541 = vmul.f32 %v539, %v540
    %v542 = vadd.f32 %v460, %v541
    %v543 = vtanh.pop %v542
    %544 = vrot.lane.b32.xlu0 %v543, 64
    %v545 = vpop.permute.xlu0 %544
    %546 = vrot.lane.b32.xlu0 %v537, 96
    %v547 = vpop.permute.xlu0 %546
    %v548 = vsub.f32 0.0, %v545
    %v549 = vmul.f32 %v547, %v548
    %v550 = vadd.f32 %v545, %v549
    %v551 = vsel %vm89, %v550, 0.0
    %v552 = vld [vmem:[#allocation2 + $0x8] sm:$0xff]
    %553 = vmatprep.subr.mxu0 0.0
    %554 = vmatpush1.msra.mxu0 %v249
    %555 = vmatprep.subr.mxu0 0.0
    %556 = vmatpush1.msra.mxu0 %v248
    %557 = vmatprep.subr.mxu0 0.0
    %558 = vmatpush1.msra.mxu0 %v247
    %559 = vmatprep.subr.mxu0 0.0
    %560 = vmatpush1.msra.mxu0 %v246
    %561 = vmatprep.subr.mxu0 0.0
    %562 = vmatpush1.msra.mxu0 %v245
    %563 = vmatprep.subr.mxu0 0.0
    %564 = vmatpush1.msra.mxu0 %v244
    %565 = vmatprep.subr.mxu0 0.0
    %566 = vmatpush1.msra.mxu0 %v243
    %567 = vmatprep.subr.mxu0 0.0
    %568 = vmatpush1.msra.mxu0 %v242
    %569 = vmatprep.subr.mxu0 0.0
    %570 = vmatpush1.msra.mxu0 %v241
    %571 = vmatprep.subr.mxu0 0.0
    %572 = vmatpush1.msra.mxu0 %v240
    %573 = vmatprep.subr.mxu0 0.0
    %574 = vmatpush1.msra.mxu0 %v239
    %575 = vmatprep.subr.mxu0 0.0
    %576 = vmatpush1.msra.mxu0 %v238
    %577 = vmatprep.subr.mxu0 0.0
    %578 = vmatpush1.msra.mxu0 %v237
    %579 = vmatprep.subr.mxu0 0.0
    %580 = vmatpush1.msra.mxu0 %v236
    %581 = vmatprep.subr.mxu0 0.0
    %582 = vmatpush1.msra.mxu0 %v235
    %583 = vmatprep.subr.mxu0 0.0
    %584 = vmatpush1.msra.mxu0 %v234
    %585 = vmatprep.subr.mxu0 0.0
    %586 = vmatpush2.msra.mxu0 0.0
    %587 = vmatprep.subr.mxu0 0.0
    %588 = vmatpush2.msra.mxu0 0.0
    %589 = vmatprep.subr.mxu0 0.0
    %590 = vmatpush2.msra.mxu0 0.0
    %591 = vmatprep.subr.mxu0 0.0
    %592 = vmatpush2.msra.mxu0 0.0
    %593 = vmatprep.subr.mxu0 0.0
    %594 = vmatpush2.msra.mxu0 0.0
    %595 = vmatprep.subr.mxu0 0.0
    %596 = vmatpush2.msra.mxu0 0.0
    %597 = vmatprep.subr.mxu0 0.0
    %598 = vmatpush2.msra.mxu0 0.0
    %599 = vmatprep.subr.mxu0 0.0
    %600 = vmatpush2.msra.mxu0 0.0
    %601 = vmatprep.subr.mxu0 0.0
    %602 = vmatpush2.msra.mxu0 0.0
    %603 = vmatprep.subr.mxu0 0.0
    %604 = vmatpush2.msra.mxu0 0.0
    %605 = vmatprep.subr.mxu0 0.0
    %606 = vmatpush2.msra.mxu0 0.0
    %607 = vmatprep.subr.mxu0 0.0
    %608 = vmatpush2.msra.mxu0 0.0
    %609 = vmatprep.subr.mxu0 0.0
    %610 = vmatpush2.msra.mxu0 0.0
    %611 = vmatprep.subr.mxu0 0.0
    %612 = vmatpush2.msra.mxu0 0.0
    %613 = vmatprep.subr.mxu0 0.0
    %614 = vmatpush2.msra.mxu0 0.0
    %615 = vmatprep.subr.mxu0 0.0
    %616 = vmatpush2.msra.mxu0 0.0
    %617 = vmatprep.mubr.f32.mxu0 0.0
    %618 = vmatmul.mubr.f32.gmra.mxu0 %v376
    %v619 = vpop.f32.mrf.mxu0
    %v620 = vadd.f32 0.0, %v619
    %v621 = vpop.f32.mrf.mxu0
    %622 = vdwg.mxu0
    %v623 = vadd.f32 %v552, %v620
    %v624 = vmul.f32 %v623, 0.5
    %v625 = vtanh.pop %v624
    %v626 = vadd.f32 %v625, 1.0
    %v627 = vmul.f32 %v626, 0.5
    %628 = vrot.lane.b32.xlu0 %v627, 64
    %v629 = vpop.permute.xlu0 %628
    %v630 = vadd.f32 %v620, %v271
    %v631 = vmul.f32 %v629, %v630
    %v632 = vadd.f32 %v552, %v631
    %v633 = vtanh.pop %v632
    %634 = vrot.lane.b32.xlu0 %v633, 64
    %v635 = vpop.permute.xlu0 %634
    %636 = vrot.lane.b32.xlu0 %v627, 96
    %v637 = vpop.permute.xlu0 %636
    %v638 = vsub.f32 %v376, %v635
    %v639 = vmul.f32 %v637, %v638
    %v640 = vadd.f32 %v635, %v639
    %v641 = vsel %vm89, %v640, 0.0
    %642 = vmatprep.subr.mxu0 0.0
    %643 = vmatpush1.msra.mxu0 %v392
    %644 = vmatprep.subr.mxu0 0.0
    %645 = vmatpush1.msra.mxu0 %v391
    %646 = vmatprep.subr.mxu0 0.0
    %647 = vmatpush1.msra.mxu0 %v390
    %648 = vmatprep.subr.mxu0 0.0
    %649 = vmatpush1.msra.mxu0 %v389
    %650 = vmatprep.subr.mxu0 0.0
    %651 = vmatpush1.msra.mxu0 %v388
    %652 = vmatprep.subr.mxu0 0.0
    %653 = vmatpush1.msra.mxu0 %v387
    %654 = vmatprep.subr.mxu0 0.0
    %655 = vmatpush1.msra.mxu0 %v386
    %656 = vmatprep.subr.mxu0 0.0
    %657 = vmatpush1.msra.mxu0 %v385
    %658 = vmatprep.subr.mxu0 0.0
    %659 = vmatpush1.msra.mxu0 %v384
    %660 = vmatprep.subr.mxu0 0.0
    %661 = vmatpush1.msra.mxu0 %v383
    %662 = vmatprep.subr.mxu0 0.0
    %663 = vmatpush1.msra.mxu0 %v382
    %664 = vmatprep.subr.mxu0 0.0
    %665 = vmatpush1.msra.mxu0 %v381
    %666 = vmatprep.subr.mxu0 0.0
    %667 = vmatpush1.msra.mxu0 %v380
    %668 = vmatprep.subr.mxu0 0.0
    %669 = vmatpush1.msra.mxu0 %v379
    %670 = vmatprep.subr.mxu0 0.0
    %671 = vmatpush1.msra.mxu0 %v378
    %672 = vmatprep.subr.mxu0 0.0
    %673 = vmatpush1.msra.mxu0 %v377
    %674 = vmatprep.subr.mxu0 0.0
    %675 = vmatpush2.msra.mxu0 0.0
    %676 = vmatprep.subr.mxu0 0.0
    %677 = vmatpush2.msra.mxu0 0.0
    %678 = vmatprep.subr.mxu0 0.0
    %679 = vmatpush2.msra.mxu0 0.0
    %680 = vmatprep.subr.mxu0 0.0
    %681 = vmatpush2.msra.mxu0 0.0
    %682 = vmatprep.subr.mxu0 0.0
    %683 = vmatpush2.msra.mxu0 0.0
    %684 = vmatprep.subr.mxu0 0.0
    %685 = vmatpush2.msra.mxu0 0.0
    %686 = vmatprep.subr.mxu0 0.0
    %687 = vmatpush2.msra.mxu0 0.0
    %688 = vmatprep.subr.mxu0 0.0
    %689 = vmatpush2.msra.mxu0 0.0
    %690 = vmatprep.subr.mxu0 0.0
    %691 = vmatpush2.msra.mxu0 0.0
    %692 = vmatprep.subr.mxu0 0.0
    %693 = vmatpush2.msra.mxu0 0.0
    %694 = vmatprep.subr.mxu0 0.0
    %695 = vmatpush2.msra.mxu0 0.0
    %696 = vmatprep.subr.mxu0 0.0
    %697 = vmatpush2.msra.mxu0 0.0
    %698 = vmatprep.subr.mxu0 0.0
    %699 = vmatpush2.msra.mxu0 0.0
    %700 = vmatprep.subr.mxu0 0.0
    %701 = vmatpush2.msra.mxu0 0.0
    %702 = vmatprep.subr.mxu0 0.0
    %703 = vmatpush2.msra.mxu0 0.0
    %704 = vmatprep.subr.mxu0 0.0
    %705 = vmatpush2.msra.mxu0 0.0
    %706 = vmatprep.mubr.f32.mxu0 0.0
    %707 = vmatmul.mubr.f32.gmra.mxu0 %v641
    %v708 = vpop.f32.mrf.mxu0
    %v709 = vadd.f32 %v285, %v708
    %v710 = vpop.f32.mrf.mxu0
    %711 = vdwg.mxu0
    %712 = vmatprep.subr.mxu0 0.0
    %713 = vmatpush1.msra.mxu0 %v265
    %714 = vmatprep.subr.mxu0 0.0
    %715 = vmatpush1.msra.mxu0 %v264
    %716 = vmatprep.subr.mxu0 0.0
    %717 = vmatpush1.msra.mxu0 %v263
    %718 = vmatprep.subr.mxu0 0.0
    %719 = vmatpush1.msra.mxu0 %v262
    %720 = vmatprep.subr.mxu0 0.0
    %721 = vmatpush1.msra.mxu0 %v261
    %722 = vmatprep.subr.mxu0 0.0
    %723 = vmatpush1.msra.mxu0 %v260
    %724 = vmatprep.subr.mxu0 0.0
    %725 = vmatpush1.msra.mxu0 %v259
    %726 = vmatprep.subr.mxu0 0.0
    %727 = vmatpush1.msra.mxu0 %v258
    %728 = vmatprep.subr.mxu0 0.0
    %729 = vmatpush1.msra.mxu0 %v257
    %730 = vmatprep.subr.mxu0 0.0
    %731 = vmatpush1.msra.mxu0 %v256
    %732 = vmatprep.subr.mxu0 0.0
    %733 = vmatpush1.msra.mxu0 %v255
    %734 = vmatprep.subr.mxu0 0.0
    %735 = vmatpush1.msra.mxu0 %v254
    %736 = vmatprep.subr.mxu0 0.0
    %737 = vmatpush1.msra.mxu0 %v253
    %738 = vmatprep.subr.mxu0 0.0
    %739 = vmatpush1.msra.mxu0 %v252
    %740 = vmatprep.subr.mxu0 0.0
    %741 = vmatpush1.msra.mxu0 %v251
    %742 = vmatprep.subr.mxu0 0.0
    %743 = vmatpush1.msra.mxu0 %v250
    %744 = vmatprep.subr.mxu0 0.0
    %745 = vmatpush2.msra.mxu0 0.0
    %746 = vmatprep.subr.mxu0 0.0
    %747 = vmatpush2.msra.mxu0 0.0
    %748 = vmatprep.subr.mxu0 0.0
    %749 = vmatpush2.msra.mxu0 0.0
    %750 = vmatprep.subr.mxu0 0.0
    %751 = vmatpush2.msra.mxu0 0.0
    %752 = vmatprep.subr.mxu0 0.0
    %753 = vmatpush2.msra.mxu0 0.0
    %754 = vmatprep.subr.mxu0 0.0
    %755 = vmatpush2.msra.mxu0 0.0
    %756 = vmatprep.subr.mxu0 0.0
    %757 = vmatpush2.msra.mxu0 0.0
    %758 = vmatprep.subr.mxu0 0.0
    %759 = vmatpush2.msra.mxu0 0.0
    %760 = vmatprep.subr.mxu0 0.0
    %761 = vmatpush2.msra.mxu0 0.0
    %762 = vmatprep.subr.mxu0 0.0
    %763 = vmatpush2.msra.mxu0 0.0
    %764 = vmatprep.subr.mxu0 0.0
    %765 = vmatpush2.msra.mxu0 0.0
    %766 = vmatprep.subr.mxu0 0.0
    %767 = vmatpush2.msra.mxu0 0.0
    %768 = vmatprep.subr.mxu0 0.0
    %769 = vmatpush2.msra.mxu0 0.0
    %770 = vmatprep.subr.mxu0 0.0
    %771 = vmatpush2.msra.mxu0 0.0
    %772 = vmatprep.subr.mxu0 0.0
    %773 = vmatpush2.msra.mxu0 0.0
    %774 = vmatprep.subr.mxu0 0.0
    %775 = vmatpush2.msra.mxu0 0.0
    %776 = vmatprep.mubr.f32.mxu0 0.0
    %777 = vmatmul.mubr.f32.gmra.mxu0 %v551
    %v778 = vpop.f32.mrf.mxu0
    %v779 = vadd.f32 0.0, %v778
    %v780 = vpop.f32.mrf.mxu0
    %781 = vdwg.mxu0
    %v782 = vadd.f32 %v709, %v779
    %v783 = vmul.f32 %v782, 0.5
    %v784 = vtanh.pop %v783
    %v785 = vadd.f32 %v784, 1.0
    %v786 = vmul.f32 %v785, 0.5
    %787 = vrot.lane.b32.xlu0 %v786, 64
    %v788 = vpop.permute.xlu0 %787
    %v789 = vadd.f32 %v779, %v278
    %v790 = vmul.f32 %v788, %v789
    %v791 = vadd.f32 %v709, %v790
    %v792 = vtanh.pop %v791
    %793 = vrot.lane.b32.xlu0 %v792, 64
    %v794 = vpop.permute.xlu0 %793
    %795 = vrot.lane.b32.xlu0 %v786, 96
    %v796 = vpop.permute.xlu0 %795
    %v797 = vsub.f32 %v551, %v794
    %v798 = vmul.f32 %v796, %v797
    %v799 = vadd.f32 %v794, %v798
    %v800 = vsel %vm89, %v799, 0.0
    %v801 = vld [vmem:[#allocation2 + $0x10] sm:$0xff]
    %802 = vmatprep.subr.mxu0 0.0
    %803 = vmatpush1.msra.mxu0 %v249
    %804 = vmatprep.subr.mxu0 0.0
    %805 = vmatpush1.msra.mxu0 %v248
    %806 = vmatprep.subr.mxu0 0.0
    %807 = vmatpush1.msra.mxu0 %v247
    %808 = vmatprep.subr.mxu0 0.0
    %809 = vmatpush1.msra.mxu0 %v246
    %810 = vmatprep.subr.mxu0 0.0
    %811 = vmatpush1.msra.mxu0 %v245
    %812 = vmatprep.subr.mxu0 0.0
    %813 = vmatpush1.msra.mxu0 %v244
    %814 = vmatprep.subr.mxu0 0.0
    %815 = vmatpush1.msra.mxu0 %v243
    %816 = vmatprep.subr.mxu0 0.0
    %817 = vmatpush1.msra.mxu0 %v242
    %818 = vmatprep.subr.mxu0 0.0
    %819 = vmatpush1.msra.mxu0 %v241
    %820 = vmatprep.subr.mxu0 0.0
    %821 = vmatpush1.msra.mxu0 %v240
    %822 = vmatprep.subr.mxu0 0.0
    %823 = vmatpush1.msra.mxu0 %v239
    %824 = vmatprep.subr.mxu0 0.0
    %825 = vmatpush1.msra.mxu0 %v238
    %826 = vmatprep.subr.mxu0 0.0
    %827 = vmatpush1.msra.mxu0 %v237
    %828 = vmatprep.subr.mxu0 0.0
    %829 = vmatpush1.msra.mxu0 %v236
    %830 = vmatprep.subr.mxu0 0.0
    %831 = vmatpush1.msra.mxu0 %v235
    %832 = vmatprep.subr.mxu0 0.0
    %833 = vmatpush1.msra.mxu0 %v234
    %834 = vmatprep.subr.mxu0 0.0
    %835 = vmatpush2.msra.mxu0 0.0
    %836 = vmatprep.subr.mxu0 0.0
    %837 = vmatpush2.msra.mxu0 0.0
    %838 = vmatprep.subr.mxu0 0.0
    %839 = vmatpush2.msra.mxu0 0.0
    %840 = vmatprep.subr.mxu0 0.0
    %841 = vmatpush2.msra.mxu0 0.0
    %842 = vmatprep.subr.mxu0 0.0
    %843 = vmatpush2.msra.mxu0 0.0
    %844 = vmatprep.subr.mxu0 0.0
    %845 = vmatpush2.msra.mxu0 0.0
    %846 = vmatprep.subr.mxu0 0.0
    %847 = vmatpush2.msra.mxu0 0.0
    %848 = vmatprep.subr.mxu0 0.0
    %849 = vmatpush2.msra.mxu0 0.0
    %850 = vmatprep.subr.mxu0 0.0
    %851 = vmatpush2.msra.mxu0 0.0
    %852 = vmatprep.subr.mxu0 0.0
    %853 = vmatpush2.msra.mxu0 0.0
    %854 = vmatprep.subr.mxu0 0.0
    %855 = vmatpush2.msra.mxu0 0.0
    %856 = vmatprep.subr.mxu0 0.0
    %857 = vmatpush2.msra.mxu0 0.0
    %858 = vmatprep.subr.mxu0 0.0
    %859 = vmatpush2.msra.mxu0 0.0
    %860 = vmatprep.subr.mxu0 0.0
    %861 = vmatpush2.msra.mxu0 0.0
    %862 = vmatprep.subr.mxu0 0.0
    %863 = vmatpush2.msra.mxu0 0.0
    %864 = vmatprep.subr.mxu0 0.0
    %865 = vmatpush2.msra.mxu0 0.0
    %866 = vmatprep.mubr.f32.mxu0 0.0
    %867 = vmatmul.mubr.f32.gmra.mxu0 %v641
    %v868 = vpop.f32.mrf.mxu0
    %v869 = vadd.f32 0.0, %v868
    %v870 = vpop.f32.mrf.mxu0
    %871 = vdwg.mxu0
    %v872 = vadd.f32 %v801, %v869
    %v873 = vmul.f32 %v872, 0.5
    %v874 = vtanh.pop %v873
    %v875 = vadd.f32 %v874, 1.0
    %v876 = vmul.f32 %v875, 0.5
    %877 = vrot.lane.b32.xlu0 %v876, 64
    %v878 = vpop.permute.xlu0 %877
    %v879 = vadd.f32 %v869, %v271
    %v880 = vmul.f32 %v878, %v879
    %v881 = vadd.f32 %v801, %v880
    %v882 = vtanh.pop %v881
    %883 = vrot.lane.b32.xlu0 %v882, 64
    %v884 = vpop.permute.xlu0 %883
    %885 = vrot.lane.b32.xlu0 %v876, 96
    %v886 = vpop.permute.xlu0 %885
    %v887 = vsub.f32 %v641, %v884
    %v888 = vmul.f32 %v886, %v887
    %v889 = vadd.f32 %v884, %v888
    %v890 = vsel %vm89, %v889, 0.0
    %891 = vmatprep.subr.mxu0 0.0
    %892 = vmatpush1.msra.mxu0 %v392
    %893 = vmatprep.subr.mxu0 0.0
    %894 = vmatpush1.msra.mxu0 %v391
    %895 = vmatprep.subr.mxu0 0.0
    %896 = vmatpush1.msra.mxu0 %v390
    %897 = vmatprep.subr.mxu0 0.0
    %898 = vmatpush1.msra.mxu0 %v389
    %899 = vmatprep.subr.mxu0 0.0
    %900 = vmatpush1.msra.mxu0 %v388
    %901 = vmatprep.subr.mxu0 0.0
    %902 = vmatpush1.msra.mxu0 %v387
    %903 = vmatprep.subr.mxu0 0.0
    %904 = vmatpush1.msra.mxu0 %v386
    %905 = vmatprep.subr.mxu0 0.0
    %906 = vmatpush1.msra.mxu0 %v385
    %907 = vmatprep.subr.mxu0 0.0
    %908 = vmatpush1.msra.mxu0 %v384
    %909 = vmatprep.subr.mxu0 0.0
    %910 = vmatpush1.msra.mxu0 %v383
    %911 = vmatprep.subr.mxu0 0.0
    %912 = vmatpush1.msra.mxu0 %v382
    %913 = vmatprep.subr.mxu0 0.0
    %914 = vmatpush1.msra.mxu0 %v381
    %915 = vmatprep.subr.mxu0 0.0
    %916 = vmatpush1.msra.mxu0 %v380
    %917 = vmatprep.subr.mxu0 0.0
    %918 = vmatpush1.msra.mxu0 %v379
    %919 = vmatprep.subr.mxu0 0.0
    %920 = vmatpush1.msra.mxu0 %v378
    %921 = vmatprep.subr.mxu0 0.0
    %922 = vmatpush1.msra.mxu0 %v377
    %923 = vmatprep.subr.mxu0 0.0
    %924 = vmatpush2.msra.mxu0 0.0
    %925 = vmatprep.subr.mxu0 0.0
    %926 = vmatpush2.msra.mxu0 0.0
    %927 = vmatprep.subr.mxu0 0.0
    %928 = vmatpush2.msra.mxu0 0.0
    %929 = vmatprep.subr.mxu0 0.0
    %930 = vmatpush2.msra.mxu0 0.0
    %931 = vmatprep.subr.mxu0 0.0
    %932 = vmatpush2.msra.mxu0 0.0
    %933 = vmatprep.subr.mxu0 0.0
    %934 = vmatpush2.msra.mxu0 0.0
    %935 = vmatprep.subr.mxu0 0.0
    %936 = vmatpush2.msra.mxu0 0.0
    %937 = vmatprep.subr.mxu0 0.0
    %938 = vmatpush2.msra.mxu0 0.0
    %939 = vmatprep.subr.mxu0 0.0
    %940 = vmatpush2.msra.mxu0 0.0
    %941 = vmatprep.subr.mxu0 0.0
    %942 = vmatpush2.msra.mxu0 0.0
    %943 = vmatprep.subr.mxu0 0.0
    %944 = vmatpush2.msra.mxu0 0.0
    %945 = vmatprep.subr.mxu0 0.0
    %946 = vmatpush2.msra.mxu0 0.0
    %947 = vmatprep.subr.mxu0 0.0
    %948 = vmatpush2.msra.mxu0 0.0
    %949 = vmatprep.subr.mxu0 0.0
    %950 = vmatpush2.msra.mxu0 0.0
    %951 = vmatprep.subr.mxu0 0.0
    %952 = vmatpush2.msra.mxu0 0.0
    %953 = vmatprep.subr.mxu0 0.0
    %954 = vmatpush2.msra.mxu0 0.0
    %955 = vmatprep.mubr.f32.mxu0 0.0
    %956 = vmatmul.mubr.f32.gmra.mxu0 %v890
    %v957 = vpop.f32.mrf.mxu0
    %v958 = vadd.f32 %v285, %v957
    %v959 = vpop.f32.mrf.mxu0
    %960 = vdwg.mxu0
    %961 = vmatprep.subr.mxu0 0.0
    %962 = vmatpush1.msra.mxu0 %v265
    %963 = vmatprep.subr.mxu0 0.0
    %964 = vmatpush1.msra.mxu0 %v264
    %965 = vmatprep.subr.mxu0 0.0
    %966 = vmatpush1.msra.mxu0 %v263
    %967 = vmatprep.subr.mxu0 0.0
    %968 = vmatpush1.msra.mxu0 %v262
    %969 = vmatprep.subr.mxu0 0.0
    %970 = vmatpush1.msra.mxu0 %v261
    %971 = vmatprep.subr.mxu0 0.0
    %972 = vmatpush1.msra.mxu0 %v260
    %973 = vmatprep.subr.mxu0 0.0
    %974 = vmatpush1.msra.mxu0 %v259
    %975 = vmatprep.subr.mxu0 0.0
    %976 = vmatpush1.msra.mxu0 %v258
    %977 = vmatprep.subr.mxu0 0.0
    %978 = vmatpush1.msra.mxu0 %v257
    %979 = vmatprep.subr.mxu0 0.0
    %980 = vmatpush1.msra.mxu0 %v256
    %981 = vmatprep.subr.mxu0 0.0
    %982 = vmatpush1.msra.mxu0 %v255
    %983 = vmatprep.subr.mxu0 0.0
    %984 = vmatpush1.msra.mxu0 %v254
    %985 = vmatprep.subr.mxu0 0.0
    %986 = vmatpush1.msra.mxu0 %v253
    %987 = vmatprep.subr.mxu0 0.0
    %988 = vmatpush1.msra.mxu0 %v252
    %989 = vmatprep.subr.mxu0 0.0
    %990 = vmatpush1.msra.mxu0 %v251
    %991 = vmatprep.subr.mxu0 0.0
    %992 = vmatpush1.msra.mxu0 %v250
    %993 = vmatprep.subr.mxu0 0.0
    %994 = vmatpush2.msra.mxu0 0.0
    %995 = vmatprep.subr.mxu0 0.0
    %996 = vmatpush2.msra.mxu0 0.0
    %997 = vmatprep.subr.mxu0 0.0
    %998 = vmatpush2.msra.mxu0 0.0
    %999 = vmatprep.subr.mxu0 0.0
    %1000 = vmatpush2.msra.mxu0 0.0
    %1001 = vmatprep.subr.mxu0 0.0
    %1002 = vmatpush2.msra.mxu0 0.0
    %1003 = vmatprep.subr.mxu0 0.0
    %1004 = vmatpush2.msra.mxu0 0.0
    %1005 = vmatprep.subr.mxu0 0.0
    %1006 = vmatpush2.msra.mxu0 0.0
    %1007 = vmatprep.subr.mxu0 0.0
    %1008 = vmatpush2.msra.mxu0 0.0
    %1009 = vmatprep.subr.mxu0 0.0
    %1010 = vmatpush2.msra.mxu0 0.0
    %1011 = vmatprep.subr.mxu0 0.0
    %1012 = vmatpush2.msra.mxu0 0.0
    %1013 = vmatprep.subr.mxu0 0.0
    %1014 = vmatpush2.msra.mxu0 0.0
    %1015 = vmatprep.subr.mxu0 0.0
    %1016 = vmatpush2.msra.mxu0 0.0
    %1017 = vmatprep.subr.mxu0 0.0
    %1018 = vmatpush2.msra.mxu0 0.0
    %1019 = vmatprep.subr.mxu0 0.0
    %1020 = vmatpush2.msra.mxu0 0.0
    %1021 = vmatprep.subr.mxu0 0.0
    %1022 = vmatpush2.msra.mxu0 0.0
    %1023 = vmatprep.subr.mxu0 0.0
    %1024 = vmatpush2.msra.mxu0 0.0
    %1025 = vmatprep.mubr.f32.mxu0 0.0
    %1026 = vmatmul.mubr.f32.gmra.mxu0 %v800
    %v1027 = vpop.f32.mrf.mxu0
    %v1028 = vadd.f32 0.0, %v1027
    %v1029 = vpop.f32.mrf.mxu0
    %1030 = vdwg.mxu0
    %v1031 = vadd.f32 %v958, %v1028
    %v1032 = vmul.f32 %v1031, 0.5
    %v1033 = vtanh.pop %v1032
    %v1034 = vadd.f32 %v1033, 1.0
    %v1035 = vmul.f32 %v1034, 0.5
    %1036 = vrot.lane.b32.xlu0 %v1035, 64
    %v1037 = vpop.permute.xlu0 %1036
    %v1038 = vadd.f32 %v1028, %v278
    %v1039 = vmul.f32 %v1037, %v1038
    %v1040 = vadd.f32 %v958, %v1039
    %v1041 = vtanh.pop %v1040
    %1042 = vrot.lane.b32.xlu0 %v1041, 64
    %v1043 = vpop.permute.xlu0 %1042
    %1044 = vrot.lane.b32.xlu0 %v1035, 96
    %v1045 = vpop.permute.xlu0 %1044
    %v1046 = vsub.f32 %v800, %v1043
    %v1047 = vmul.f32 %v1045, %v1046
    %v1048 = vadd.f32 %v1043, %v1047
    %v1049 = vsel %vm89, %v1048, 0.0
    %v1050 = vld [vmem:[#allocation2 + $0x18] sm:$0xff]
    %1051 = vmatprep.subr.mxu0 0.0
    %1052 = vmatpush1.msra.mxu0 %v249
    %1053 = vmatprep.subr.mxu0 0.0
    %1054 = vmatpush1.msra.mxu0 %v248
    %1055 = vmatprep.subr.mxu0 0.0
    %1056 = vmatpush1.msra.mxu0 %v247
    %1057 = vmatprep.subr.mxu0 0.0
    %1058 = vmatpush1.msra.mxu0 %v246
    %1059 = vmatprep.subr.mxu0 0.0
    %1060 = vmatpush1.msra.mxu0 %v245
    %1061 = vmatprep.subr.mxu0 0.0
    %1062 = vmatpush1.msra.mxu0 %v244
    %1063 = vmatprep.subr.mxu0 0.0
    %1064 = vmatpush1.msra.mxu0 %v243
    %1065 = vmatprep.subr.mxu0 0.0
    %1066 = vmatpush1.msra.mxu0 %v242
    %1067 = vmatprep.subr.mxu0 0.0
    %1068 = vmatpush1.msra.mxu0 %v241
    %1069 = vmatprep.subr.mxu0 0.0
    %1070 = vmatpush1.msra.mxu0 %v240
    %1071 = vmatprep.subr.mxu0 0.0
    %1072 = vmatpush1.msra.mxu0 %v239
    %1073 = vmatprep.subr.mxu0 0.0
    %1074 = vmatpush1.msra.mxu0 %v238
    %1075 = vmatprep.subr.mxu0 0.0
    %1076 = vmatpush1.msra.mxu0 %v237
    %1077 = vmatprep.subr.mxu0 0.0
    %1078 = vmatpush1.msra.mxu0 %v236
    %1079 = vmatprep.subr.mxu0 0.0
    %1080 = vmatpush1.msra.mxu0 %v235
    %1081 = vmatprep.subr.mxu0 0.0
    %1082 = vmatpush1.msra.mxu0 %v234
    %1083 = vmatprep.subr.mxu0 0.0
    %1084 = vmatpush2.msra.mxu0 0.0
    %1085 = vmatprep.subr.mxu0 0.0
    %1086 = vmatpush2.msra.mxu0 0.0
    %1087 = vmatprep.subr.mxu0 0.0
    %1088 = vmatpush2.msra.mxu0 0.0
    %1089 = vmatprep.subr.mxu0 0.0
    %1090 = vmatpush2.msra.mxu0 0.0
    %1091 = vmatprep.subr.mxu0 0.0
    %1092 = vmatpush2.msra.mxu0 0.0
    %1093 = vmatprep.subr.mxu0 0.0
    %1094 = vmatpush2.msra.mxu0 0.0
    %1095 = vmatprep.subr.mxu0 0.0
    %1096 = vmatpush2.msra.mxu0 0.0
    %1097 = vmatprep.subr.mxu0 0.0
    %1098 = vmatpush2.msra.mxu0 0.0
    %1099 = vmatprep.subr.mxu0 0.0
    %1100 = vmatpush2.msra.mxu0 0.0
    %1101 = vmatprep.subr.mxu0 0.0
    %1102 = vmatpush2.msra.mxu0 0.0
    %1103 = vmatprep.subr.mxu0 0.0
    %1104 = vmatpush2.msra.mxu0 0.0
    %1105 = vmatprep.subr.mxu0 0.0
    %1106 = vmatpush2.msra.mxu0 0.0
    %1107 = vmatprep.subr.mxu0 0.0
    %1108 = vmatpush2.msra.mxu0 0.0
    %1109 = vmatprep.subr.mxu0 0.0
    %1110 = vmatpush2.msra.mxu0 0.0
    %1111 = vmatprep.subr.mxu0 0.0
    %1112 = vmatpush2.msra.mxu0 0.0
    %1113 = vmatprep.subr.mxu0 0.0
    %1114 = vmatpush2.msra.mxu0 0.0
    %1115 = vmatprep.mubr.f32.mxu0 0.0
    %1116 = vmatmul.mubr.f32.gmra.mxu0 %v890
    %v1117 = vpop.f32.mrf.mxu0
    %v1118 = vadd.f32 0.0, %v1117
    %v1119 = vpop.f32.mrf.mxu0
    %1120 = vdwg.mxu0
    %v1121 = vadd.f32 %v1050, %v1118
    %v1122 = vmul.f32 %v1121, 0.5
    %v1123 = vtanh.pop %v1122
    %v1124 = vadd.f32 %v1123, 1.0
    %v1125 = vmul.f32 %v1124, 0.5
    %1126 = vrot.lane.b32.xlu0 %v1125, 64
    %v1127 = vpop.permute.xlu0 %1126
    %v1128 = vadd.f32 %v1118, %v271
    %v1129 = vmul.f32 %v1127, %v1128
    %v1130 = vadd.f32 %v1050, %v1129
    %v1131 = vtanh.pop %v1130
    %1132 = vrot.lane.b32.xlu0 %v1131, 64
    %v1133 = vpop.permute.xlu0 %1132
    %1134 = vrot.lane.b32.xlu0 %v1125, 96
    %v1135 = vpop.permute.xlu0 %1134
    %v1136 = vsub.f32 %v890, %v1133
    %v1137 = vmul.f32 %v1135, %v1136
    %v1138 = vadd.f32 %v1133, %v1137
    %v1139 = vsel %vm89, %v1138, 0.0
    %1140 = vmatprep.subr.mxu0 0.0
    %1141 = vmatpush1.msra.mxu0 %v392
    %1142 = vmatprep.subr.mxu0 0.0
    %1143 = vmatpush1.msra.mxu0 %v391
    %1144 = vmatprep.subr.mxu0 0.0
    %1145 = vmatpush1.msra.mxu0 %v390
    %1146 = vmatprep.subr.mxu0 0.0
    %1147 = vmatpush1.msra.mxu0 %v389
    %1148 = vmatprep.subr.mxu0 0.0
    %1149 = vmatpush1.msra.mxu0 %v388
    %1150 = vmatprep.subr.mxu0 0.0
    %1151 = vmatpush1.msra.mxu0 %v387
    %1152 = vmatprep.subr.mxu0 0.0
    %1153 = vmatpush1.msra.mxu0 %v386
    %1154 = vmatprep.subr.mxu0 0.0
    %1155 = vmatpush1.msra.mxu0 %v385
    %1156 = vmatprep.subr.mxu0 0.0
    %1157 = vmatpush1.msra.mxu0 %v384
    %1158 = vmatprep.subr.mxu0 0.0
    %1159 = vmatpush1.msra.mxu0 %v383
    %1160 = vmatprep.subr.mxu0 0.0
    %1161 = vmatpush1.msra.mxu0 %v382
    %1162 = vmatprep.subr.mxu0 0.0
    %1163 = vmatpush1.msra.mxu0 %v381
    %1164 = vmatprep.subr.mxu0 0.0
    %1165 = vmatpush1.msra.mxu0 %v380
    %1166 = vmatprep.subr.mxu0 0.0
    %1167 = vmatpush1.msra.mxu0 %v379
    %1168 = vmatprep.subr.mxu0 0.0
    %1169 = vmatpush1.msra.mxu0 %v378
    %1170 = vmatprep.subr.mxu0 0.0
    %1171 = vmatpush1.msra.mxu0 %v377
    %1172 = vmatprep.subr.mxu0 0.0
    %1173 = vmatpush2.msra.mxu0 0.0
    %1174 = vmatprep.subr.mxu0 0.0
    %1175 = vmatpush2.msra.mxu0 0.0
    %1176 = vmatprep.subr.mxu0 0.0
    %1177 = vmatpush2.msra.mxu0 0.0
    %1178 = vmatprep.subr.mxu0 0.0
    %1179 = vmatpush2.msra.mxu0 0.0
    %1180 = vmatprep.subr.mxu0 0.0
    %1181 = vmatpush2.msra.mxu0 0.0
    %1182 = vmatprep.subr.mxu0 0.0
    %1183 = vmatpush2.msra.mxu0 0.0
    %1184 = vmatprep.subr.mxu0 0.0
    %1185 = vmatpush2.msra.mxu0 0.0
    %1186 = vmatprep.subr.mxu0 0.0
    %1187 = vmatpush2.msra.mxu0 0.0
    %1188 = vmatprep.subr.mxu0 0.0
    %1189 = vmatpush2.msra.mxu0 0.0
    %1190 = vmatprep.subr.mxu0 0.0
    %1191 = vmatpush2.msra.mxu0 0.0
    %1192 = vmatprep.subr.mxu0 0.0
    %1193 = vmatpush2.msra.mxu0 0.0
    %1194 = vmatprep.subr.mxu0 0.0
    %1195 = vmatpush2.msra.mxu0 0.0
    %1196 = vmatprep.subr.mxu0 0.0
    %1197 = vmatpush2.msra.mxu0 0.0
    %1198 = vmatprep.subr.mxu0 0.0
    %1199 = vmatpush2.msra.mxu0 0.0
    %1200 = vmatprep.subr.mxu0 0.0
    %1201 = vmatpush2.msra.mxu0 0.0
    %1202 = vmatprep.subr.mxu0 0.0
    %1203 = vmatpush2.msra.mxu0 0.0
    %1204 = vmatprep.mubr.f32.mxu0 0.0
    %1205 = vmatmul.mubr.f32.gmra.mxu0 %v1139
    %v1206 = vpop.f32.mrf.mxu0
    %v1207 = vadd.f32 %v285, %v1206
    %v1208 = vpop.f32.mrf.mxu0
    %1209 = vdwg.mxu0
    %1210 = vmatprep.subr.mxu0 0.0
    %1211 = vmatpush1.msra.mxu0 %v265
    %1212 = vmatprep.subr.mxu0 0.0
    %1213 = vmatpush1.msra.mxu0 %v264
    %1214 = vmatprep.subr.mxu0 0.0
    %1215 = vmatpush1.msra.mxu0 %v263
    %1216 = vmatprep.subr.mxu0 0.0
    %1217 = vmatpush1.msra.mxu0 %v262
    %1218 = vmatprep.subr.mxu0 0.0
    %1219 = vmatpush1.msra.mxu0 %v261
    %1220 = vmatprep.subr.mxu0 0.0
    %1221 = vmatpush1.msra.mxu0 %v260
    %1222 = vmatprep.subr.mxu0 0.0
    %1223 = vmatpush1.msra.mxu0 %v259
    %1224 = vmatprep.subr.mxu0 0.0
    %1225 = vmatpush1.msra.mxu0 %v258
    %1226 = vmatprep.subr.mxu0 0.0
    %1227 = vmatpush1.msra.mxu0 %v257
    %1228 = vmatprep.subr.mxu0 0.0
    %1229 = vmatpush1.msra.mxu0 %v256
    %1230 = vmatprep.subr.mxu0 0.0
    %1231 = vmatpush1.msra.mxu0 %v255
    %1232 = vmatprep.subr.mxu0 0.0
    %1233 = vmatpush1.msra.mxu0 %v254
    %1234 = vmatprep.subr.mxu0 0.0
    %1235 = vmatpush1.msra.mxu0 %v253
    %1236 = vmatprep.subr.mxu0 0.0
    %1237 = vmatpush1.msra.mxu0 %v252
    %1238 = vmatprep.subr.mxu0 0.0
    %1239 = vmatpush1.msra.mxu0 %v251
    %1240 = vmatprep.subr.mxu0 0.0
    %1241 = vmatpush1.msra.mxu0 %v250
    %1242 = vmatprep.subr.mxu0 0.0
    %1243 = vmatpush2.msra.mxu0 0.0
    %1244 = vmatprep.subr.mxu0 0.0
    %1245 = vmatpush2.msra.mxu0 0.0
    %1246 = vmatprep.subr.mxu0 0.0
    %1247 = vmatpush2.msra.mxu0 0.0
    %1248 = vmatprep.subr.mxu0 0.0
    %1249 = vmatpush2.msra.mxu0 0.0
    %1250 = vmatprep.subr.mxu0 0.0
    %1251 = vmatpush2.msra.mxu0 0.0
    %1252 = vmatprep.subr.mxu0 0.0
    %1253 = vmatpush2.msra.mxu0 0.0
    %1254 = vmatprep.subr.mxu0 0.0
    %1255 = vmatpush2.msra.mxu0 0.0
    %1256 = vmatprep.subr.mxu0 0.0
    %1257 = vmatpush2.msra.mxu0 0.0
    %1258 = vmatprep.subr.mxu0 0.0
    %1259 = vmatpush2.msra.mxu0 0.0
    %1260 = vmatprep.subr.mxu0 0.0
    %1261 = vmatpush2.msra.mxu0 0.0
    %1262 = vmatprep.subr.mxu0 0.0
    %1263 = vmatpush2.msra.mxu0 0.0
    %1264 = vmatprep.subr.mxu0 0.0
    %1265 = vmatpush2.msra.mxu0 0.0
    %1266 = vmatprep.subr.mxu0 0.0
    %1267 = vmatpush2.msra.mxu0 0.0
    %1268 = vmatprep.subr.mxu0 0.0
    %1269 = vmatpush2.msra.mxu0 0.0
    %1270 = vmatprep.subr.mxu0 0.0
    %1271 = vmatpush2.msra.mxu0 0.0
    %1272 = vmatprep.subr.mxu0 0.0
    %1273 = vmatpush2.msra.mxu0 0.0
    %1274 = vmatprep.mubr.f32.mxu0 0.0
    %1275 = vmatmul.mubr.f32.gmra.mxu0 %v1049
    %v1276 = vpop.f32.mrf.mxu0
    %v1277 = vadd.f32 0.0, %v1276
    %v1278 = vpop.f32.mrf.mxu0
    %1279 = vdwg.mxu0
    %v1280 = vadd.f32 %v1207, %v1277
    %v1281 = vmul.f32 %v1280, 0.5
    %v1282 = vtanh.pop %v1281
    %v1283 = vadd.f32 %v1282, 1.0
    %v1284 = vmul.f32 %v1283, 0.5
    %1285 = vrot.lane.b32.xlu0 %v1284, 64
    %v1286 = vpop.permute.xlu0 %1285
    %v1287 = vadd.f32 %v1277, %v278
    %v1288 = vmul.f32 %v1286, %v1287
    %v1289 = vadd.f32 %v1207, %v1288
    %v1290 = vtanh.pop %v1289
    %1291 = vrot.lane.b32.xlu0 %v1290, 64
    %v1292 = vpop.permute.xlu0 %1291
    %1293 = vrot.lane.b32.xlu0 %v1284, 96
    %v1294 = vpop.permute.xlu0 %1293
    %v1295 = vsub.f32 %v1049, %v1292
    %v1296 = vmul.f32 %v1294, %v1295
    %v1297 = vadd.f32 %v1292, %v1296
    %v1298 = vsel %vm89, %v1297, 0.0
    %v1299 = vld [vmem:[#allocation2 + $0x20] sm:$0xff]
    %1300 = vmatprep.subr.mxu0 0.0
    %1301 = vmatpush1.msra.mxu0 %v249
    %1302 = vmatprep.subr.mxu0 0.0
    %1303 = vmatpush1.msra.mxu0 %v248
    %1304 = vmatprep.subr.mxu0 0.0
    %1305 = vmatpush1.msra.mxu0 %v247
    %1306 = vmatprep.subr.mxu0 0.0
    %1307 = vmatpush1.msra.mxu0 %v246
    %1308 = vmatprep.subr.mxu0 0.0
    %1309 = vmatpush1.msra.mxu0 %v245
    %1310 = vmatprep.subr.mxu0 0.0
    %1311 = vmatpush1.msra.mxu0 %v244
    %1312 = vmatprep.subr.mxu0 0.0
    %1313 = vmatpush1.msra.mxu0 %v243
    %1314 = vmatprep.subr.mxu0 0.0
    %1315 = vmatpush1.msra.mxu0 %v242
    %1316 = vmatprep.subr.mxu0 0.0
    %1317 = vmatpush1.msra.mxu0 %v241
    %1318 = vmatprep.subr.mxu0 0.0
    %1319 = vmatpush1.msra.mxu0 %v240
    %1320 = vmatprep.subr.mxu0 0.0
    %1321 = vmatpush1.msra.mxu0 %v239
    %1322 = vmatprep.subr.mxu0 0.0
    %1323 = vmatpush1.msra.mxu0 %v238
    %1324 = vmatprep.subr.mxu0 0.0
    %1325 = vmatpush1.msra.mxu0 %v237
    %1326 = vmatprep.subr.mxu0 0.0
    %1327 = vmatpush1.msra.mxu0 %v236
    %1328 = vmatprep.subr.mxu0 0.0
    %1329 = vmatpush1.msra.mxu0 %v235
    %1330 = vmatprep.subr.mxu0 0.0
    %1331 = vmatpush1.msra.mxu0 %v234
    %1332 = vmatprep.subr.mxu0 0.0
    %1333 = vmatpush2.msra.mxu0 0.0
    %1334 = vmatprep.subr.mxu0 0.0
    %1335 = vmatpush2.msra.mxu0 0.0
    %1336 = vmatprep.subr.mxu0 0.0
    %1337 = vmatpush2.msra.mxu0 0.0
    %1338 = vmatprep.subr.mxu0 0.0
    %1339 = vmatpush2.msra.mxu0 0.0
    %1340 = vmatprep.subr.mxu0 0.0
    %1341 = vmatpush2.msra.mxu0 0.0
    %1342 = vmatprep.subr.mxu0 0.0
    %1343 = vmatpush2.msra.mxu0 0.0
    %1344 = vmatprep.subr.mxu0 0.0
    %1345 = vmatpush2.msra.mxu0 0.0
    %1346 = vmatprep.subr.mxu0 0.0
    %1347 = vmatpush2.msra.mxu0 0.0
    %1348 = vmatprep.subr.mxu0 0.0
    %1349 = vmatpush2.msra.mxu0 0.0
    %1350 = vmatprep.subr.mxu0 0.0
    %1351 = vmatpush2.msra.mxu0 0.0
    %1352 = vmatprep.subr.mxu0 0.0
    %1353 = vmatpush2.msra.mxu0 0.0
    %1354 = vmatprep.subr.mxu0 0.0
    %1355 = vmatpush2.msra.mxu0 0.0
    %1356 = vmatprep.subr.mxu0 0.0
    %1357 = vmatpush2.msra.mxu0 0.0
    %1358 = vmatprep.subr.mxu0 0.0
    %1359 = vmatpush2.msra.mxu0 0.0
    %1360 = vmatprep.subr.mxu0 0.0
    %1361 = vmatpush2.msra.mxu0 0.0
    %1362 = vmatprep.subr.mxu0 0.0
    %1363 = vmatpush2.msra.mxu0 0.0
    %1364 = vmatprep.mubr.f32.mxu0 0.0
    %1365 = vmatmul.mubr.f32.gmra.mxu0 %v1139
    %v1366 = vpop.f32.mrf.mxu0
    %v1367 = vadd.f32 0.0, %v1366
    %v1368 = vpop.f32.mrf.mxu0
    %1369 = vdwg.mxu0
    %v1370 = vadd.f32 %v1299, %v1367
    %v1371 = vmul.f32 %v1370, 0.5
    %v1372 = vtanh.pop %v1371
    %v1373 = vadd.f32 %v1372, 1.0
    %v1374 = vmul.f32 %v1373, 0.5
    %1375 = vrot.lane.b32.xlu0 %v1374, 64
    %v1376 = vpop.permute.xlu0 %1375
    %v1377 = vadd.f32 %v1367, %v271
    %v1378 = vmul.f32 %v1376, %v1377
    %v1379 = vadd.f32 %v1299, %v1378
    %v1380 = vtanh.pop %v1379
    %1381 = vrot.lane.b32.xlu0 %v1380, 64
    %v1382 = vpop.permute.xlu0 %1381
    %1383 = vrot.lane.b32.xlu0 %v1374, 96
    %v1384 = vpop.permute.xlu0 %1383
    %v1385 = vsub.f32 %v1139, %v1382
    %v1386 = vmul.f32 %v1384, %v1385
    %v1387 = vadd.f32 %v1382, %v1386
    %v1388 = vsel %vm89, %v1387, 0.0
    %1389 = vmatprep.subr.mxu0 0.0
    %1390 = vmatpush1.msra.mxu0 %v392
    %1391 = vmatprep.subr.mxu0 0.0
    %1392 = vmatpush1.msra.mxu0 %v391
    %1393 = vmatprep.subr.mxu0 0.0
    %1394 = vmatpush1.msra.mxu0 %v390
    %1395 = vmatprep.subr.mxu0 0.0
    %1396 = vmatpush1.msra.mxu0 %v389
    %1397 = vmatprep.subr.mxu0 0.0
    %1398 = vmatpush1.msra.mxu0 %v388
    %1399 = vmatprep.subr.mxu0 0.0
    %1400 = vmatpush1.msra.mxu0 %v387
    %1401 = vmatprep.subr.mxu0 0.0
    %1402 = vmatpush1.msra.mxu0 %v386
    %1403 = vmatprep.subr.mxu0 0.0
    %1404 = vmatpush1.msra.mxu0 %v385
    %1405 = vmatprep.subr.mxu0 0.0
    %1406 = vmatpush1.msra.mxu0 %v384
    %1407 = vmatprep.subr.mxu0 0.0
    %1408 = vmatpush1.msra.mxu0 %v383
    %1409 = vmatprep.subr.mxu0 0.0
    %1410 = vmatpush1.msra.mxu0 %v382
    %1411 = vmatprep.subr.mxu0 0.0
    %1412 = vmatpush1.msra.mxu0 %v381
    %1413 = vmatprep.subr.mxu0 0.0
    %1414 = vmatpush1.msra.mxu0 %v380
    %1415 = vmatprep.subr.mxu0 0.0
    %1416 = vmatpush1.msra.mxu0 %v379
    %1417 = vmatprep.subr.mxu0 0.0
    %1418 = vmatpush1.msra.mxu0 %v378
    %1419 = vmatprep.subr.mxu0 0.0
    %1420 = vmatpush1.msra.mxu0 %v377
    %1421 = vmatprep.subr.mxu0 0.0
    %1422 = vmatpush2.msra.mxu0 0.0
    %1423 = vmatprep.subr.mxu0 0.0
    %1424 = vmatpush2.msra.mxu0 0.0
    %1425 = vmatprep.subr.mxu0 0.0
    %1426 = vmatpush2.msra.mxu0 0.0
    %1427 = vmatprep.subr.mxu0 0.0
    %1428 = vmatpush2.msra.mxu0 0.0
    %1429 = vmatprep.subr.mxu0 0.0
    %1430 = vmatpush2.msra.mxu0 0.0
    %1431 = vmatprep.subr.mxu0 0.0
    %1432 = vmatpush2.msra.mxu0 0.0
    %1433 = vmatprep.subr.mxu0 0.0
    %1434 = vmatpush2.msra.mxu0 0.0
    %1435 = vmatprep.subr.mxu0 0.0
    %1436 = vmatpush2.msra.mxu0 0.0
    %1437 = vmatprep.subr.mxu0 0.0
    %1438 = vmatpush2.msra.mxu0 0.0
    %1439 = vmatprep.subr.mxu0 0.0
    %1440 = vmatpush2.msra.mxu0 0.0
    %1441 = vmatprep.subr.mxu0 0.0
    %1442 = vmatpush2.msra.mxu0 0.0
    %1443 = vmatprep.subr.mxu0 0.0
    %1444 = vmatpush2.msra.mxu0 0.0
    %1445 = vmatprep.subr.mxu0 0.0
    %1446 = vmatpush2.msra.mxu0 0.0
    %1447 = vmatprep.subr.mxu0 0.0
    %1448 = vmatpush2.msra.mxu0 0.0
    %1449 = vmatprep.subr.mxu0 0.0
    %1450 = vmatpush2.msra.mxu0 0.0
    %1451 = vmatprep.subr.mxu0 0.0
    %1452 = vmatpush2.msra.mxu0 0.0
    %1453 = vmatprep.mubr.f32.mxu0 0.0
    %1454 = vmatmul.mubr.f32.gmra.mxu0 %v1388
    %v1455 = vpop.f32.mrf.mxu0
    %v1456 = vadd.f32 %v285, %v1455
    %v1457 = vpop.f32.mrf.mxu0
    %1458 = vdwg.mxu0
    %1459 = vmatprep.subr.mxu0 0.0
    %1460 = vmatpush1.msra.mxu0 %v265
    %1461 = vmatprep.subr.mxu0 0.0
    %1462 = vmatpush1.msra.mxu0 %v264
    %1463 = vmatprep.subr.mxu0 0.0
    %1464 = vmatpush1.msra.mxu0 %v263
    %1465 = vmatprep.subr.mxu0 0.0
    %1466 = vmatpush1.msra.mxu0 %v262
    %1467 = vmatprep.subr.mxu0 0.0
    %1468 = vmatpush1.msra.mxu0 %v261
    %1469 = vmatprep.subr.mxu0 0.0
    %1470 = vmatpush1.msra.mxu0 %v260
    %1471 = vmatprep.subr.mxu0 0.0
    %1472 = vmatpush1.msra.mxu0 %v259
    %1473 = vmatprep.subr.mxu0 0.0
    %1474 = vmatpush1.msra.mxu0 %v258
    %1475 = vmatprep.subr.mxu0 0.0
    %1476 = vmatpush1.msra.mxu0 %v257
    %1477 = vmatprep.subr.mxu0 0.0
    %1478 = vmatpush1.msra.mxu0 %v256
    %1479 = vmatprep.subr.mxu0 0.0
    %1480 = vmatpush1.msra.mxu0 %v255
    %1481 = vmatprep.subr.mxu0 0.0
    %1482 = vmatpush1.msra.mxu0 %v254
    %1483 = vmatprep.subr.mxu0 0.0
    %1484 = vmatpush1.msra.mxu0 %v253
    %1485 = vmatprep.subr.mxu0 0.0
    %1486 = vmatpush1.msra.mxu0 %v252
    %1487 = vmatprep.subr.mxu0 0.0
    %1488 = vmatpush1.msra.mxu0 %v251
    %1489 = vmatprep.subr.mxu0 0.0
    %1490 = vmatpush1.msra.mxu0 %v250
    %1491 = vmatprep.subr.mxu0 0.0
    %1492 = vmatpush2.msra.mxu0 0.0
    %1493 = vmatprep.subr.mxu0 0.0
    %1494 = vmatpush2.msra.mxu0 0.0
    %1495 = vmatprep.subr.mxu0 0.0
    %1496 = vmatpush2.msra.mxu0 0.0
    %1497 = vmatprep.subr.mxu0 0.0
    %1498 = vmatpush2.msra.mxu0 0.0
    %1499 = vmatprep.subr.mxu0 0.0
    %1500 = vmatpush2.msra.mxu0 0.0
    %1501 = vmatprep.subr.mxu0 0.0
    %1502 = vmatpush2.msra.mxu0 0.0
    %1503 = vmatprep.subr.mxu0 0.0
    %1504 = vmatpush2.msra.mxu0 0.0
    %1505 = vmatprep.subr.mxu0 0.0
    %1506 = vmatpush2.msra.mxu0 0.0
    %1507 = vmatprep.subr.mxu0 0.0
    %1508 = vmatpush2.msra.mxu0 0.0
    %1509 = vmatprep.subr.mxu0 0.0
    %1510 = vmatpush2.msra.mxu0 0.0
    %1511 = vmatprep.subr.mxu0 0.0
    %1512 = vmatpush2.msra.mxu0 0.0
    %1513 = vmatprep.subr.mxu0 0.0
    %1514 = vmatpush2.msra.mxu0 0.0
    %1515 = vmatprep.subr.mxu0 0.0
    %1516 = vmatpush2.msra.mxu0 0.0
    %1517 = vmatprep.subr.mxu0 0.0
    %1518 = vmatpush2.msra.mxu0 0.0
    %1519 = vmatprep.subr.mxu0 0.0
    %1520 = vmatpush2.msra.mxu0 0.0
    %1521 = vmatprep.subr.mxu0 0.0
    %1522 = vmatpush2.msra.mxu0 0.0
    %1523 = vmatprep.mubr.f32.mxu0 0.0
    %1524 = vmatmul.mubr.f32.gmra.mxu0 %v1298
    %v1525 = vpop.f32.mrf.mxu0
    %v1526 = vadd.f32 0.0, %v1525
    %v1527 = vpop.f32.mrf.mxu0
    %1528 = vdwg.mxu0
    %v1529 = vadd.f32 %v1456, %v1526
    %v1530 = vmul.f32 %v1529, 0.5
    %v1531 = vtanh.pop %v1530
    %v1532 = vadd.f32 %v1531, 1.0
    %v1533 = vmul.f32 %v1532, 0.5
    %1534 = vrot.lane.b32.xlu0 %v1533, 64
    %v1535 = vpop.permute.xlu0 %1534
    %v1536 = vadd.f32 %v1526, %v278
    %v1537 = vmul.f32 %v1535, %v1536
    %v1538 = vadd.f32 %v1456, %v1537
    %v1539 = vtanh.pop %v1538
    %1540 = vrot.lane.b32.xlu0 %v1539, 64
    %v1541 = vpop.permute.xlu0 %1540
    %1542 = vrot.lane.b32.xlu0 %v1533, 96
    %v1543 = vpop.permute.xlu0 %1542
    %v1544 = vsub.f32 %v1298, %v1541
    %v1545 = vmul.f32 %v1543, %v1544
    %v1546 = vadd.f32 %v1541, %v1545
    %v1547 = vsel %vm89, %v1546, 0.0
    %v1548 = vld [vmem:[#allocation2 + $0x28] sm:$0xff]
    %1549 = vmatprep.subr.mxu0 0.0
    %1550 = vmatpush1.msra.mxu0 %v249
    %1551 = vmatprep.subr.mxu0 0.0
    %1552 = vmatpush1.msra.mxu0 %v248
    %1553 = vmatprep.subr.mxu0 0.0
    %1554 = vmatpush1.msra.mxu0 %v247
    %1555 = vmatprep.subr.mxu0 0.0
    %1556 = vmatpush1.msra.mxu0 %v246
    %1557 = vmatprep.subr.mxu0 0.0
    %1558 = vmatpush1.msra.mxu0 %v245
    %1559 = vmatprep.subr.mxu0 0.0
    %1560 = vmatpush1.msra.mxu0 %v244
    %1561 = vmatprep.subr.mxu0 0.0
    %1562 = vmatpush1.msra.mxu0 %v243
    %1563 = vmatprep.subr.mxu0 0.0
    %1564 = vmatpush1.msra.mxu0 %v242
    %1565 = vmatprep.subr.mxu0 0.0
    %1566 = vmatpush1.msra.mxu0 %v241
    %1567 = vmatprep.subr.mxu0 0.0
    %1568 = vmatpush1.msra.mxu0 %v240
    %1569 = vmatprep.subr.mxu0 0.0
    %1570 = vmatpush1.msra.mxu0 %v239
    %1571 = vmatprep.subr.mxu0 0.0
    %1572 = vmatpush1.msra.mxu0 %v238
    %1573 = vmatprep.subr.mxu0 0.0
    %1574 = vmatpush1.msra.mxu0 %v237
    %1575 = vmatprep.subr.mxu0 0.0
    %1576 = vmatpush1.msra.mxu0 %v236
    %1577 = vmatprep.subr.mxu0 0.0
    %1578 = vmatpush1.msra.mxu0 %v235
    %1579 = vmatprep.subr.mxu0 0.0
    %1580 = vmatpush1.msra.mxu0 %v234
    %1581 = vmatprep.subr.mxu0 0.0
    %1582 = vmatpush2.msra.mxu0 0.0
    %1583 = vmatprep.subr.mxu0 0.0
    %1584 = vmatpush2.msra.mxu0 0.0
    %1585 = vmatprep.subr.mxu0 0.0
    %1586 = vmatpush2.msra.mxu0 0.0
    %1587 = vmatprep.subr.mxu0 0.0
    %1588 = vmatpush2.msra.mxu0 0.0
    %1589 = vmatprep.subr.mxu0 0.0
    %1590 = vmatpush2.msra.mxu0 0.0
    %1591 = vmatprep.subr.mxu0 0.0
    %1592 = vmatpush2.msra.mxu0 0.0
    %1593 = vmatprep.subr.mxu0 0.0
    %1594 = vmatpush2.msra.mxu0 0.0
    %1595 = vmatprep.subr.mxu0 0.0
    %1596 = vmatpush2.msra.mxu0 0.0
    %1597 = vmatprep.subr.mxu0 0.0
    %1598 = vmatpush2.msra.mxu0 0.0
    %1599 = vmatprep.subr.mxu0 0.0
    %1600 = vmatpush2.msra.mxu0 0.0
    %1601 = vmatprep.subr.mxu0 0.0
    %1602 = vmatpush2.msra.mxu0 0.0
    %1603 = vmatprep.subr.mxu0 0.0
    %1604 = vmatpush2.msra.mxu0 0.0
    %1605 = vmatprep.subr.mxu0 0.0
    %1606 = vmatpush2.msra.mxu0 0.0
    %1607 = vmatprep.subr.mxu0 0.0
    %1608 = vmatpush2.msra.mxu0 0.0
    %1609 = vmatprep.subr.mxu0 0.0
    %1610 = vmatpush2.msra.mxu0 0.0
    %1611 = vmatprep.subr.mxu0 0.0
    %1612 = vmatpush2.msra.mxu0 0.0
    %1613 = vmatprep.mubr.f32.mxu0 0.0
    %1614 = vmatmul.mubr.f32.gmra.mxu0 %v1388
    %v1615 = vpop.f32.mrf.mxu0
    %v1616 = vadd.f32 0.0, %v1615
    %v1617 = vpop.f32.mrf.mxu0
    %1618 = vdwg.mxu0
    %v1619 = vadd.f32 %v1548, %v1616
    %v1620 = vmul.f32 %v1619, 0.5
    %v1621 = vtanh.pop %v1620
    %v1622 = vadd.f32 %v1621, 1.0
    %v1623 = vmul.f32 %v1622, 0.5
    %1624 = vrot.lane.b32.xlu0 %v1623, 64
    %v1625 = vpop.permute.xlu0 %1624
    %v1626 = vadd.f32 %v1616, %v271
    %v1627 = vmul.f32 %v1625, %v1626
    %v1628 = vadd.f32 %v1548, %v1627
    %v1629 = vtanh.pop %v1628
    %1630 = vrot.lane.b32.xlu0 %v1629, 64
    %v1631 = vpop.permute.xlu0 %1630
    %1632 = vrot.lane.b32.xlu0 %v1623, 96
    %v1633 = vpop.permute.xlu0 %1632
    %v1634 = vsub.f32 %v1388, %v1631
    %v1635 = vmul.f32 %v1633, %v1634
    %v1636 = vadd.f32 %v1631, %v1635
    %v1637 = vsel %vm89, %v1636, 0.0
    %1638 = vmatprep.subr.mxu0 0.0
    %1639 = vmatpush1.msra.mxu0 %v392
    %1640 = vmatprep.subr.mxu0 0.0
    %1641 = vmatpush1.msra.mxu0 %v391
    %1642 = vmatprep.subr.mxu0 0.0
    %1643 = vmatpush1.msra.mxu0 %v390
    %1644 = vmatprep.subr.mxu0 0.0
    %1645 = vmatpush1.msra.mxu0 %v389
    %1646 = vmatprep.subr.mxu0 0.0
    %1647 = vmatpush1.msra.mxu0 %v388
    %1648 = vmatprep.subr.mxu0 0.0
    %1649 = vmatpush1.msra.mxu0 %v387
    %1650 = vmatprep.subr.mxu0 0.0
    %1651 = vmatpush1.msra.mxu0 %v386
    %1652 = vmatprep.subr.mxu0 0.0
    %1653 = vmatpush1.msra.mxu0 %v385
    %1654 = vmatprep.subr.mxu0 0.0
    %1655 = vmatpush1.msra.mxu0 %v384
    %1656 = vmatprep.subr.mxu0 0.0
    %1657 = vmatpush1.msra.mxu0 %v383
    %1658 = vmatprep.subr.mxu0 0.0
    %1659 = vmatpush1.msra.mxu0 %v382
    %1660 = vmatprep.subr.mxu0 0.0
    %1661 = vmatpush1.msra.mxu0 %v381
    %1662 = vmatprep.subr.mxu0 0.0
    %1663 = vmatpush1.msra.mxu0 %v380
    %1664 = vmatprep.subr.mxu0 0.0
    %1665 = vmatpush1.msra.mxu0 %v379
    %1666 = vmatprep.subr.mxu0 0.0
    %1667 = vmatpush1.msra.mxu0 %v378
    %1668 = vmatprep.subr.mxu0 0.0
    %1669 = vmatpush1.msra.mxu0 %v377
    %1670 = vmatprep.subr.mxu0 0.0
    %1671 = vmatpush2.msra.mxu0 0.0
    %1672 = vmatprep.subr.mxu0 0.0
    %1673 = vmatpush2.msra.mxu0 0.0
    %1674 = vmatprep.subr.mxu0 0.0
    %1675 = vmatpush2.msra.mxu0 0.0
    %1676 = vmatprep.subr.mxu0 0.0
    %1677 = vmatpush2.msra.mxu0 0.0
    %1678 = vmatprep.subr.mxu0 0.0
    %1679 = vmatpush2.msra.mxu0 0.0
    %1680 = vmatprep.subr.mxu0 0.0
    %1681 = vmatpush2.msra.mxu0 0.0
    %1682 = vmatprep.subr.mxu0 0.0
    %1683 = vmatpush2.msra.mxu0 0.0
    %1684 = vmatprep.subr.mxu0 0.0
    %1685 = vmatpush2.msra.mxu0 0.0
    %1686 = vmatprep.subr.mxu0 0.0
    %1687 = vmatpush2.msra.mxu0 0.0
    %1688 = vmatprep.subr.mxu0 0.0
    %1689 = vmatpush2.msra.mxu0 0.0
    %1690 = vmatprep.subr.mxu0 0.0
    %1691 = vmatpush2.msra.mxu0 0.0
    %1692 = vmatprep.subr.mxu0 0.0
    %1693 = vmatpush2.msra.mxu0 0.0
    %1694 = vmatprep.subr.mxu0 0.0
    %1695 = vmatpush2.msra.mxu0 0.0
    %1696 = vmatprep.subr.mxu0 0.0
    %1697 = vmatpush2.msra.mxu0 0.0
    %1698 = vmatprep.subr.mxu0 0.0
    %1699 = vmatpush2.msra.mxu0 0.0
    %1700 = vmatprep.subr.mxu0 0.0
    %1701 = vmatpush2.msra.mxu0 0.0
    %1702 = vmatprep.mubr.f32.mxu0 0.0
    %1703 = vmatmul.mubr.f32.gmra.mxu0 %v1637
    %v1704 = vpop.f32.mrf.mxu0
    %v1705 = vadd.f32 %v285, %v1704
    %v1706 = vpop.f32.mrf.mxu0
    %1707 = vdwg.mxu0
    %1708 = vmatprep.subr.mxu0 0.0
    %1709 = vmatpush1.msra.mxu0 %v265
    %1710 = vmatprep.subr.mxu0 0.0
    %1711 = vmatpush1.msra.mxu0 %v264
    %1712 = vmatprep.subr.mxu0 0.0
    %1713 = vmatpush1.msra.mxu0 %v263
    %1714 = vmatprep.subr.mxu0 0.0
    %1715 = vmatpush1.msra.mxu0 %v262
    %1716 = vmatprep.subr.mxu0 0.0
    %1717 = vmatpush1.msra.mxu0 %v261
    %1718 = vmatprep.subr.mxu0 0.0
    %1719 = vmatpush1.msra.mxu0 %v260
    %1720 = vmatprep.subr.mxu0 0.0
    %1721 = vmatpush1.msra.mxu0 %v259
    %1722 = vmatprep.subr.mxu0 0.0
    %1723 = vmatpush1.msra.mxu0 %v258
    %1724 = vmatprep.subr.mxu0 0.0
    %1725 = vmatpush1.msra.mxu0 %v257
    %1726 = vmatprep.subr.mxu0 0.0
    %1727 = vmatpush1.msra.mxu0 %v256
    %1728 = vmatprep.subr.mxu0 0.0
    %1729 = vmatpush1.msra.mxu0 %v255
    %1730 = vmatprep.subr.mxu0 0.0
    %1731 = vmatpush1.msra.mxu0 %v254
    %1732 = vmatprep.subr.mxu0 0.0
    %1733 = vmatpush1.msra.mxu0 %v253
    %1734 = vmatprep.subr.mxu0 0.0
    %1735 = vmatpush1.msra.mxu0 %v252
    %1736 = vmatprep.subr.mxu0 0.0
    %1737 = vmatpush1.msra.mxu0 %v251
    %1738 = vmatprep.subr.mxu0 0.0
    %1739 = vmatpush1.msra.mxu0 %v250
    %1740 = vmatprep.subr.mxu0 0.0
    %1741 = vmatpush2.msra.mxu0 0.0
    %1742 = vmatprep.subr.mxu0 0.0
    %1743 = vmatpush2.msra.mxu0 0.0
    %1744 = vmatprep.subr.mxu0 0.0
    %1745 = vmatpush2.msra.mxu0 0.0
    %1746 = vmatprep.subr.mxu0 0.0
    %1747 = vmatpush2.msra.mxu0 0.0
    %1748 = vmatprep.subr.mxu0 0.0
    %1749 = vmatpush2.msra.mxu0 0.0
    %1750 = vmatprep.subr.mxu0 0.0
    %1751 = vmatpush2.msra.mxu0 0.0
    %1752 = vmatprep.subr.mxu0 0.0
    %1753 = vmatpush2.msra.mxu0 0.0
    %1754 = vmatprep.subr.mxu0 0.0
    %1755 = vmatpush2.msra.mxu0 0.0
    %1756 = vmatprep.subr.mxu0 0.0
    %1757 = vmatpush2.msra.mxu0 0.0
    %1758 = vmatprep.subr.mxu0 0.0
    %1759 = vmatpush2.msra.mxu0 0.0
    %1760 = vmatprep.subr.mxu0 0.0
    %1761 = vmatpush2.msra.mxu0 0.0
    %1762 = vmatprep.subr.mxu0 0.0
    %1763 = vmatpush2.msra.mxu0 0.0
    %1764 = vmatprep.subr.mxu0 0.0
    %1765 = vmatpush2.msra.mxu0 0.0
    %1766 = vmatprep.subr.mxu0 0.0
    %1767 = vmatpush2.msra.mxu0 0.0
    %1768 = vmatprep.subr.mxu0 0.0
    %1769 = vmatpush2.msra.mxu0 0.0
    %1770 = vmatprep.subr.mxu0 0.0
    %1771 = vmatpush2.msra.mxu0 0.0
    %1772 = vmatprep.mubr.f32.mxu0 0.0
    %1773 = vmatmul.mubr.f32.gmra.mxu0 %v1547
    %v1774 = vpop.f32.mrf.mxu0
    %v1775 = vadd.f32 0.0, %v1774
    %v1776 = vpop.f32.mrf.mxu0
    %1777 = vdwg.mxu0
    %v1778 = vadd.f32 %v1705, %v1775
    %v1779 = vmul.f32 %v1778, 0.5
    %v1780 = vtanh.pop %v1779
    %v1781 = vadd.f32 %v1780, 1.0
    %v1782 = vmul.f32 %v1781, 0.5
    %1783 = vrot.lane.b32.xlu0 %v1782, 64
    %v1784 = vpop.permute.xlu0 %1783
    %v1785 = vadd.f32 %v1775, %v278
    %v1786 = vmul.f32 %v1784, %v1785
    %v1787 = vadd.f32 %v1705, %v1786
    %v1788 = vtanh.pop %v1787
    %1789 = vrot.lane.b32.xlu0 %v1788, 64
    %v1790 = vpop.permute.xlu0 %1789
    %1791 = vrot.lane.b32.xlu0 %v1782, 96
    %v1792 = vpop.permute.xlu0 %1791
    %v1793 = vsub.f32 %v1547, %v1790
    %v1794 = vmul.f32 %v1792, %v1793
    %v1795 = vadd.f32 %v1790, %v1794
    %v1796 = vsel %vm89, %v1795, 0.0
    %v1797 = vld [vmem:[#allocation2 + $0x30] sm:$0xff]
    %1798 = vmatprep.subr.mxu0 0.0
    %1799 = vmatpush1.msra.mxu0 %v249
    %1800 = vmatprep.subr.mxu0 0.0
    %1801 = vmatpush1.msra.mxu0 %v248
    %1802 = vmatprep.subr.mxu0 0.0
    %1803 = vmatpush1.msra.mxu0 %v247
    %1804 = vmatprep.subr.mxu0 0.0
    %1805 = vmatpush1.msra.mxu0 %v246
    %1806 = vmatprep.subr.mxu0 0.0
    %1807 = vmatpush1.msra.mxu0 %v245
    %1808 = vmatprep.subr.mxu0 0.0
    %1809 = vmatpush1.msra.mxu0 %v244
    %1810 = vmatprep.subr.mxu0 0.0
    %1811 = vmatpush1.msra.mxu0 %v243
    %1812 = vmatprep.subr.mxu0 0.0
    %1813 = vmatpush1.msra.mxu0 %v242
    %1814 = vmatprep.subr.mxu0 0.0
    %1815 = vmatpush1.msra.mxu0 %v241
    %1816 = vmatprep.subr.mxu0 0.0
    %1817 = vmatpush1.msra.mxu0 %v240
    %1818 = vmatprep.subr.mxu0 0.0
    %1819 = vmatpush1.msra.mxu0 %v239
    %1820 = vmatprep.subr.mxu0 0.0
    %1821 = vmatpush1.msra.mxu0 %v238
    %1822 = vmatprep.subr.mxu0 0.0
    %1823 = vmatpush1.msra.mxu0 %v237
    %1824 = vmatprep.subr.mxu0 0.0
    %1825 = vmatpush1.msra.mxu0 %v236
    %1826 = vmatprep.subr.mxu0 0.0
    %1827 = vmatpush1.msra.mxu0 %v235
    %1828 = vmatprep.subr.mxu0 0.0
    %1829 = vmatpush1.msra.mxu0 %v234
    %1830 = vmatprep.subr.mxu0 0.0
    %1831 = vmatpush2.msra.mxu0 0.0
    %1832 = vmatprep.subr.mxu0 0.0
    %1833 = vmatpush2.msra.mxu0 0.0
    %1834 = vmatprep.subr.mxu0 0.0
    %1835 = vmatpush2.msra.mxu0 0.0
    %1836 = vmatprep.subr.mxu0 0.0
    %1837 = vmatpush2.msra.mxu0 0.0
    %1838 = vmatprep.subr.mxu0 0.0
    %1839 = vmatpush2.msra.mxu0 0.0
    %1840 = vmatprep.subr.mxu0 0.0
    %1841 = vmatpush2.msra.mxu0 0.0
    %1842 = vmatprep.subr.mxu0 0.0
    %1843 = vmatpush2.msra.mxu0 0.0
    %1844 = vmatprep.subr.mxu0 0.0
    %1845 = vmatpush2.msra.mxu0 0.0
    %1846 = vmatprep.subr.mxu0 0.0
    %1847 = vmatpush2.msra.mxu0 0.0
    %1848 = vmatprep.subr.mxu0 0.0
    %1849 = vmatpush2.msra.mxu0 0.0
    %1850 = vmatprep.subr.mxu0 0.0
    %1851 = vmatpush2.msra.mxu0 0.0
    %1852 = vmatprep.subr.mxu0 0.0
    %1853 = vmatpush2.msra.mxu0 0.0
    %1854 = vmatprep.subr.mxu0 0.0
    %1855 = vmatpush2.msra.mxu0 0.0
    %1856 = vmatprep.subr.mxu0 0.0
    %1857 = vmatpush2.msra.mxu0 0.0
    %1858 = vmatprep.subr.mxu0 0.0
    %1859 = vmatpush2.msra.mxu0 0.0
    %1860 = vmatprep.subr.mxu0 0.0
    %1861 = vmatpush2.msra.mxu0 0.0
    %1862 = vmatprep.mubr.f32.mxu0 0.0
    %1863 = vmatmul.mubr.f32.gmra.mxu0 %v1637
    %v1864 = vpop.f32.mrf.mxu0
    %v1865 = vadd.f32 0.0, %v1864
    %v1866 = vpop.f32.mrf.mxu0
    %1867 = vdwg.mxu0
    %v1868 = vadd.f32 %v1797, %v1865
    %v1869 = vmul.f32 %v1868, 0.5
    %v1870 = vtanh.pop %v1869
    %v1871 = vadd.f32 %v1870, 1.0
    %v1872 = vmul.f32 %v1871, 0.5
    %1873 = vrot.lane.b32.xlu0 %v1872, 64
    %v1874 = vpop.permute.xlu0 %1873
    %v1875 = vadd.f32 %v1865, %v271
    %v1876 = vmul.f32 %v1874, %v1875
    %v1877 = vadd.f32 %v1797, %v1876
    %v1878 = vtanh.pop %v1877
    %1879 = vrot.lane.b32.xlu0 %v1878, 64
    %v1880 = vpop.permute.xlu0 %1879
    %1881 = vrot.lane.b32.xlu0 %v1872, 96
    %v1882 = vpop.permute.xlu0 %1881
    %v1883 = vsub.f32 %v1637, %v1880
    %v1884 = vmul.f32 %v1882, %v1883
    %v1885 = vadd.f32 %v1880, %v1884
    %v1886 = vsel %vm89, %v1885, 0.0
    %1887 = vmatprep.subr.mxu0 0.0
    %1888 = vmatpush1.msra.mxu0 %v392
    %1889 = vmatprep.subr.mxu0 0.0
    %1890 = vmatpush1.msra.mxu0 %v391
    %1891 = vmatprep.subr.mxu0 0.0
    %1892 = vmatpush1.msra.mxu0 %v390
    %1893 = vmatprep.subr.mxu0 0.0
    %1894 = vmatpush1.msra.mxu0 %v389
    %1895 = vmatprep.subr.mxu0 0.0
    %1896 = vmatpush1.msra.mxu0 %v388
    %1897 = vmatprep.subr.mxu0 0.0
    %1898 = vmatpush1.msra.mxu0 %v387
    %1899 = vmatprep.subr.mxu0 0.0
    %1900 = vmatpush1.msra.mxu0 %v386
    %1901 = vmatprep.subr.mxu0 0.0
    %1902 = vmatpush1.msra.mxu0 %v385
    %1903 = vmatprep.subr.mxu0 0.0
    %1904 = vmatpush1.msra.mxu0 %v384
    %1905 = vmatprep.subr.mxu0 0.0
    %1906 = vmatpush1.msra.mxu0 %v383
    %1907 = vmatprep.subr.mxu0 0.0
    %1908 = vmatpush1.msra.mxu0 %v382
    %1909 = vmatprep.subr.mxu0 0.0
    %1910 = vmatpush1.msra.mxu0 %v381
    %1911 = vmatprep.subr.mxu0 0.0
    %1912 = vmatpush1.msra.mxu0 %v380
    %1913 = vmatprep.subr.mxu0 0.0
    %1914 = vmatpush1.msra.mxu0 %v379
    %1915 = vmatprep.subr.mxu0 0.0
    %1916 = vmatpush1.msra.mxu0 %v378
    %1917 = vmatprep.subr.mxu0 0.0
    %1918 = vmatpush1.msra.mxu0 %v377
    %1919 = vmatprep.subr.mxu0 0.0
    %1920 = vmatpush2.msra.mxu0 0.0
    %1921 = vmatprep.subr.mxu0 0.0
    %1922 = vmatpush2.msra.mxu0 0.0
    %1923 = vmatprep.subr.mxu0 0.0
    %1924 = vmatpush2.msra.mxu0 0.0
    %1925 = vmatprep.subr.mxu0 0.0
    %1926 = vmatpush2.msra.mxu0 0.0
    %1927 = vmatprep.subr.mxu0 0.0
    %1928 = vmatpush2.msra.mxu0 0.0
    %1929 = vmatprep.subr.mxu0 0.0
    %1930 = vmatpush2.msra.mxu0 0.0
    %1931 = vmatprep.subr.mxu0 0.0
    %1932 = vmatpush2.msra.mxu0 0.0
    %1933 = vmatprep.subr.mxu0 0.0
    %1934 = vmatpush2.msra.mxu0 0.0
    %1935 = vmatprep.subr.mxu0 0.0
    %1936 = vmatpush2.msra.mxu0 0.0
    %1937 = vmatprep.subr.mxu0 0.0
    %1938 = vmatpush2.msra.mxu0 0.0
    %1939 = vmatprep.subr.mxu0 0.0
    %1940 = vmatpush2.msra.mxu0 0.0
    %1941 = vmatprep.subr.mxu0 0.0
    %1942 = vmatpush2.msra.mxu0 0.0
    %1943 = vmatprep.subr.mxu0 0.0
    %1944 = vmatpush2.msra.mxu0 0.0
    %1945 = vmatprep.subr.mxu0 0.0
    %1946 = vmatpush2.msra.mxu0 0.0
    %1947 = vmatprep.subr.mxu0 0.0
    %1948 = vmatpush2.msra.mxu0 0.0
    %1949 = vmatprep.subr.mxu0 0.0
    %1950 = vmatpush2.msra.mxu0 0.0
    %1951 = vmatprep.mubr.f32.mxu0 0.0
    %1952 = vmatmul.mubr.f32.gmra.mxu0 %v1886
    %v1953 = vpop.f32.mrf.mxu0
    %v1954 = vadd.f32 %v285, %v1953
    %v1955 = vpop.f32.mrf.mxu0
    %1956 = vdwg.mxu0
    %1957 = vmatprep.subr.mxu0 0.0
    %1958 = vmatpush1.msra.mxu0 %v265
    %1959 = vmatprep.subr.mxu0 0.0
    %1960 = vmatpush1.msra.mxu0 %v264
    %1961 = vmatprep.subr.mxu0 0.0
    %1962 = vmatpush1.msra.mxu0 %v263
    %1963 = vmatprep.subr.mxu0 0.0
    %1964 = vmatpush1.msra.mxu0 %v262
    %1965 = vmatprep.subr.mxu0 0.0
    %1966 = vmatpush1.msra.mxu0 %v261
    %1967 = vmatprep.subr.mxu0 0.0
    %1968 = vmatpush1.msra.mxu0 %v260
    %1969 = vmatprep.subr.mxu0 0.0
    %1970 = vmatpush1.msra.mxu0 %v259
    %1971 = vmatprep.subr.mxu0 0.0
    %1972 = vmatpush1.msra.mxu0 %v258
    %1973 = vmatprep.subr.mxu0 0.0
    %1974 = vmatpush1.msra.mxu0 %v257
    %1975 = vmatprep.subr.mxu0 0.0
    %1976 = vmatpush1.msra.mxu0 %v256
    %1977 = vmatprep.subr.mxu0 0.0
    %1978 = vmatpush1.msra.mxu0 %v255
    %1979 = vmatprep.subr.mxu0 0.0
    %1980 = vmatpush1.msra.mxu0 %v254
    %1981 = vmatprep.subr.mxu0 0.0
    %1982 = vmatpush1.msra.mxu0 %v253
    %1983 = vmatprep.subr.mxu0 0.0
    %1984 = vmatpush1.msra.mxu0 %v252
    %1985 = vmatprep.subr.mxu0 0.0
    %1986 = vmatpush1.msra.mxu0 %v251
    %1987 = vmatprep.subr.mxu0 0.0
    %1988 = vmatpush1.msra.mxu0 %v250
    %1989 = vmatprep.subr.mxu0 0.0
    %1990 = vmatpush2.msra.mxu0 0.0
    %1991 = vmatprep.subr.mxu0 0.0
    %1992 = vmatpush2.msra.mxu0 0.0
    %1993 = vmatprep.subr.mxu0 0.0
    %1994 = vmatpush2.msra.mxu0 0.0
    %1995 = vmatprep.subr.mxu0 0.0
    %1996 = vmatpush2.msra.mxu0 0.0
    %1997 = vmatprep.subr.mxu0 0.0
    %1998 = vmatpush2.msra.mxu0 0.0
    %1999 = vmatprep.subr.mxu0 0.0
    %2000 = vmatpush2.msra.mxu0 0.0
    %2001 = vmatprep.subr.mxu0 0.0
    %2002 = vmatpush2.msra.mxu0 0.0
    %2003 = vmatprep.subr.mxu0 0.0
    %2004 = vmatpush2.msra.mxu0 0.0
    %2005 = vmatprep.subr.mxu0 0.0
    %2006 = vmatpush2.msra.mxu0 0.0
    %2007 = vmatprep.subr.mxu0 0.0
    %2008 = vmatpush2.msra.mxu0 0.0
    %2009 = vmatprep.subr.mxu0 0.0
    %2010 = vmatpush2.msra.mxu0 0.0
    %2011 = vmatprep.subr.mxu0 0.0
    %2012 = vmatpush2.msra.mxu0 0.0
    %2013 = vmatprep.subr.mxu0 0.0
    %2014 = vmatpush2.msra.mxu0 0.0
    %2015 = vmatprep.subr.mxu0 0.0
    %2016 = vmatpush2.msra.mxu0 0.0
    %2017 = vmatprep.subr.mxu0 0.0
    %2018 = vmatpush2.msra.mxu0 0.0
    %2019 = vmatprep.subr.mxu0 0.0
    %2020 = vmatpush2.msra.mxu0 0.0
    %2021 = vmatprep.mubr.f32.mxu0 0.0
    %2022 = vmatmul.mubr.f32.gmra.mxu0 %v1796
    %v2023 = vpop.f32.mrf.mxu0
    %v2024 = vadd.f32 0.0, %v2023
    %v2025 = vpop.f32.mrf.mxu0
    %2026 = vdwg.mxu0
    %v2027 = vadd.f32 %v1954, %v2024
    %v2028 = vmul.f32 %v2027, 0.5
    %v2029 = vtanh.pop %v2028
    %v2030 = vadd.f32 %v2029, 1.0
    %v2031 = vmul.f32 %v2030, 0.5
    %2032 = vrot.lane.b32.xlu0 %v2031, 64
    %v2033 = vpop.permute.xlu0 %2032
    %v2034 = vadd.f32 %v2024, %v278
    %v2035 = vmul.f32 %v2033, %v2034
    %v2036 = vadd.f32 %v1954, %v2035
    %v2037 = vtanh.pop %v2036
    %2038 = vrot.lane.b32.xlu0 %v2037, 64
    %v2039 = vpop.permute.xlu0 %2038
    %2040 = vrot.lane.b32.xlu0 %v2031, 96
    %v2041 = vpop.permute.xlu0 %2040
    %v2042 = vsub.f32 %v1796, %v2039
    %v2043 = vmul.f32 %v2041, %v2042
    %v2044 = vadd.f32 %v2039, %v2043
    %v2045 = vsel %vm89, %v2044, 0.0
    %v2046 = vld [vmem:[#allocation2 + $0x38] sm:$0xff]
    %2047 = vmatprep.subr.mxu0 0.0
    %2048 = vmatpush1.msra.mxu0 %v249
    %2049 = vmatprep.subr.mxu0 0.0
    %2050 = vmatpush1.msra.mxu0 %v248
    %2051 = vmatprep.subr.mxu0 0.0
    %2052 = vmatpush1.msra.mxu0 %v247
    %2053 = vmatprep.subr.mxu0 0.0
    %2054 = vmatpush1.msra.mxu0 %v246
    %2055 = vmatprep.subr.mxu0 0.0
    %2056 = vmatpush1.msra.mxu0 %v245
    %2057 = vmatprep.subr.mxu0 0.0
    %2058 = vmatpush1.msra.mxu0 %v244
    %2059 = vmatprep.subr.mxu0 0.0
    %2060 = vmatpush1.msra.mxu0 %v243
    %2061 = vmatprep.subr.mxu0 0.0
    %2062 = vmatpush1.msra.mxu0 %v242
    %2063 = vmatprep.subr.mxu0 0.0
    %2064 = vmatpush1.msra.mxu0 %v241
    %2065 = vmatprep.subr.mxu0 0.0
    %2066 = vmatpush1.msra.mxu0 %v240
    %2067 = vmatprep.subr.mxu0 0.0
    %2068 = vmatpush1.msra.mxu0 %v239
    %2069 = vmatprep.subr.mxu0 0.0
    %2070 = vmatpush1.msra.mxu0 %v238
    %2071 = vmatprep.subr.mxu0 0.0
    %2072 = vmatpush1.msra.mxu0 %v237
    %2073 = vmatprep.subr.mxu0 0.0
    %2074 = vmatpush1.msra.mxu0 %v236
    %2075 = vmatprep.subr.mxu0 0.0
    %2076 = vmatpush1.msra.mxu0 %v235
    %2077 = vmatprep.subr.mxu0 0.0
    %2078 = vmatpush1.msra.mxu0 %v234
    %2079 = vmatprep.subr.mxu0 0.0
    %2080 = vmatpush2.msra.mxu0 0.0
    %2081 = vmatprep.subr.mxu0 0.0
    %2082 = vmatpush2.msra.mxu0 0.0
    %2083 = vmatprep.subr.mxu0 0.0
    %2084 = vmatpush2.msra.mxu0 0.0
    %2085 = vmatprep.subr.mxu0 0.0
    %2086 = vmatpush2.msra.mxu0 0.0
    %2087 = vmatprep.subr.mxu0 0.0
    %2088 = vmatpush2.msra.mxu0 0.0
    %2089 = vmatprep.subr.mxu0 0.0
    %2090 = vmatpush2.msra.mxu0 0.0
    %2091 = vmatprep.subr.mxu0 0.0
    %2092 = vmatpush2.msra.mxu0 0.0
    %2093 = vmatprep.subr.mxu0 0.0
    %2094 = vmatpush2.msra.mxu0 0.0
    %2095 = vmatprep.subr.mxu0 0.0
    %2096 = vmatpush2.msra.mxu0 0.0
    %2097 = vmatprep.subr.mxu0 0.0
    %2098 = vmatpush2.msra.mxu0 0.0
    %2099 = vmatprep.subr.mxu0 0.0
    %2100 = vmatpush2.msra.mxu0 0.0
    %2101 = vmatprep.subr.mxu0 0.0
    %2102 = vmatpush2.msra.mxu0 0.0
    %2103 = vmatprep.subr.mxu0 0.0
    %2104 = vmatpush2.msra.mxu0 0.0
    %2105 = vmatprep.subr.mxu0 0.0
    %2106 = vmatpush2.msra.mxu0 0.0
    %2107 = vmatprep.subr.mxu0 0.0
    %2108 = vmatpush2.msra.mxu0 0.0
    %2109 = vmatprep.subr.mxu0 0.0
    %2110 = vmatpush2.msra.mxu0 0.0
    %2111 = vmatprep.mubr.f32.mxu0 0.0
    %2112 = vmatmul.mubr.f32.gmra.mxu0 %v1886
    %v2113 = vpop.f32.mrf.mxu0
    %v2114 = vadd.f32 0.0, %v2113
    %v2115 = vpop.f32.mrf.mxu0
    %2116 = vdwg.mxu0
    %v2117 = vadd.f32 %v2046, %v2114
    %v2118 = vmul.f32 %v2117, 0.5
    %v2119 = vtanh.pop %v2118
    %v2120 = vadd.f32 %v2119, 1.0
    %v2121 = vmul.f32 %v2120, 0.5
    %2122 = vrot.lane.b32.xlu0 %v2121, 64
    %v2123 = vpop.permute.xlu0 %2122
    %v2124 = vadd.f32 %v2114, %v271
    %v2125 = vmul.f32 %v2123, %v2124
    %v2126 = vadd.f32 %v2046, %v2125
    %v2127 = vtanh.pop %v2126
    %2128 = vrot.lane.b32.xlu0 %v2127, 64
    %v2129 = vpop.permute.xlu0 %2128
    %2130 = vrot.lane.b32.xlu0 %v2121, 96
    %v2131 = vpop.permute.xlu0 %2130
    %v2132 = vsub.f32 %v1886, %v2129
    %v2133 = vmul.f32 %v2131, %v2132
    %v2134 = vadd.f32 %v2129, %v2133
    %v2135 = vsel %vm89, %v2134, 0.0
    %2136 = vmatprep.subr.mxu0 0.0
    %2137 = vmatpush1.msra.mxu0 %v392
    %2138 = vmatprep.subr.mxu0 0.0
    %2139 = vmatpush1.msra.mxu0 %v391
    %2140 = vmatprep.subr.mxu0 0.0
    %2141 = vmatpush1.msra.mxu0 %v390
    %2142 = vmatprep.subr.mxu0 0.0
    %2143 = vmatpush1.msra.mxu0 %v389
    %2144 = vmatprep.subr.mxu0 0.0
    %2145 = vmatpush1.msra.mxu0 %v388
    %2146 = vmatprep.subr.mxu0 0.0
    %2147 = vmatpush1.msra.mxu0 %v387
    %2148 = vmatprep.subr.mxu0 0.0
    %2149 = vmatpush1.msra.mxu0 %v386
    %2150 = vmatprep.subr.mxu0 0.0
    %2151 = vmatpush1.msra.mxu0 %v385
    %2152 = vmatprep.subr.mxu0 0.0
    %2153 = vmatpush1.msra.mxu0 %v384
    %2154 = vmatprep.subr.mxu0 0.0
    %2155 = vmatpush1.msra.mxu0 %v383
    %2156 = vmatprep.subr.mxu0 0.0
    %2157 = vmatpush1.msra.mxu0 %v382
    %2158 = vmatprep.subr.mxu0 0.0
    %2159 = vmatpush1.msra.mxu0 %v381
    %2160 = vmatprep.subr.mxu0 0.0
    %2161 = vmatpush1.msra.mxu0 %v380
    %2162 = vmatprep.subr.mxu0 0.0
    %2163 = vmatpush1.msra.mxu0 %v379
    %2164 = vmatprep.subr.mxu0 0.0
    %2165 = vmatpush1.msra.mxu0 %v378
    %2166 = vmatprep.subr.mxu0 0.0
    %2167 = vmatpush1.msra.mxu0 %v377
    %2168 = vmatprep.subr.mxu0 0.0
    %2169 = vmatpush2.msra.mxu0 0.0
    %2170 = vmatprep.subr.mxu0 0.0
    %2171 = vmatpush2.msra.mxu0 0.0
    %2172 = vmatprep.subr.mxu0 0.0
    %2173 = vmatpush2.msra.mxu0 0.0
    %2174 = vmatprep.subr.mxu0 0.0
    %2175 = vmatpush2.msra.mxu0 0.0
    %2176 = vmatprep.subr.mxu0 0.0
    %2177 = vmatpush2.msra.mxu0 0.0
    %2178 = vmatprep.subr.mxu0 0.0
    %2179 = vmatpush2.msra.mxu0 0.0
    %2180 = vmatprep.subr.mxu0 0.0
    %2181 = vmatpush2.msra.mxu0 0.0
    %2182 = vmatprep.subr.mxu0 0.0
    %2183 = vmatpush2.msra.mxu0 0.0
    %2184 = vmatprep.subr.mxu0 0.0
    %2185 = vmatpush2.msra.mxu0 0.0
    %2186 = vmatprep.subr.mxu0 0.0
    %2187 = vmatpush2.msra.mxu0 0.0
    %2188 = vmatprep.subr.mxu0 0.0
    %2189 = vmatpush2.msra.mxu0 0.0
    %2190 = vmatprep.subr.mxu0 0.0
    %2191 = vmatpush2.msra.mxu0 0.0
    %2192 = vmatprep.subr.mxu0 0.0
    %2193 = vmatpush2.msra.mxu0 0.0
    %2194 = vmatprep.subr.mxu0 0.0
    %2195 = vmatpush2.msra.mxu0 0.0
    %2196 = vmatprep.subr.mxu0 0.0
    %2197 = vmatpush2.msra.mxu0 0.0
    %2198 = vmatprep.subr.mxu0 0.0
    %2199 = vmatpush2.msra.mxu0 0.0
    %2200 = vmatprep.mubr.f32.mxu0 0.0
    %2201 = vmatmul.mubr.f32.gmra.mxu0 %v2135
    %v2202 = vpop.f32.mrf.mxu0
    %v2203 = vadd.f32 %v285, %v2202
    %v2204 = vpop.f32.mrf.mxu0
    %2205 = vdwg.mxu0
    %2206 = vmatprep.subr.mxu0 0.0
    %2207 = vmatpush1.msra.mxu0 %v265
    %2208 = vmatprep.subr.mxu0 0.0
    %2209 = vmatpush1.msra.mxu0 %v264
    %2210 = vmatprep.subr.mxu0 0.0
    %2211 = vmatpush1.msra.mxu0 %v263
    %2212 = vmatprep.subr.mxu0 0.0
    %2213 = vmatpush1.msra.mxu0 %v262
    %2214 = vmatprep.subr.mxu0 0.0
    %2215 = vmatpush1.msra.mxu0 %v261
    %2216 = vmatprep.subr.mxu0 0.0
    %2217 = vmatpush1.msra.mxu0 %v260
    %2218 = vmatprep.subr.mxu0 0.0
    %2219 = vmatpush1.msra.mxu0 %v259
    %2220 = vmatprep.subr.mxu0 0.0
    %2221 = vmatpush1.msra.mxu0 %v258
    %2222 = vmatprep.subr.mxu0 0.0
    %2223 = vmatpush1.msra.mxu0 %v257
    %2224 = vmatprep.subr.mxu0 0.0
    %2225 = vmatpush1.msra.mxu0 %v256
    %2226 = vmatprep.subr.mxu0 0.0
    %2227 = vmatpush1.msra.mxu0 %v255
    %2228 = vmatprep.subr.mxu0 0.0
    %2229 = vmatpush1.msra.mxu0 %v254
    %2230 = vmatprep.subr.mxu0 0.0
    %2231 = vmatpush1.msra.mxu0 %v253
    %2232 = vmatprep.subr.mxu0 0.0
    %2233 = vmatpush1.msra.mxu0 %v252
    %2234 = vmatprep.subr.mxu0 0.0
    %2235 = vmatpush1.msra.mxu0 %v251
    %2236 = vmatprep.subr.mxu0 0.0
    %2237 = vmatpush1.msra.mxu0 %v250
    %2238 = vmatprep.subr.mxu0 0.0
    %2239 = vmatpush2.msra.mxu0 0.0
    %2240 = vmatprep.subr.mxu0 0.0
    %2241 = vmatpush2.msra.mxu0 0.0
    %2242 = vmatprep.subr.mxu0 0.0
    %2243 = vmatpush2.msra.mxu0 0.0
    %2244 = vmatprep.subr.mxu0 0.0
    %2245 = vmatpush2.msra.mxu0 0.0
    %2246 = vmatprep.subr.mxu0 0.0
    %2247 = vmatpush2.msra.mxu0 0.0
    %2248 = vmatprep.subr.mxu0 0.0
    %2249 = vmatpush2.msra.mxu0 0.0
    %2250 = vmatprep.subr.mxu0 0.0
    %2251 = vmatpush2.msra.mxu0 0.0
    %2252 = vmatprep.subr.mxu0 0.0
    %2253 = vmatpush2.msra.mxu0 0.0
    %2254 = vmatprep.subr.mxu0 0.0
    %2255 = vmatpush2.msra.mxu0 0.0
    %2256 = vmatprep.subr.mxu0 0.0
    %2257 = vmatpush2.msra.mxu0 0.0
    %2258 = vmatprep.subr.mxu0 0.0
    %2259 = vmatpush2.msra.mxu0 0.0
    %2260 = vmatprep.subr.mxu0 0.0
    %2261 = vmatpush2.msra.mxu0 0.0
    %2262 = vmatprep.subr.mxu0 0.0
    %2263 = vmatpush2.msra.mxu0 0.0
    %2264 = vmatprep.subr.mxu0 0.0
    %2265 = vmatpush2.msra.mxu0 0.0
    %2266 = vmatprep.subr.mxu0 0.0
    %2267 = vmatpush2.msra.mxu0 0.0
    %2268 = vmatprep.subr.mxu0 0.0
    %2269 = vmatpush2.msra.mxu0 0.0
    %2270 = vmatprep.mubr.f32.mxu0 0.0
    %2271 = vmatmul.mubr.f32.gmra.mxu0 %v2045
    %v2272 = vpop.f32.mrf.mxu0
    %v2273 = vadd.f32 0.0, %v2272
    %v2274 = vpop.f32.mrf.mxu0
    %2275 = vdwg.mxu0
    %v2276 = vadd.f32 %v2203, %v2273
    %v2277 = vmul.f32 %v2276, 0.5
    %v2278 = vtanh.pop %v2277
    %v2279 = vadd.f32 %v2278, 1.0
    %v2280 = vmul.f32 %v2279, 0.5
    %2281 = vrot.lane.b32.xlu0 %v2280, 64
    %v2282 = vpop.permute.xlu0 %2281
    %v2283 = vadd.f32 %v2273, %v278
    %v2284 = vmul.f32 %v2282, %v2283
    %v2285 = vadd.f32 %v2203, %v2284
    %v2286 = vtanh.pop %v2285
    %2287 = vrot.lane.b32.xlu0 %v2286, 64
    %v2288 = vpop.permute.xlu0 %2287
    %2289 = vrot.lane.b32.xlu0 %v2280, 96
    %v2290 = vpop.permute.xlu0 %2289
    %v2291 = vsub.f32 %v2045, %v2288
    %v2292 = vmul.f32 %v2290, %v2291
    %v2293 = vadd.f32 %v2288, %v2292
    %v2294 = vsel %vm89, %v2293, 0.0
    %2295 = vst [vmem:[%s9] sm:$0xff] %v2135
    %s2296 = scalar_lea.vmem %s9, 8
    %2297 = vst [vmem:[%s2296] sm:$0xff] %v2294
    // Predicated region
    $region54: #{_gru_forward.1} parent=1 // pred_check
      _
    $region55: #{_gru_forward.1} parent=1 // pred_check_branch
      %2299 = sbr.rel (0) target = $region57
    $region56: #{_gru_forward.1} parent=1 // pred_region
      _
    $region57: #{_gru_forward.1} parent=1 // pred_fallthru
      _
    // Predicated region
    $region58: #{_gru_forward.1} parent=1 // pred_check
      _
    $region59: #{_gru_forward.1} parent=1 // pred_check_branch
      %2301 = sbr.rel (0) target = $region61
    $region60: #{_gru_forward.1} parent=1 // pred_region
      _
    $region61: #{_gru_forward.1} parent=1 // pred_fallthru
      _
    %2302 = vsyncpa [#allocation4], 1
    %2303 = vsyncpa [#allocation6], 1
    %2304 = vsyncpa [#allocation9], 1

</llo_original>
